<compile_context>
chip_gen: v7x
topology: tpu7x:2x2x1
jax: 0.10.0
libtpu: 0.0.40
codegen_flags: <defaults>
</compile_context>

<pallas_src>
import functools

import jax
import jax.numpy as jnp
from jax.experimental import pallas as pl
from jax.experimental.pallas import tpu as pltpu

N_RES_BLOCKS = 8           # number of "relu(fc2(x)) + x" residual applications
_MASK_VALUE = -1e30        # fill for padded class lanes before log_softmax


def _round_up(a, m):
    return (a + m - 1) // m * m


# --------------------------------------------------------------------------
# Kernel
# --------------------------------------------------------------------------
def _resmlp_kernel(x_ref, w1_ref, b1_ref, w2_ref, b2_ref, w10_ref, b10_ref,
                   out_ref, *, nclass):
    """One batch tile; all (padded, bf16) weights resident in VMEM."""
    tb = x_ref.shape[0]
    nclass_p = w10_ref.shape[1]

    x = x_ref[...]                       # bf16 [tb, nfeat_p]
    w1 = w1_ref[...]                     # bf16 [nfeat_p, nhid_p]
    w2 = w2_ref[...]                     # bf16 [nhid_p, nhid_p]
    w10 = w10_ref[...]                   # bf16 [nhid_p, nclass_p]

    # Biases stay as [1, N] rows: the adds below broadcast along sublanes on
    # the VPU instead of keeping [tb, N] f32 buffers live across the whole
    # unrolled residual chain (VMEM / live-range pressure at large tb*nhid).
    b1 = b1_ref[...]                     # f32 [1, nhid_p]
    b2 = b2_ref[...]                     # f32 [1, nhid_p]
    b10 = b10_ref[...]                   # f32 [1, nclass_p]

    # fc1 + relu: bf16 MXU operands, f32 accumulate; h kept in f32.
    h = jnp.dot(x, w1, preferred_element_type=jnp.float32) + b1
    h = jnp.maximum(h, 0.0)

    # 8 residual blocks, all sharing fc2's weights (as in the PyTorch forward).
    # The chain is strictly sequential; unrolling only buys scheduler visibility.
    for _ in range(N_RES_BLOCKS):
        z = jnp.dot(h.astype(jnp.bfloat16), w2,
                    preferred_element_type=jnp.float32) + b2
        h = jnp.maximum(z, 0.0) + h

    # fc10 (no activation)
    logits = jnp.dot(h.astype(jnp.bfloat16), w10,
                     preferred_element_type=jnp.float32) + b10

    # Padded class lanes (zero weights/bias) must not contribute to the lse.
    lane = jax.lax.broadcasted_iota(jnp.int32, (tb, nclass_p), 1)
    logits = jnp.where(lane < nclass, logits, _MASK_VALUE)

    # log_softmax over the class axis (dim=1), f32 throughout.
    m = jnp.max(logits, axis=1, keepdims=True)
    shifted = logits - m
    lse = jnp.log(jnp.sum(jnp.exp(shifted), axis=1, keepdims=True))
    out_ref[...] = (shifted - lse).astype(out_ref.dtype)


# --------------------------------------------------------------------------
# Hardware introspection & tiling heuristics
# --------------------------------------------------------------------------
def _tpu_generation():
    """Best-effort (generation, vmem_bytes, mxu_rows, num_tensorcores)."""
    vmem_phys = None
    try:
        v = int(pltpu.get_tpu_info().vmem_capacity_bytes)
        if v > 0:
            vmem_phys = v
    except Exception:
        pass

    kind = ""
    try:
        kind = jax.devices()[0].device_kind.lower()
    except Exception:
        pass

    if "7" in kind:
        gen = 7
    elif "v6" in kind:
        gen = 6
    elif "v5" in kind:
        gen = 5
    else:
        gen = 0  # unknown / older: conservative defaults

    if vmem_phys is None:
        vmem_phys = (64 << 20) if gen >= 7 else \
                    (128 << 20) if gen in (5, 6) else (64 << 20)

    mxu_rows = 256 if gen >= 6 else 128      # full-occupancy M tile
    num_tc = 2 if gen >= 7 else 1            # explicit dual-TC sharding on v7x
    return gen, vmem_phys, mxu_rows, num_tc


def _pick_tile(n, nfeat_p, nhid_p, nclass_p, resident_bytes,
               mxu_rows, num_tc, vmem_phys):
    """Pick (tb, n_pad, grid): MXU-aligned M tiles sized to the VMEM budget."""
    # Per-row VMEM cost of the pipelined / live buffers inside the kernel.
    per_row = (2 * nfeat_p * 2        # x tile, double-buffered, bf16
               + 2 * nclass_p * 4     # out tile, double-buffered, f32
               + 6 * nhid_p * 4)      # live f32 h / z + bf16 cast temps headroom
    budget = int(0.75 * vmem_phys) - resident_bytes
    rows_fit = max(budget, per_row * mxu_rows) // per_row
    tb_cap = max(mxu_rows, (rows_fit // mxu_rows) * mxu_rows)

    tb = min(1024, tb_cap, _round_up(n, mxu_rows))
    n_pad = _round_up(max(n, tb), tb)
    grid = n_pad // tb

    if num_tc >= 2:
        if grid == 1 and n > mxu_rows and tb >= 2 * mxu_rows:
            # Split a single big tile so both TensorCores get >= mxu_rows rows.
            tb = _round_up(pl.cdiv(n, 2), mxu_rows)
            n_pad = 2 * tb
            grid = 2
        elif grid > 1 and grid % 2 == 1:
            # Even grid → balanced dual-TC sharding (same critical path).
            grid += 1
            n_pad = grid * tb
    return tb, n_pad, grid


# --------------------------------------------------------------------------
# Wrapper
# --------------------------------------------------------------------------
def resmlp_forward(x, params, *, batch_tile=None):
    """x: [N, nfeat] float32. params: dict of logical (w1,b1,w2,b2,w10,b10)."""
    n, nfeat = x.shape
    nhid = params["w1"].shape[1]
    nclass = params["w10"].shape[1]

    gen, vmem_phys, mxu_rows, num_tc = _tpu_generation()

    # ---- pad feature / hidden / class dims to lane multiples of 128 ----
    nfeat_p = _round_up(nfeat, 128)
    nhid_p = _round_up(nhid, 128)
    nclass_p = _round_up(nclass, 128)

    # ---- pad + cast params. MXU operands (x, w*) go to bf16; biases stay f32
    # since they are added to the f32 accumulations. ----
    def pad2(a, r, c, dtype):
        if a.shape == (r, c):
            return a.astype(dtype)
        return jnp.zeros((r, c), dtype).at[:a.shape[0], :a.shape[1]].set(
            a.astype(dtype))

    w1 = pad2(params["w1"], nfeat_p, nhid_p, jnp.bfloat16)
    b1 = pad2(params["b1"], 1, nhid_p, jnp.float32)
    w2 = pad2(params["w2"], nhid_p, nhid_p, jnp.bfloat16)
    b2 = pad2(params["b2"], 1, nhid_p, jnp.float32)
    w10 = pad2(params["w10"], nhid_p, nclass_p, jnp.bfloat16)
    b10 = pad2(params["b10"], 1, nclass_p, jnp.float32)

    weight_bytes = (w1.size + w2.size + w10.size) * 2    # bf16
    bias_bytes = (b1.size + b2.size + b10.size) * 4      # f32
    resident_bytes = weight_bytes + bias_bytes            # single-buffered

    # ---- batch tile: MXU-aligned (256 on v6e/v7x, 128 on v5e) ----
    if batch_tile is None:
        tb, n_pad, grid_n = _pick_tile(n, nfeat_p, nhid_p, nclass_p,
                                       resident_bytes, mxu_rows, num_tc,
                                       vmem_phys)
    else:
        tb = _round_up(batch_tile, mxu_rows)
        n_pad = _round_up(max(n, tb), tb)
        grid_n = n_pad // tb
    grid = (grid_n,)

    # ---- input: skip the pad round-trip when nothing needs padding ----
    if nfeat_p == nfeat and n_pad == n:
        x_p = x.astype(jnp.bfloat16)
    else:
        x_p = jnp.zeros((n_pad, nfeat_p), jnp.bfloat16).at[:n, :nfeat].set(
            x.astype(jnp.bfloat16))

    # ---- per-generation VMEM cap ----
    vmem_cap = min(int(0.8 * vmem_phys), 100 << 20)

    flops = 2 * n_pad * (nfeat_p * nhid_p
                         + N_RES_BLOCKS * nhid_p * nhid_p
                         + nhid_p * nclass_p)
    cost = pl.CostEstimate(
        flops=flops,
        transcendentals=n_pad * nclass_p,      # exp in log_softmax
        bytes_accessed=(x_p.size * 2 + n_pad * nclass_p * 4
                        + weight_bytes + bias_bytes))

    def build(single_buffer_weights):
        wkw = {"pipeline_mode": pl.Buffered(1)} if single_buffer_weights else {}
        in_specs = [
            pl.BlockSpec((tb, nfeat_p), lambda i: (i, 0)),              # x tile
            pl.BlockSpec((nfeat_p, nhid_p), lambda i: (0, 0), **wkw),   # w1
            pl.BlockSpec((1, nhid_p), lambda i: (0, 0), **wkw),         # b1
            pl.BlockSpec((nhid_p, nhid_p), lambda i: (0, 0), **wkw),    # w2
            pl.BlockSpec((1, nhid_p), lambda i: (0, 0), **wkw),         # b2
            pl.BlockSpec((nhid_p, nclass_p), lambda i: (0, 0), **wkw),  # w10
            pl.BlockSpec((1, nclass_p), lambda i: (0, 0), **wkw),       # b10
        ]
        bufs = 1 if single_buffer_weights else 2
        need = (bufs * resident_bytes             # grid-invariant weights/biases
                + 2 * tb * nfeat_p * 2            # x double-buffer (bf16)
                + 2 * tb * nclass_p * 4           # out double-buffer (f32)
                + 6 * tb * nhid_p * 4)            # live h / z / bf16 temps
        vmem_limit = int(min(max(int(1.25 * need), 32 << 20), vmem_cap))

        return pl.pallas_call(
            functools.partial(_resmlp_kernel, nclass=nclass),
            out_shape=jax.ShapeDtypeStruct((n_pad, nclass_p), jnp.float32),
            grid_spec=pltpu.PrefetchScalarGridSpec(
                num_scalar_prefetch=0,
                grid=grid,
                in_specs=in_specs,
                out_specs=pl.BlockSpec((tb, nclass_p), lambda i: (i, 0)),
            ),
            compiler_params=pltpu.CompilerParams(
                dimension_semantics=("parallel",),
                vmem_limit_bytes=vmem_limit),
            cost_estimate=cost,
        )

    try:
        # Preferred: grid-invariant weights single-buffered (pl.Buffered(1)).
        out_p = build(True)(x_p, w1, b1, w2, b2, w10, b10)
    except Exception:
        # Capability fallback: this jax/libtpu rejects buffer_count=1 for the
        # main grid pipeline — re-issue with default (double) buffering.
        out_p = build(False)(x_p, w1, b1, w2, b2, w10, b10)

    return out_p[:n, :nclass]


# --------------------------------------------------------------------------
# Params + references
# --------------------------------------------------------------------------
def init_params(key, nfeat, nhid, nclass):
    """Deterministic synthetic weights (PyTorch-Linear-like scale), logical shapes."""
    ks = jax.random.split(key, 6)

    def lin(kw, kb, fan_in, fan_out):
        bound = 1.0 / jnp.sqrt(fan_in)
        w = jax.random.uniform(kw, (fan_in, fan_out), jnp.float32, -bound, bound)
        b = jax.random.uniform(kb, (1, fan_out), jnp.float32, -bound, bound)
        return w, b

    w1, b1 = lin(ks[0], ks[1], nfeat, nhid)
    w2, b2 = lin(ks[2], ks[3], nhid, nhid)
    w10, b10 = lin(ks[4], ks[5], nhid, nclass)
    return dict(w1=w1, b1=b1, w2=w2, b2=b2, w10=w10, b10=b10)


def resmlp_reference_f32(x, p):
    """Pure-JAX f32 reference mirroring the PyTorch forward (eval mode)."""
    h = jax.nn.relu(x @ p["w1"] + p["b1"])
    for _ in range(N_RES_BLOCKS):
        h = jax.nn.relu(h @ p["w2"] + p["b2"]) + h
    logits = h @ p["w10"] + p["b10"]
    return jax.nn.log_softmax(logits, axis=1)


def resmlp_reference_bf16(x, p):
    """Pure-JAX reference with the same bf16-operand / f32-accumulate matmuls."""
    def mm(a, w):
        return jnp.dot(a.astype(jnp.bfloat16), w.astype(jnp.bfloat16),
                       preferred_element_type=jnp.float32)
    h = jax.nn.relu(mm(x, p["w1"]) + p["b1"])
    for _ in range(N_RES_BLOCKS):
        h = jax.nn.relu(mm(h, p["w2"]) + p["b2"]) + h
    logits = mm(h, p["w10"]) + p["b10"]
    return jax.nn.log_softmax(logits, axis=1)


if __name__ == "__main__":
    # Small shapes consistent with the module: batch=64, nfeat=32, nhid=32, nclass=8
    N, NFEAT, NHID, NCLASS = 64, 32, 32, 8

    key = jax.random.PRNGKey(0)
    kx, kp = jax.random.split(key)
    x = jax.random.normal(kx, (N, NFEAT), dtype=jnp.float32)
    params = init_params(kp, NFEAT, NHID, NCLASS)

    out = resmlp_forward(x, params)
    out = jax.block_until_ready(out)
    assert out.shape == (N, NCLASS)

    # Exact-semantics check vs. a reference using the same bf16-MXU precision.
    ref_bf16 = resmlp_reference_bf16(x, params)
    err_bf16 = float(jnp.max(jnp.abs(out - ref_bf16)))
    assert jnp.allclose(out, ref_bf16, atol=2e-3, rtol=2e-3), (
        f"max abs err vs bf16-matmul reference: {err_bf16}")

    # Informational: distance to the full-f32 PyTorch-semantics reference.
    # (Deliberate precision deviation: bf16 MXU operands, f32 accumulation.)
    ref_f32 = resmlp_reference_f32(x, params)
    err_f32 = float(jnp.max(jnp.abs(out - ref_f32)))
    print(f"max abs err vs bf16 ref: {err_bf16:.3e}; vs f32 ref: {err_f32:.3e}")

    print("KERNEL_OK")
</pallas_src>

<mosaic_0001>
module attributes {stable_mosaic.version = 11 : i64} {
  func.func @_resmlp_kernel(%arg0: i32, %arg1: memref<128x128xbf16, #tpu.memory_space<vmem>>, %arg2: memref<128x128xbf16, #tpu.memory_space<vmem>>, %arg3: memref<1x128xf32, #tpu.memory_space<vmem>>, %arg4: memref<128x128xbf16, #tpu.memory_space<vmem>>, %arg5: memref<1x128xf32, #tpu.memory_space<vmem>>, %arg6: memref<128x128xbf16, #tpu.memory_space<vmem>>, %arg7: memref<1x128xf32, #tpu.memory_space<vmem>>, %arg8: memref<128x128xf32, #tpu.memory_space<vmem>>) attributes {dimension_semantics = [#tpu.dimension_semantics<parallel>], iteration_bounds = array<i64: 1>, scalar_prefetch = 0 : i64, scratch_operands = 0 : i64, tpu.core_type = #tpu.core_type<tc>, window_params = [{transform_indices = @transform_0, window_bounds = array<i64: 128, 128>}, {pipeline_mode = #tpu.pipeline_mode<synchronous>, transform_indices = @transform_1, window_bounds = array<i64: 128, 128>}, {pipeline_mode = #tpu.pipeline_mode<synchronous>, transform_indices = @transform_2, window_bounds = array<i64: 1, 128>}, {pipeline_mode = #tpu.pipeline_mode<synchronous>, transform_indices = @transform_3, window_bounds = array<i64: 128, 128>}, {pipeline_mode = #tpu.pipeline_mode<synchronous>, transform_indices = @transform_4, window_bounds = array<i64: 1, 128>}, {pipeline_mode = #tpu.pipeline_mode<synchronous>, transform_indices = @transform_5, window_bounds = array<i64: 128, 128>}, {pipeline_mode = #tpu.pipeline_mode<synchronous>, transform_indices = @transform_6, window_bounds = array<i64: 1, 128>}, {transform_indices = @transform_7, window_bounds = array<i64: 128, 128>}]} {
    %c0 = arith.constant 0 : index
    %c0_0 = arith.constant 0 : index
    %0 = vector.load %arg1[%c0, %c0_0] : memref<128x128xbf16, #tpu.memory_space<vmem>>, vector<128x128xbf16>
    %c0_1 = arith.constant 0 : index
    %c0_2 = arith.constant 0 : index
    %1 = vector.load %arg2[%c0_1, %c0_2] : memref<128x128xbf16, #tpu.memory_space<vmem>>, vector<128x128xbf16>
    %c0_3 = arith.constant 0 : index
    %c0_4 = arith.constant 0 : index
    %2 = vector.load %arg4[%c0_3, %c0_4] : memref<128x128xbf16, #tpu.memory_space<vmem>>, vector<128x128xbf16>
    %c0_5 = arith.constant 0 : index
    %c0_6 = arith.constant 0 : index
    %3 = vector.load %arg6[%c0_5, %c0_6] : memref<128x128xbf16, #tpu.memory_space<vmem>>, vector<128x128xbf16>
    %c0_7 = arith.constant 0 : index
    %c0_8 = arith.constant 0 : index
    %4 = vector.load %arg3[%c0_7, %c0_8] : memref<1x128xf32, #tpu.memory_space<vmem>>, vector<1x128xf32>
    %c0_9 = arith.constant 0 : index
    %c0_10 = arith.constant 0 : index
    %5 = vector.load %arg5[%c0_9, %c0_10] : memref<1x128xf32, #tpu.memory_space<vmem>>, vector<1x128xf32>
    %c0_11 = arith.constant 0 : index
    %c0_12 = arith.constant 0 : index
    %6 = vector.load %arg7[%c0_11, %c0_12] : memref<1x128xf32, #tpu.memory_space<vmem>>, vector<1x128xf32>
    %cst = arith.constant dense<0.000000e+00> : vector<128x128xf32>
    %7 = tpu.matmul %0, %1, %cst {dimension_numbers = #tpu.dot_dimension_numbers<[1], [0], [0], [1], [0, 0, 1, 1], [], []>} : vector<128x128xbf16>, vector<128x128xbf16>, vector<128x128xf32> -> vector<128x128xf32>
    %8 = vector.broadcast %4 : vector<1x128xf32> to vector<128x128xf32>
    %9 = arith.addf %7, %8 : vector<128x128xf32>
    %cst_13 = arith.constant 0.000000e+00 : f32
    %10 = vector.broadcast %cst_13 : f32 to vector<128x128xf32>
    %11 = arith.maximumf %9, %10 : vector<128x128xf32>
    %12 = arith.truncf %11 : vector<128x128xf32> to vector<128x128xbf16>
    %cst_14 = arith.constant dense<0.000000e+00> : vector<128x128xf32>
    %13 = tpu.matmul %12, %2, %cst_14 {dimension_numbers = #tpu.dot_dimension_numbers<[1], [0], [0], [1], [0, 0, 1, 1], [], []>} : vector<128x128xbf16>, vector<128x128xbf16>, vector<128x128xf32> -> vector<128x128xf32>
    %14 = vector.broadcast %5 : vector<1x128xf32> to vector<128x128xf32>
    %15 = arith.addf %13, %14 : vector<128x128xf32>
    %cst_15 = arith.constant 0.000000e+00 : f32
    %16 = vector.broadcast %cst_15 : f32 to vector<128x128xf32>
    %17 = arith.maximumf %15, %16 : vector<128x128xf32>
    %18 = arith.addf %17, %11 : vector<128x128xf32>
    %19 = arith.truncf %18 : vector<128x128xf32> to vector<128x128xbf16>
    %cst_16 = arith.constant dense<0.000000e+00> : vector<128x128xf32>
    %20 = tpu.matmul %19, %2, %cst_16 {dimension_numbers = #tpu.dot_dimension_numbers<[1], [0], [0], [1], [0, 0, 1, 1], [], []>} : vector<128x128xbf16>, vector<128x128xbf16>, vector<128x128xf32> -> vector<128x128xf32>
    %21 = vector.broadcast %5 : vector<1x128xf32> to vector<128x128xf32>
    %22 = arith.addf %20, %21 : vector<128x128xf32>
    %cst_17 = arith.constant 0.000000e+00 : f32
    %23 = vector.broadcast %cst_17 : f32 to vector<128x128xf32>
    %24 = arith.maximumf %22, %23 : vector<128x128xf32>
    %25 = arith.addf %24, %18 : vector<128x128xf32>
    %26 = arith.truncf %25 : vector<128x128xf32> to vector<128x128xbf16>
    %cst_18 = arith.constant dense<0.000000e+00> : vector<128x128xf32>
    %27 = tpu.matmul %26, %2, %cst_18 {dimension_numbers = #tpu.dot_dimension_numbers<[1], [0], [0], [1], [0, 0, 1, 1], [], []>} : vector<128x128xbf16>, vector<128x128xbf16>, vector<128x128xf32> -> vector<128x128xf32>
    %28 = vector.broadcast %5 : vector<1x128xf32> to vector<128x128xf32>
    %29 = arith.addf %27, %28 : vector<128x128xf32>
    %cst_19 = arith.constant 0.000000e+00 : f32
    %30 = vector.broadcast %cst_19 : f32 to vector<128x128xf32>
    %31 = arith.maximumf %29, %30 : vector<128x128xf32>
    %32 = arith.addf %31, %25 : vector<128x128xf32>
    %33 = arith.truncf %32 : vector<128x128xf32> to vector<128x128xbf16>
    %cst_20 = arith.constant dense<0.000000e+00> : vector<128x128xf32>
    %34 = tpu.matmul %33, %2, %cst_20 {dimension_numbers = #tpu.dot_dimension_numbers<[1], [0], [0], [1], [0, 0, 1, 1], [], []>} : vector<128x128xbf16>, vector<128x128xbf16>, vector<128x128xf32> -> vector<128x128xf32>
    %35 = vector.broadcast %5 : vector<1x128xf32> to vector<128x128xf32>
    %36 = arith.addf %34, %35 : vector<128x128xf32>
    %cst_21 = arith.constant 0.000000e+00 : f32
    %37 = vector.broadcast %cst_21 : f32 to vector<128x128xf32>
    %38 = arith.maximumf %36, %37 : vector<128x128xf32>
    %39 = arith.addf %38, %32 : vector<128x128xf32>
    %40 = arith.truncf %39 : vector<128x128xf32> to vector<128x128xbf16>
    %cst_22 = arith.constant dense<0.000000e+00> : vector<128x128xf32>
    %41 = tpu.matmul %40, %2, %cst_22 {dimension_numbers = #tpu.dot_dimension_numbers<[1], [0], [0], [1], [0, 0, 1, 1], [], []>} : vector<128x128xbf16>, vector<128x128xbf16>, vector<128x128xf32> -> vector<128x128xf32>
    %42 = vector.broadcast %5 : vector<1x128xf32> to vector<128x128xf32>
    %43 = arith.addf %41, %42 : vector<128x128xf32>
    %cst_23 = arith.constant 0.000000e+00 : f32
    %44 = vector.broadcast %cst_23 : f32 to vector<128x128xf32>
    %45 = arith.maximumf %43, %44 : vector<128x128xf32>
    %46 = arith.addf %45, %39 : vector<128x128xf32>
    %47 = arith.truncf %46 : vector<128x128xf32> to vector<128x128xbf16>
    %cst_24 = arith.constant dense<0.000000e+00> : vector<128x128xf32>
    %48 = tpu.matmul %47, %2, %cst_24 {dimension_numbers = #tpu.dot_dimension_numbers<[1], [0], [0], [1], [0, 0, 1, 1], [], []>} : vector<128x128xbf16>, vector<128x128xbf16>, vector<128x128xf32> -> vector<128x128xf32>
    %49 = vector.broadcast %5 : vector<1x128xf32> to vector<128x128xf32>
    %50 = arith.addf %48, %49 : vector<128x128xf32>
    %cst_25 = arith.constant 0.000000e+00 : f32
    %51 = vector.broadcast %cst_25 : f32 to vector<128x128xf32>
    %52 = arith.maximumf %50, %51 : vector<128x128xf32>
    %53 = arith.addf %52, %46 : vector<128x128xf32>
    %54 = arith.truncf %53 : vector<128x128xf32> to vector<128x128xbf16>
    %cst_26 = arith.constant dense<0.000000e+00> : vector<128x128xf32>
    %55 = tpu.matmul %54, %2, %cst_26 {dimension_numbers = #tpu.dot_dimension_numbers<[1], [0], [0], [1], [0, 0, 1, 1], [], []>} : vector<128x128xbf16>, vector<128x128xbf16>, vector<128x128xf32> -> vector<128x128xf32>
    %56 = vector.broadcast %5 : vector<1x128xf32> to vector<128x128xf32>
    %57 = arith.addf %55, %56 : vector<128x128xf32>
    %cst_27 = arith.constant 0.000000e+00 : f32
    %58 = vector.broadcast %cst_27 : f32 to vector<128x128xf32>
    %59 = arith.maximumf %57, %58 : vector<128x128xf32>
    %60 = arith.addf %59, %53 : vector<128x128xf32>
    %61 = arith.truncf %60 : vector<128x128xf32> to vector<128x128xbf16>
    %cst_28 = arith.constant dense<0.000000e+00> : vector<128x128xf32>
    %62 = tpu.matmul %61, %2, %cst_28 {dimension_numbers = #tpu.dot_dimension_numbers<[1], [0], [0], [1], [0, 0, 1, 1], [], []>} : vector<128x128xbf16>, vector<128x128xbf16>, vector<128x128xf32> -> vector<128x128xf32>
    %63 = vector.broadcast %5 : vector<1x128xf32> to vector<128x128xf32>
    %64 = arith.addf %62, %63 : vector<128x128xf32>
    %cst_29 = arith.constant 0.000000e+00 : f32
    %65 = vector.broadcast %cst_29 : f32 to vector<128x128xf32>
    %66 = arith.maximumf %64, %65 : vector<128x128xf32>
    %67 = arith.addf %66, %60 : vector<128x128xf32>
    %68 = arith.truncf %67 : vector<128x128xf32> to vector<128x128xbf16>
    %cst_30 = arith.constant dense<0.000000e+00> : vector<128x128xf32>
    %69 = tpu.matmul %68, %3, %cst_30 {dimension_numbers = #tpu.dot_dimension_numbers<[1], [0], [0], [1], [0, 0, 1, 1], [], []>} : vector<128x128xbf16>, vector<128x128xbf16>, vector<128x128xf32> -> vector<128x128xf32>
    %70 = vector.broadcast %6 : vector<1x128xf32> to vector<128x128xf32>
    %71 = arith.addf %69, %70 : vector<128x128xf32>
    %72 = tpu.iota {dimensions = array<i32: 1>} : vector<128x128xi32>
    %c8_i32 = arith.constant 8 : i32
    %73 = vector.broadcast %c8_i32 : i32 to vector<128x128xi32>
    %74 = arith.cmpi slt, %72, %73 : vector<128x128xi32>
    %cst_31 = arith.constant -1.000000e+30 : f32
    %75 = vector.broadcast %cst_31 : f32 to vector<128x128xf32>
    %76 = arith.select %74, %71, %75 : vector<128x128xi1>, vector<128x128xf32>
    %cst_32 = arith.constant dense<0xFF800000> : vector<128xf32>
    %77 = vector.multi_reduction <maximumf>, %76, %cst_32 [1] : vector<128x128xf32> to vector<128xf32>
    %78 = vector.shape_cast %77 : vector<128xf32> to vector<128x1xf32>
    %79 = vector.broadcast %78 : vector<128x1xf32> to vector<128x128xf32>
    %80 = arith.subf %76, %79 : vector<128x128xf32>
    %81 = math.exp %80 : vector<128x128xf32>
    %cst_33 = arith.constant dense<0.000000e+00> : vector<128xf32>
    %82 = vector.multi_reduction <add>, %81, %cst_33 [1] : vector<128x128xf32> to vector<128xf32>
    %83 = vector.shape_cast %82 : vector<128xf32> to vector<128x1xf32>
    %84 = math.log %83 : vector<128x1xf32>
    %85 = vector.broadcast %84 : vector<128x1xf32> to vector<128x128xf32>
    %86 = arith.subf %80, %85 : vector<128x128xf32>
    %c0_34 = arith.constant 0 : index
    %c0_35 = arith.constant 0 : index
    %87 = vector.load %arg8[%c0_34, %c0_35] : memref<128x128xf32, #tpu.memory_space<vmem>>, vector<128x128xf32>
    tpu.vector_store %arg8[%c0_34, %c0_35], %86 {strides = array<i32>} : memref<128x128xf32, #tpu.memory_space<vmem>>, vector<128x128xf32>,
    return
  }
  func.func @transform_0(%arg0: i32) -> (i32, i32) {
    %c0_i32 = arith.constant 0 : i32
    %c0_i32_0 = arith.constant 0 : i32
    return %arg0, %c0_i32 : i32, i32
  }
  func.func @transform_1(%arg0: i32) -> (i32, i32) {
    %c0_i32 = arith.constant 0 : i32
    %c0_i32_0 = arith.constant 0 : i32
    %c0_i32_1 = arith.constant 0 : i32
    return %c0_i32, %c0_i32_0 : i32, i32
  }
  func.func @transform_2(%arg0: i32) -> (i32, i32) {
    %c0_i32 = arith.constant 0 : i32
    %c0_i32_0 = arith.constant 0 : i32
    %c0_i32_1 = arith.constant 0 : i32
    return %c0_i32, %c0_i32_0 : i32, i32
  }
  func.func @transform_3(%arg0: i32) -> (i32, i32) {
    %c0_i32 = arith.constant 0 : i32
    %c0_i32_0 = arith.constant 0 : i32
    %c0_i32_1 = arith.constant 0 : i32
    return %c0_i32, %c0_i32_0 : i32, i32
  }
  func.func @transform_4(%arg0: i32) -> (i32, i32) {
    %c0_i32 = arith.constant 0 : i32
    %c0_i32_0 = arith.constant 0 : i32
    %c0_i32_1 = arith.constant 0 : i32
    return %c0_i32, %c0_i32_0 : i32, i32
  }
  func.func @transform_5(%arg0: i32) -> (i32, i32) {
    %c0_i32 = arith.constant 0 : i32
    %c0_i32_0 = arith.constant 0 : i32
    %c0_i32_1 = arith.constant 0 : i32
    return %c0_i32, %c0_i32_0 : i32, i32
  }
  func.func @transform_6(%arg0: i32) -> (i32, i32) {
    %c0_i32 = arith.constant 0 : i32
    %c0_i32_0 = arith.constant 0 : i32
    %c0_i32_1 = arith.constant 0 : i32
    return %c0_i32, %c0_i32_0 : i32, i32
  }
  func.func @transform_7(%arg0: i32) -> (i32, i32) {
    %c0_i32 = arith.constant 0 : i32
    %c0_i32_0 = arith.constant 0 : i32
    return %arg0, %c0_i32 : i32, i32
  }
}

module attributes {stable_mosaic.version = 11 : i64} {
  func.func @_resmlp_kernel(%arg0: i32, %arg1: memref<128x128xbf16, #tpu.memory_space<vmem>>, %arg2: memref<128x128xbf16, #tpu.memory_space<vmem>>, %arg3: memref<1x128xf32, #tpu.memory_space<vmem>>, %arg4: memref<128x128xbf16, #tpu.memory_space<vmem>>, %arg5: memref<1x128xf32, #tpu.memory_space<vmem>>, %arg6: memref<128x128xbf16, #tpu.memory_space<vmem>>, %arg7: memref<1x128xf32, #tpu.memory_space<vmem>>, %arg8: memref<128x128xf32, #tpu.memory_space<vmem>>) attributes {dimension_semantics = [#tpu.dimension_semantics<parallel>], iteration_bounds = array<i64: 1>, scalar_prefetch = 0 : i64, scratch_operands = 0 : i64, tpu.core_type = #tpu.core_type<tc>, window_params = [{transform_indices = @transform_0, window_bounds = array<i64: 128, 128>}, {pipeline_mode = #tpu.pipeline_mode<synchronous>, transform_indices = @transform_1, window_bounds = array<i64: 128, 128>}, {pipeline_mode = #tpu.pipeline_mode<synchronous>, transform_indices = @transform_2, window_bounds = array<i64: 1, 128>}, {pipeline_mode = #tpu.pipeline_mode<synchronous>, transform_indices = @transform_3, window_bounds = array<i64: 128, 128>}, {pipeline_mode = #tpu.pipeline_mode<synchronous>, transform_indices = @transform_4, window_bounds = array<i64: 1, 128>}, {pipeline_mode = #tpu.pipeline_mode<synchronous>, transform_indices = @transform_5, window_bounds = array<i64: 128, 128>}, {pipeline_mode = #tpu.pipeline_mode<synchronous>, transform_indices = @transform_6, window_bounds = array<i64: 1, 128>}, {transform_indices = @transform_7, window_bounds = array<i64: 128, 128>}]} {
    %c0 = arith.constant 0 : index
    %c0_0 = arith.constant 0 : index
    %0 = vector.load %arg1[%c0, %c0_0] : memref<128x128xbf16, #tpu.memory_space<vmem>>, vector<128x128xbf16>
    %c0_1 = arith.constant 0 : index
    %c0_2 = arith.constant 0 : index
    %1 = vector.load %arg2[%c0_1, %c0_2] : memref<128x128xbf16, #tpu.memory_space<vmem>>, vector<128x128xbf16>
    %c0_3 = arith.constant 0 : index
    %c0_4 = arith.constant 0 : index
    %2 = vector.load %arg4[%c0_3, %c0_4] : memref<128x128xbf16, #tpu.memory_space<vmem>>, vector<128x128xbf16>
    %c0_5 = arith.constant 0 : index
    %c0_6 = arith.constant 0 : index
    %3 = vector.load %arg6[%c0_5, %c0_6] : memref<128x128xbf16, #tpu.memory_space<vmem>>, vector<128x128xbf16>
    %c0_7 = arith.constant 0 : index
    %c0_8 = arith.constant 0 : index
    %4 = vector.load %arg3[%c0_7, %c0_8] : memref<1x128xf32, #tpu.memory_space<vmem>>, vector<1x128xf32>
    %c0_9 = arith.constant 0 : index
    %c0_10 = arith.constant 0 : index
    %5 = vector.load %arg5[%c0_9, %c0_10] : memref<1x128xf32, #tpu.memory_space<vmem>>, vector<1x128xf32>
    %c0_11 = arith.constant 0 : index
    %c0_12 = arith.constant 0 : index
    %6 = vector.load %arg7[%c0_11, %c0_12] : memref<1x128xf32, #tpu.memory_space<vmem>>, vector<1x128xf32>
    %cst = arith.constant dense<0.000000e+00> : vector<128x128xf32>
    %7 = tpu.matmul %0, %1, %cst {dimension_numbers = #tpu.dot_dimension_numbers<[1], [0], [0], [1], [0, 0, 1, 1], [], []>} : vector<128x128xbf16>, vector<128x128xbf16>, vector<128x128xf32> -> vector<128x128xf32>
    %8 = vector.broadcast %4 : vector<1x128xf32> to vector<128x128xf32>
    %9 = arith.addf %7, %8 : vector<128x128xf32>
    %cst_13 = arith.constant 0.000000e+00 : f32
    %10 = vector.broadcast %cst_13 : f32 to vector<128x128xf32>
    %11 = arith.maximumf %9, %10 : vector<128x128xf32>
    %12 = arith.truncf %11 : vector<128x128xf32> to vector<128x128xbf16>
    %cst_14 = arith.constant dense<0.000000e+00> : vector<128x128xf32>
    %13 = tpu.matmul %12, %2, %cst_14 {dimension_numbers = #tpu.dot_dimension_numbers<[1], [0], [0], [1], [0, 0, 1, 1], [], []>} : vector<128x128xbf16>, vector<128x128xbf16>, vector<128x128xf32> -> vector<128x128xf32>
    %14 = vector.broadcast %5 : vector<1x128xf32> to vector<128x128xf32>
    %15 = arith.addf %13, %14 : vector<128x128xf32>
    %cst_15 = arith.constant 0.000000e+00 : f32
    %16 = vector.broadcast %cst_15 : f32 to vector<128x128xf32>
    %17 = arith.maximumf %15, %16 : vector<128x128xf32>
    %18 = arith.addf %17, %11 : vector<128x128xf32>
    %19 = arith.truncf %18 : vector<128x128xf32> to vector<128x128xbf16>
    %cst_16 = arith.constant dense<0.000000e+00> : vector<128x128xf32>
    %20 = tpu.matmul %19, %2, %cst_16 {dimension_numbers = #tpu.dot_dimension_numbers<[1], [0], [0], [1], [0, 0, 1, 1], [], []>} : vector<128x128xbf16>, vector<128x128xbf16>, vector<128x128xf32> -> vector<128x128xf32>
    %21 = vector.broadcast %5 : vector<1x128xf32> to vector<128x128xf32>
    %22 = arith.addf %20, %21 : vector<128x128xf32>
    %cst_17 = arith.constant 0.000000e+00 : f32
    %23 = vector.broadcast %cst_17 : f32 to vector<128x128xf32>
    %24 = arith.maximumf %22, %23 : vector<128x128xf32>
    %25 = arith.addf %24, %18 : vector<128x128xf32>
    %26 = arith.truncf %25 : vector<128x128xf32> to vector<128x128xbf16>
    %cst_18 = arith.constant dense<0.000000e+00> : vector<128x128xf32>
    %27 = tpu.matmul %26, %2, %cst_18 {dimension_numbers = #tpu.dot_dimension_numbers<[1], [0], [0], [1], [0, 0, 1, 1], [], []>} : vector<128x128xbf16>, vector<128x128xbf16>, vector<128x128xf32> -> vector<128x128xf32>
    %28 = vector.broadcast %5 : vector<1x128xf32> to vector<128x128xf32>
    %29 = arith.addf %27, %28 : vector<128x128xf32>
    %cst_19 = arith.constant 0.000000e+00 : f32
    %30 = vector.broadcast %cst_19 : f32 to vector<128x128xf32>
    %31 = arith.maximumf %29, %30 : vector<128x128xf32>
    %32 = arith.addf %31, %25 : vector<128x128xf32>
    %33 = arith.truncf %32 : vector<128x128xf32> to vector<128x128xbf16>
    %cst_20 = arith.constant dense<0.000000e+00> : vector<128x128xf32>
    %34 = tpu.matmul %33, %2, %cst_20 {dimension_numbers = #tpu.dot_dimension_numbers<[1], [0], [0], [1], [0, 0, 1, 1], [], []>} : vector<128x128xbf16>, vector<128x128xbf16>, vector<128x128xf32> -> vector<128x128xf32>
    %35 = vector.broadcast %5 : vector<1x128xf32> to vector<128x128xf32>
    %36 = arith.addf %34, %35 : vector<128x128xf32>
    %cst_21 = arith.constant 0.000000e+00 : f32
    %37 = vector.broadcast %cst_21 : f32 to vector<128x128xf32>
    %38 = arith.maximumf %36, %37 : vector<128x128xf32>
    %39 = arith.addf %38, %32 : vector<128x128xf32>
    %40 = arith.truncf %39 : vector<128x128xf32> to vector<128x128xbf16>
    %cst_22 = arith.constant dense<0.000000e+00> : vector<128x128xf32>
    %41 = tpu.matmul %40, %2, %cst_22 {dimension_numbers = #tpu.dot_dimension_numbers<[1], [0], [0], [1], [0, 0, 1, 1], [], []>} : vector<128x128xbf16>, vector<128x128xbf16>, vector<128x128xf32> -> vector<128x128xf32>
    %42 = vector.broadcast %5 : vector<1x128xf32> to vector<128x128xf32>
    %43 = arith.addf %41, %42 : vector<128x128xf32>
    %cst_23 = arith.constant 0.000000e+00 : f32
    %44 = vector.broadcast %cst_23 : f32 to vector<128x128xf32>
    %45 = arith.maximumf %43, %44 : vector<128x128xf32>
    %46 = arith.addf %45, %39 : vector<128x128xf32>
    %47 = arith.truncf %46 : vector<128x128xf32> to vector<128x128xbf16>
    %cst_24 = arith.constant dense<0.000000e+00> : vector<128x128xf32>
    %48 = tpu.matmul %47, %2, %cst_24 {dimension_numbers = #tpu.dot_dimension_numbers<[1], [0], [0], [1], [0, 0, 1, 1], [], []>} : vector<128x128xbf16>, vector<128x128xbf16>, vector<128x128xf32> -> vector<128x128xf32>
    %49 = vector.broadcast %5 : vector<1x128xf32> to vector<128x128xf32>
    %50 = arith.addf %48, %49 : vector<128x128xf32>
    %cst_25 = arith.constant 0.000000e+00 : f32
    %51 = vector.broadcast %cst_25 : f32 to vector<128x128xf32>
    %52 = arith.maximumf %50, %51 : vector<128x128xf32>
    %53 = arith.addf %52, %46 : vector<128x128xf32>
    %54 = arith.truncf %53 : vector<128x128xf32> to vector<128x128xbf16>
    %cst_26 = arith.constant dense<0.000000e+00> : vector<128x128xf32>
    %55 = tpu.matmul %54, %2, %cst_26 {dimension_numbers = #tpu.dot_dimension_numbers<[1], [0], [0], [1], [0, 0, 1, 1], [], []>} : vector<128x128xbf16>, vector<128x128xbf16>, vector<128x128xf32> -> vector<128x128xf32>
    %56 = vector.broadcast %5 : vector<1x128xf32> to vector<128x128xf32>
    %57 = arith.addf %55, %56 : vector<128x128xf32>
    %cst_27 = arith.constant 0.000000e+00 : f32
    %58 = vector.broadcast %cst_27 : f32 to vector<128x128xf32>
    %59 = arith.maximumf %57, %58 : vector<128x128xf32>
    %60 = arith.addf %59, %53 : vector<128x128xf32>
    %61 = arith.truncf %60 : vector<128x128xf32> to vector<128x128xbf16>
    %cst_28 = arith.constant dense<0.000000e+00> : vector<128x128xf32>
    %62 = tpu.matmul %61, %2, %cst_28 {dimension_numbers = #tpu.dot_dimension_numbers<[1], [0], [0], [1], [0, 0, 1, 1], [], []>} : vector<128x128xbf16>, vector<128x128xbf16>, vector<128x128xf32> -> vector<128x128xf32>
    %63 = vector.broadcast %5 : vector<1x128xf32> to vector<128x128xf32>
    %64 = arith.addf %62, %63 : vector<128x128xf32>
    %cst_29 = arith.constant 0.000000e+00 : f32
    %65 = vector.broadcast %cst_29 : f32 to vector<128x128xf32>
    %66 = arith.maximumf %64, %65 : vector<128x128xf32>
    %67 = arith.addf %66, %60 : vector<128x128xf32>
    %68 = arith.truncf %67 : vector<128x128xf32> to vector<128x128xbf16>
    %cst_30 = arith.constant dense<0.000000e+00> : vector<128x128xf32>
    %69 = tpu.matmul %68, %3, %cst_30 {dimension_numbers = #tpu.dot_dimension_numbers<[1], [0], [0], [1], [0, 0, 1, 1], [], []>} : vector<128x128xbf16>, vector<128x128xbf16>, vector<128x128xf32> -> vector<128x128xf32>
    %70 = vector.broadcast %6 : vector<1x128xf32> to vector<128x128xf32>
    %71 = arith.addf %69, %70 : vector<128x128xf32>
    %72 = tpu.iota {dimensions = array<i32: 1>} : vector<128x128xi32>
    %c8_i32 = arith.constant 8 : i32
    %73 = vector.broadcast %c8_i32 : i32 to vector<128x128xi32>
    %74 = arith.cmpi slt, %72, %73 : vector<128x128xi32>
    %cst_31 = arith.constant -1.000000e+30 : f32
    %75 = vector.broadcast %cst_31 : f32 to vector<128x128xf32>
    %76 = arith.select %74, %71, %75 : vector<128x128xi1>, vector<128x128xf32>
    %cst_32 = arith.constant dense<0xFF800000> : vector<128xf32>
    %77 = vector.multi_reduction <maximumf>, %76, %cst_32 [1] : vector<128x128xf32> to vector<128xf32>
    %78 = vector.shape_cast %77 : vector<128xf32> to vector<128x1xf32>
    %79 = vector.broadcast %78 : vector<128x1xf32> to vector<128x128xf32>
    %80 = arith.subf %76, %79 : vector<128x128xf32>
    %81 = math.exp %80 : vector<128x128xf32>
    %cst_33 = arith.constant dense<0.000000e+00> : vector<128xf32>
    %82 = vector.multi_reduction <add>, %81, %cst_33 [1] : vector<128x128xf32> to vector<128xf32>
    %83 = vector.shape_cast %82 : vector<128xf32> to vector<128x1xf32>
    %84 = math.log %83 : vector<128x1xf32>
    %85 = vector.broadcast %84 : vector<128x1xf32> to vector<128x128xf32>
    %86 = arith.subf %80, %85 : vector<128x128xf32>
    %c0_34 = arith.constant 0 : index
    %c0_35 = arith.constant 0 : index
    %87 = vector.load %arg8[%c0_34, %c0_35] : memref<128x128xf32, #tpu.memory_space<vmem>>, vector<128x128xf32>
    tpu.vector_store %arg8[%c0_34, %c0_35], %86 {strides = array<i32>} : memref<128x128xf32, #tpu.memory_space<vmem>>, vector<128x128xf32>,
    return
  }
  func.func @transform_0(%arg0: i32) -> (i32, i32) {
    %c0_i32 = arith.constant 0 : i32
    %c0_i32_0 = arith.constant 0 : i32
    return %arg0, %c0_i32 : i32, i32
  }
  func.func @transform_1(%arg0: i32) -> (i32, i32) {
    %c0_i32 = arith.constant 0 : i32
    %c0_i32_0 = arith.constant 0 : i32
    %c0_i32_1 = arith.constant 0 : i32
    return %c0_i32, %c0_i32_0 : i32, i32
  }
  func.func @transform_2(%arg0: i32) -> (i32, i32) {
    %c0_i32 = arith.constant 0 : i32
    %c0_i32_0 = arith.constant 0 : i32
    %c0_i32_1 = arith.constant 0 : i32
    return %c0_i32, %c0_i32_0 : i32, i32
  }
  func.func @transform_3(%arg0: i32) -> (i32, i32) {
    %c0_i32 = arith.constant 0 : i32
    %c0_i32_0 = arith.constant 0 : i32
    %c0_i32_1 = arith.constant 0 : i32
    return %c0_i32, %c0_i32_0 : i32, i32
  }
  func.func @transform_4(%arg0: i32) -> (i32, i32) {
    %c0_i32 = arith.constant 0 : i32
    %c0_i32_0 = arith.constant 0 : i32
    %c0_i32_1 = arith.constant 0 : i32
    return %c0_i32, %c0_i32_0 : i32, i32
  }
  func.func @transform_5(%arg0: i32) -> (i32, i32) {
    %c0_i32 = arith.constant 0 : i32
    %c0_i32_0 = arith.constant 0 : i32
    %c0_i32_1 = arith.constant 0 : i32
    return %c0_i32, %c0_i32_0 : i32, i32
  }
  func.func @transform_6(%arg0: i32) -> (i32, i32) {
    %c0_i32 = arith.constant 0 : i32
    %c0_i32_0 = arith.constant 0 : i32
    %c0_i32_1 = arith.constant 0 : i32
    return %c0_i32, %c0_i32_0 : i32, i32
  }
  func.func @transform_7(%arg0: i32) -> (i32, i32) {
    %c0_i32 = arith.constant 0 : i32
    %c0_i32_0 = arith.constant 0 : i32
    return %arg0, %c0_i32 : i32, i32
  }
}

</mosaic_0001>

<llo_original>
// kernel: tpu_custom_call.1
$region0: #{tpu_custom_call.1}
  #allocation0 [shape = 'u32[]', space=smem, size = 0x4, offset = 0x4, fixed_abs, tag = 'smem constant byte address 0x4 - core index']
  #allocation1 [shape = 'u32[144,128]{1,0:T(1,128)}', space=vmem, size = 0x12000, scoped, tag = 'internal scratch']
  %s0 = inlined_call_operand.hbm [shape: bf16[128,128], index: 0, kind: input, shape index: {}]
  %s1 = inlined_call_operand.hbm [shape: bf16[128,128], index: 1, kind: input, shape index: {}]
  %s2 = inlined_call_operand.vmem [shape: f32[1,128], index: 2, kind: input, shape index: {}]
  %s3 = inlined_call_operand.hbm [shape: bf16[128,128], index: 3, kind: input, shape index: {}]
  %s4 = inlined_call_operand.vmem [shape: f32[1,128], index: 4, kind: input, shape index: {}]
  %s5 = inlined_call_operand.hbm [shape: bf16[128,128], index: 5, kind: input, shape index: {}]
  %s6 = inlined_call_operand.vmem [shape: f32[1,128], index: 6, kind: input, shape index: {}]
  %s7 = inlined_call_operand.hbm [shape: f32[128,128], index: 7, kind: output, shape index: {}]
  %s8 = sld [smem:[#allocation0]]
  $region54: #{tpu_custom_call.1} parent=0
    _
  %s10 = ssub.s32 1, %s8
  %s11 = scalar_select 0, %s10, %s8
  $region1: #{tpu_custom_call.1} parent=0
    #allocation2 [shape = 'u8[32768]{0}', space=vmem, size = 0x8000, scoped, tag = 'input window, operand 0, single buffered']
    #allocation3 [shape = 's32[1]{0}', space=sflag, size = 0x4, scoped, tag = 'scoped memory for tpu_custom_call.1']
    #allocation4 [shape = 's32[1]{0}', space=sflag, size = 0x4, scoped, tag = 'scoped memory for tpu_custom_call.1']
    #allocation5 [shape = 'u8[32768]{0}', space=vmem, size = 0x8000, scoped, tag = 'input window, operand 1, single buffered']
    #allocation6 [shape = 's32[1]{0}', space=sflag, size = 0x4, scoped, tag = 'scoped memory for tpu_custom_call.1']
    #allocation7 [shape = 'u8[32768]{0}', space=vmem, size = 0x8000, scoped, tag = 'input window, operand 3, single buffered']
    #allocation8 [shape = 'u8[32768]{0}', space=vmem, size = 0x8000, scoped, tag = 'input window, operand 5, single buffered']
    #allocation9 [shape = 's32[1]{0}', space=sflag, size = 0x4, scoped, tag = 'scoped memory for tpu_custom_call.1']
    #allocation10 [shape = 'u8[65536]{0}', space=vmem, size = 0x10000, scoped, tag = 'output window, operand 0, single buffered']
    %12 = vsyncpa [#allocation3], 0
    %13 = vsyncpa [#allocation6], 0
    %14 = vsyncpa [#allocation9], 0
    %15 = vsyncpa [#allocation4], 0
    // Predicated region
    $region2: #{tpu_custom_call.1} parent=1 // pred_check
      _
    $region3: #{tpu_custom_call.1} parent=1 // pred_check_branch
      %17 = sbr.rel (0) target = $region5
    $region4: #{tpu_custom_call.1} parent=1 // pred_region
      %s19 = ssub.s32 1024, 1024
      %20 = vsyncadd [#allocation3], %s19
      %s21 = sshll.u32 [#allocation2], 4
      %s22 = int_to_ptr.vmem [resolvable:$true] %s21
      %27 = dma.hbm_to_vmem [thread:$0]  %s0, 1024, %s22, [#allocation3], 64, 64, 4
    $region5: #{tpu_custom_call.1} parent=1 // pred_fallthru
      _
    // Predicated region
    $region6: #{tpu_custom_call.1} parent=1 // pred_check
      _
    $region7: #{tpu_custom_call.1} parent=1 // pred_check_branch
      %29 = sbr.rel (0) target = $region9
    $region8: #{tpu_custom_call.1} parent=1 // pred_region
      %s31 = ssub.s32 1024, 1024
      %32 = vsyncadd [#allocation6], %s31
      %s33 = sshll.u32 [#allocation5], 4
      %s34 = int_to_ptr.vmem [resolvable:$true] %s33
      %39 = dma.hbm_to_vmem [thread:$0]  %s1, 1024, %s34, [#allocation6], 64, 64, 4
    $region9: #{tpu_custom_call.1} parent=1 // pred_fallthru
      _
    // Predicated region
    $region10: #{tpu_custom_call.1} parent=1 // pred_check
      _
    $region11: #{tpu_custom_call.1} parent=1 // pred_check_branch
      %41 = sbr.rel (0) target = $region13
    $region12: #{tpu_custom_call.1} parent=1 // pred_region
      _
    $region13: #{tpu_custom_call.1} parent=1 // pred_fallthru
      _
    // Predicated region
    $region14: #{tpu_custom_call.1} parent=1 // pred_check
      _
    $region15: #{tpu_custom_call.1} parent=1 // pred_check_branch
      %43 = sbr.rel (0) target = $region17
    $region16: #{tpu_custom_call.1} parent=1 // pred_region
      %s45 = ssub.s32 1024, 1024
      %46 = vsyncadd [#allocation6], %s45
      %s47 = sshll.u32 [#allocation7], 4
      %s48 = int_to_ptr.vmem [resolvable:$true] %s47
      %53 = dma.hbm_to_vmem [thread:$0]  %s3, 1024, %s48, [#allocation6], 64, 64, 4
    $region17: #{tpu_custom_call.1} parent=1 // pred_fallthru
      _
    // Predicated region
    $region18: #{tpu_custom_call.1} parent=1 // pred_check
      _
    $region19: #{tpu_custom_call.1} parent=1 // pred_check_branch
      %55 = sbr.rel (0) target = $region21
    $region20: #{tpu_custom_call.1} parent=1 // pred_region
      _
    $region21: #{tpu_custom_call.1} parent=1 // pred_fallthru
      _
    // Predicated region
    $region22: #{tpu_custom_call.1} parent=1 // pred_check
      _
    $region23: #{tpu_custom_call.1} parent=1 // pred_check_branch
      %57 = sbr.rel (0) target = $region25
    $region24: #{tpu_custom_call.1} parent=1 // pred_region
      %s59 = ssub.s32 1024, 1024
      %60 = vsyncadd [#allocation9], %s59
      %s61 = sshll.u32 [#allocation8], 4
      %s62 = int_to_ptr.vmem [resolvable:$true] %s61
      %67 = dma.hbm_to_vmem [thread:$0]  %s5, 1024, %s62, [#allocation9], 64, 64, 4
    $region25: #{tpu_custom_call.1} parent=1 // pred_fallthru
      _
    // Predicated region
    $region26: #{tpu_custom_call.1} parent=1 // pred_check
      _
    $region27: #{tpu_custom_call.1} parent=1 // pred_check_branch
      %69 = sbr.rel (0) target = $region29
    $region28: #{tpu_custom_call.1} parent=1 // pred_region
      _
    $region29: #{tpu_custom_call.1} parent=1 // pred_fallthru
      _
    // Predicated region
    $region30: #{tpu_custom_call.1} parent=1 // pred_check
      _
    $region31: #{tpu_custom_call.1} parent=1 // pred_check_branch
      %71 = sbr.rel (0) target = $region33
    $region32: #{tpu_custom_call.1} parent=1 // pred_region
      %72 = dma.done [#allocation3], 1024
    $region33: #{tpu_custom_call.1} parent=1 // pred_fallthru
      _
    // Predicated region
    $region34: #{tpu_custom_call.1} parent=1 // pred_check
      _
    $region35: #{tpu_custom_call.1} parent=1 // pred_check_branch
      %74 = sbr.rel (0) target = $region37
    $region36: #{tpu_custom_call.1} parent=1 // pred_region
      %75 = dma.done [#allocation6], 1024
    $region37: #{tpu_custom_call.1} parent=1 // pred_fallthru
      _
    // Predicated region
    $region38: #{tpu_custom_call.1} parent=1 // pred_check
      _
    $region39: #{tpu_custom_call.1} parent=1 // pred_check_branch
      %77 = sbr.rel (0) target = $region41
    $region40: #{tpu_custom_call.1} parent=1 // pred_region
      %78 = dma.done [#allocation6], 1024
    $region41: #{tpu_custom_call.1} parent=1 // pred_fallthru
      _
    // Predicated region
    $region42: #{tpu_custom_call.1} parent=1 // pred_check
      _
    $region43: #{tpu_custom_call.1} parent=1 // pred_check_branch
      %80 = sbr.rel (0) target = $region45
    $region44: #{tpu_custom_call.1} parent=1 // pred_region
      %81 = dma.done [#allocation9], 1024
    $region45: #{tpu_custom_call.1} parent=1 // pred_fallthru
      _
    %v83 = vld [vmem:[#allocation2] sm:$0xf]
    %v84 = vld [vmem:[#allocation2 + $0x4] sm:$0xf]
    %v85 = vld [vmem:[#allocation2 + $0x8] sm:$0xf]
    %v86 = vld [vmem:[#allocation2 + $0xc] sm:$0xf]
    %v87 = vld [vmem:[#allocation2 + $0x10] sm:$0xf]
    %v88 = vld [vmem:[#allocation2 + $0x14] sm:$0xf]
    %v89 = vld [vmem:[#allocation2 + $0x18] sm:$0xf]
    %v90 = vld [vmem:[#allocation2 + $0x1c] sm:$0xf]
    %v91 = vld [vmem:[#allocation2 + $0x20] sm:$0xf]
    %v92 = vld [vmem:[#allocation2 + $0x24] sm:$0xf]
    %v93 = vld [vmem:[#allocation2 + $0x28] sm:$0xf]
    %v94 = vld [vmem:[#allocation2 + $0x2c] sm:$0xf]
    %v95 = vld [vmem:[#allocation2 + $0x30] sm:$0xf]
    %v96 = vld [vmem:[#allocation2 + $0x34] sm:$0xf]
    %v97 = vld [vmem:[#allocation2 + $0x38] sm:$0xf]
    %v98 = vld [vmem:[#allocation2 + $0x3c] sm:$0xf]
    %v99 = vld [vmem:[#allocation5] sm:$0xf]
    %v100 = vld [vmem:[#allocation5 + $0x4] sm:$0xf]
    %v101 = vld [vmem:[#allocation5 + $0x8] sm:$0xf]
    %v102 = vld [vmem:[#allocation5 + $0xc] sm:$0xf]
    %v103 = vld [vmem:[#allocation5 + $0x10] sm:$0xf]
    %v104 = vld [vmem:[#allocation5 + $0x14] sm:$0xf]
    %v105 = vld [vmem:[#allocation5 + $0x18] sm:$0xf]
    %v106 = vld [vmem:[#allocation5 + $0x1c] sm:$0xf]
    %v107 = vld [vmem:[#allocation5 + $0x20] sm:$0xf]
    %v108 = vld [vmem:[#allocation5 + $0x24] sm:$0xf]
    %v109 = vld [vmem:[#allocation5 + $0x28] sm:$0xf]
    %v110 = vld [vmem:[#allocation5 + $0x2c] sm:$0xf]
    %v111 = vld [vmem:[#allocation5 + $0x30] sm:$0xf]
    %v112 = vld [vmem:[#allocation5 + $0x34] sm:$0xf]
    %v113 = vld [vmem:[#allocation5 + $0x38] sm:$0xf]
    %v114 = vld [vmem:[#allocation5 + $0x3c] sm:$0xf]
    %v115 = vld [vmem:[#allocation7] sm:$0xf]
    %v116 = vld [vmem:[#allocation7 + $0x4] sm:$0xf]
    %v117 = vld [vmem:[#allocation7 + $0x8] sm:$0xf]
    %v118 = vld [vmem:[#allocation7 + $0xc] sm:$0xf]
    %v119 = vld [vmem:[#allocation7 + $0x10] sm:$0xf]
    %v120 = vld [vmem:[#allocation7 + $0x14] sm:$0xf]
    %v121 = vld [vmem:[#allocation7 + $0x18] sm:$0xf]
    %v122 = vld [vmem:[#allocation7 + $0x1c] sm:$0xf]
    %v123 = vld [vmem:[#allocation7 + $0x20] sm:$0xf]
    %v124 = vld [vmem:[#allocation7 + $0x24] sm:$0xf]
    %v125 = vld [vmem:[#allocation7 + $0x28] sm:$0xf]
    %v126 = vld [vmem:[#allocation7 + $0x2c] sm:$0xf]
    %v127 = vld [vmem:[#allocation7 + $0x30] sm:$0xf]
    %v128 = vld [vmem:[#allocation7 + $0x34] sm:$0xf]
    %v129 = vld [vmem:[#allocation7 + $0x38] sm:$0xf]
    %v130 = vld [vmem:[#allocation7 + $0x3c] sm:$0xf]
    %v131 = vld [vmem:[#allocation8] sm:$0xf]
    %v132 = vld [vmem:[#allocation8 + $0x4] sm:$0xf]
    %v133 = vld [vmem:[#allocation8 + $0x8] sm:$0xf]
    %v134 = vld [vmem:[#allocation8 + $0xc] sm:$0xf]
    %v135 = vld [vmem:[#allocation8 + $0x10] sm:$0xf]
    %v136 = vld [vmem:[#allocation8 + $0x14] sm:$0xf]
    %v137 = vld [vmem:[#allocation8 + $0x18] sm:$0xf]
    %v138 = vld [vmem:[#allocation8 + $0x1c] sm:$0xf]
    %v139 = vld [vmem:[#allocation8 + $0x20] sm:$0xf]
    %v140 = vld [vmem:[#allocation8 + $0x24] sm:$0xf]
    %v141 = vld [vmem:[#allocation8 + $0x28] sm:$0xf]
    %v142 = vld [vmem:[#allocation8 + $0x2c] sm:$0xf]
    %v143 = vld [vmem:[#allocation8 + $0x30] sm:$0xf]
    %v144 = vld [vmem:[#allocation8 + $0x34] sm:$0xf]
    %v145 = vld [vmem:[#allocation8 + $0x38] sm:$0xf]
    %v146 = vld [vmem:[#allocation8 + $0x3c] sm:$0xf]
    %v147 = vld [vmem:[%s2] sm:$0x1]
    %v148 = vld [vmem:[%s4] sm:$0x1]
    %v149 = vld [vmem:[%s6] sm:$0x1]
    %v151 = vlaneseq
    %v152 = vshrl.u32 %v151, 7
    %v153 = vsub.s32 0, %v152
    %v154 = vrot.slane %v147, %v153
    %v172 = vunpack.c.l.b16 %v83
    %v173 = vunpack.c.l.b16 %v84
    %v174 = vunpack.c.l.b16 %v85
    %v175 = vunpack.c.l.b16 %v86
    %v176 = vunpack.c.l.b16 %v87
    %v177 = vunpack.c.l.b16 %v88
    %v178 = vunpack.c.l.b16 %v89
    %v179 = vunpack.c.l.b16 %v90
    %v180 = vunpack.c.l.b16 %v91
    %v181 = vunpack.c.l.b16 %v92
    %v182 = vunpack.c.l.b16 %v93
    %v183 = vunpack.c.l.b16 %v94
    %v184 = vunpack.c.l.b16 %v95
    %v185 = vunpack.c.l.b16 %v96
    %v186 = vunpack.c.l.b16 %v97
    %v187 = vunpack.c.l.b16 %v98
    %v188 = vpack.c.b16 %v173, %v172
    %v189 = vpack.c.b16 %v175, %v174
    %v190 = vpack.c.b16 %v177, %v176
    %v191 = vpack.c.b16 %v179, %v178
    %v192 = vpack.c.b16 %v181, %v180
    %v193 = vpack.c.b16 %v183, %v182
    %v194 = vpack.c.b16 %v185, %v184
    %v195 = vpack.c.b16 %v187, %v186
    %v220 = vunpack.c.l.b16 %v99
    %v221 = vunpack.c.l.b16 %v100
    %v222 = vunpack.c.l.b16 %v101
    %v223 = vunpack.c.l.b16 %v102
    %v224 = vunpack.c.l.b16 %v103
    %v225 = vunpack.c.l.b16 %v104
    %v226 = vunpack.c.l.b16 %v105
    %v227 = vunpack.c.l.b16 %v106
    %v228 = vunpack.c.l.b16 %v107
    %v229 = vunpack.c.l.b16 %v108
    %v230 = vunpack.c.l.b16 %v109
    %v231 = vunpack.c.l.b16 %v110
    %v232 = vunpack.c.l.b16 %v111
    %v233 = vunpack.c.l.b16 %v112
    %v234 = vunpack.c.l.b16 %v113
    %v235 = vunpack.c.l.b16 %v114
    %v236 = vpack.c.b16 %v221, %v220
    %v237 = vpack.c.b16 %v223, %v222
    %v238 = vpack.c.b16 %v225, %v224
    %v239 = vpack.c.b16 %v227, %v226
    %v240 = vpack.c.b16 %v229, %v228
    %v241 = vpack.c.b16 %v231, %v230
    %v242 = vpack.c.b16 %v233, %v232
    %v243 = vpack.c.b16 %v235, %v234
    %252 = vmatprep.subr.bf16.mxu0 0
    %253 = vmatpush1.bf16.msra.mxu0 %v236
    %254 = vmatprep.subr.bf16.mxu0 0
    %255 = vmatpush1.bf16.msra.mxu0 %v237
    %256 = vmatprep.subr.bf16.mxu0 0
    %257 = vmatpush1.bf16.msra.mxu0 %v238
    %258 = vmatprep.subr.bf16.mxu0 0
    %259 = vmatpush1.bf16.msra.mxu0 %v239
    %260 = vmatprep.subr.bf16.mxu0 0
    %261 = vmatpush1.bf16.msra.mxu0 %v240
    %262 = vmatprep.subr.bf16.mxu0 0
    %263 = vmatpush1.bf16.msra.mxu0 %v241
    %264 = vmatprep.subr.bf16.mxu0 0
    %265 = vmatpush1.bf16.msra.mxu0 %v242
    %266 = vmatprep.subr.bf16.mxu0 0
    %267 = vmatpush1.bf16.msra.mxu0 %v243
    %268 = vmatprep.subr.bf16.mxu0 0
    %269 = vmatpush1.bf16.msra.mxu0 0
    %270 = vmatprep.subr.bf16.mxu0 0
    %271 = vmatpush1.bf16.msra.mxu0 0
    %272 = vmatprep.subr.bf16.mxu0 0
    %273 = vmatpush1.bf16.msra.mxu0 0
    %274 = vmatprep.subr.bf16.mxu0 0
    %275 = vmatpush1.bf16.msra.mxu0 0
    %276 = vmatprep.subr.bf16.mxu0 0
    %277 = vmatpush1.bf16.msra.mxu0 0
    %278 = vmatprep.subr.bf16.mxu0 0
    %279 = vmatpush1.bf16.msra.mxu0 0
    %280 = vmatprep.subr.bf16.mxu0 0
    %281 = vmatpush1.bf16.msra.mxu0 0
    %282 = vmatprep.subr.bf16.mxu0 0
    %283 = vmatpush1.bf16.msra.mxu0 0
    %284 = vmatprep.mubr.bf16.mxu0 0
    %285 = vmatmul.mubr.bf16.gmra.mrb[0].mxu0 %v188
    %v286 = vpop.f32.mrb[0].mxu0
    %v287 = vadd.f32 %v154, %v286
    %v288 = vpop.f32.mrb[0].mxu0
    %v289 = vpop.f32.mrb[0].mxu0
    %v290 = vadd.f32 %v154, %v289
    %v291 = vpop.f32.mrb[0].mxu0
    %292 = vmatprep.mubr.bf16.mxu0 0
    %293 = vmatmul.mubr.bf16.gmra.mrb[0].mxu0 %v189
    %v294 = vpop.f32.mrb[0].mxu0
    %v295 = vadd.f32 %v154, %v294
    %v296 = vpop.f32.mrb[0].mxu0
    %v297 = vpop.f32.mrb[0].mxu0
    %v298 = vadd.f32 %v154, %v297
    %v299 = vpop.f32.mrb[0].mxu0
    %300 = vmatprep.mubr.bf16.mxu0 0
    %301 = vmatmul.mubr.bf16.gmra.mrb[0].mxu0 %v190
    %v302 = vpop.f32.mrb[0].mxu0
    %v303 = vadd.f32 %v154, %v302
    %v304 = vpop.f32.mrb[0].mxu0
    %v305 = vpop.f32.mrb[0].mxu0
    %v306 = vadd.f32 %v154, %v305
    %v307 = vpop.f32.mrb[0].mxu0
    %308 = vmatprep.mubr.bf16.mxu0 0
    %309 = vmatmul.mubr.bf16.gmra.mrb[0].mxu0 %v191
    %v310 = vpop.f32.mrb[0].mxu0
    %v311 = vadd.f32 %v154, %v310
    %v312 = vpop.f32.mrb[0].mxu0
    %v313 = vpop.f32.mrb[0].mxu0
    %v314 = vadd.f32 %v154, %v313
    %v315 = vpop.f32.mrb[0].mxu0
    %316 = vmatprep.mubr.bf16.mxu0 0
    %317 = vmatmul.mubr.bf16.gmra.mrb[0].mxu0 %v192
    %v318 = vpop.f32.mrb[0].mxu0
    %v319 = vadd.f32 %v154, %v318
    %v320 = vpop.f32.mrb[0].mxu0
    %v321 = vpop.f32.mrb[0].mxu0
    %v322 = vadd.f32 %v154, %v321
    %v323 = vpop.f32.mrb[0].mxu0
    %324 = vmatprep.mubr.bf16.mxu0 0
    %325 = vmatmul.mubr.bf16.gmra.mrb[0].mxu0 %v193
    %v326 = vpop.f32.mrb[0].mxu0
    %v327 = vadd.f32 %v154, %v326
    %v328 = vpop.f32.mrb[0].mxu0
    %v329 = vpop.f32.mrb[0].mxu0
    %v330 = vadd.f32 %v154, %v329
    %v331 = vpop.f32.mrb[0].mxu0
    %332 = vmatprep.mubr.bf16.mxu0 0
    %333 = vmatmul.mubr.bf16.gmra.mrb[0].mxu0 %v194
    %v334 = vpop.f32.mrb[0].mxu0
    %v335 = vadd.f32 %v154, %v334
    %v336 = vpop.f32.mrb[0].mxu0
    %v337 = vpop.f32.mrb[0].mxu0
    %v338 = vadd.f32 %v154, %v337
    %v339 = vpop.f32.mrb[0].mxu0
    %340 = vmatprep.mubr.bf16.mxu0 0
    %341 = vmatmul.mubr.bf16.gmra.mrb[0].mxu0 %v195
    %v342 = vpop.f32.mrb[0].mxu0
    %v343 = vadd.f32 %v154, %v342
    %v344 = vpop.f32.mrb[0].mxu0
    %v345 = vpop.f32.mrb[0].mxu0
    %v346 = vadd.f32 %v154, %v345
    %v347 = vpop.f32.mrb[0].mxu0
    %348 = vdwg.mxu0
    %v349 = vmax.f32 %v287, 0.0
    %v350 = vmax.f32 %v290, 0.0
    %v351 = vmax.f32 %v295, 0.0
    %v352 = vmax.f32 %v298, 0.0
    %v353 = vmax.f32 %v303, 0.0
    %v354 = vmax.f32 %v306, 0.0
    %v355 = vmax.f32 %v311, 0.0
    %v356 = vmax.f32 %v314, 0.0
    %v357 = vmax.f32 %v319, 0.0
    %v358 = vmax.f32 %v322, 0.0
    %v359 = vmax.f32 %v327, 0.0
    %v360 = vmax.f32 %v330, 0.0
    %v361 = vmax.f32 %v335, 0.0
    %v362 = vmax.f32 %v338, 0.0
    %v363 = vmax.f32 %v343, 0.0
    %v364 = vmax.f32 %v346, 0.0
    %v365 = vpack.c.bf16 %v350, %v349
    %v366 = vpack.c.bf16 %v352, %v351
    %v367 = vpack.c.bf16 %v354, %v353
    %v368 = vpack.c.bf16 %v356, %v355
    %v369 = vpack.c.bf16 %v358, %v357
    %v370 = vpack.c.bf16 %v360, %v359
    %v371 = vpack.c.bf16 %v362, %v361
    %v372 = vpack.c.bf16 %v364, %v363
    %v374 = vlaneseq
    %v375 = vshrl.u32 %v374, 7
    %v376 = vsub.s32 0, %v375
    %v377 = vrot.slane %v148, %v376
    %v395 = vunpack.c.l.b16 %v115
    %v396 = vunpack.c.l.b16 %v116
    %v397 = vunpack.c.l.b16 %v117
    %v398 = vunpack.c.l.b16 %v118
    %v399 = vunpack.c.l.b16 %v119
    %v400 = vunpack.c.l.b16 %v120
    %v401 = vunpack.c.l.b16 %v121
    %v402 = vunpack.c.l.b16 %v122
    %v403 = vunpack.c.l.b16 %v123
    %v404 = vunpack.c.l.b16 %v124
    %v405 = vunpack.c.l.b16 %v125
    %v406 = vunpack.c.l.b16 %v126
    %v407 = vunpack.c.l.b16 %v127
    %v408 = vunpack.c.l.b16 %v128
    %v409 = vunpack.c.l.b16 %v129
    %v410 = vunpack.c.l.b16 %v130
    %v411 = vpack.c.b16 %v396, %v395
    %v412 = vpack.c.b16 %v398, %v397
    %v413 = vpack.c.b16 %v400, %v399
    %v414 = vpack.c.b16 %v402, %v401
    %v415 = vpack.c.b16 %v404, %v403
    %v416 = vpack.c.b16 %v406, %v405
    %v417 = vpack.c.b16 %v408, %v407
    %v418 = vpack.c.b16 %v410, %v409
    %427 = vmatprep.subr.bf16.mxu0 0
    %428 = vmatpush1.bf16.msra.mxu0 %v411
    %429 = vmatprep.subr.bf16.mxu0 0
    %430 = vmatpush1.bf16.msra.mxu0 %v412
    %431 = vmatprep.subr.bf16.mxu0 0
    %432 = vmatpush1.bf16.msra.mxu0 %v413
    %433 = vmatprep.subr.bf16.mxu0 0
    %434 = vmatpush1.bf16.msra.mxu0 %v414
    %435 = vmatprep.subr.bf16.mxu0 0
    %436 = vmatpush1.bf16.msra.mxu0 %v415
    %437 = vmatprep.subr.bf16.mxu0 0
    %438 = vmatpush1.bf16.msra.mxu0 %v416
    %439 = vmatprep.subr.bf16.mxu0 0
    %440 = vmatpush1.bf16.msra.mxu0 %v417
    %441 = vmatprep.subr.bf16.mxu0 0
    %442 = vmatpush1.bf16.msra.mxu0 %v418
    %443 = vmatprep.subr.bf16.mxu0 0
    %444 = vmatpush1.bf16.msra.mxu0 0
    %445 = vmatprep.subr.bf16.mxu0 0
    %446 = vmatpush1.bf16.msra.mxu0 0
    %447 = vmatprep.subr.bf16.mxu0 0
    %448 = vmatpush1.bf16.msra.mxu0 0
    %449 = vmatprep.subr.bf16.mxu0 0
    %450 = vmatpush1.bf16.msra.mxu0 0
    %451 = vmatprep.subr.bf16.mxu0 0
    %452 = vmatpush1.bf16.msra.mxu0 0
    %453 = vmatprep.subr.bf16.mxu0 0
    %454 = vmatpush1.bf16.msra.mxu0 0
    %455 = vmatprep.subr.bf16.mxu0 0
    %456 = vmatpush1.bf16.msra.mxu0 0
    %457 = vmatprep.subr.bf16.mxu0 0
    %458 = vmatpush1.bf16.msra.mxu0 0
    %459 = vmatprep.mubr.bf16.mxu0 0
    %460 = vmatmul.mubr.bf16.gmra.mrb[0].mxu0 %v365
    %v461 = vpop.f32.mrb[0].mxu0
    %v462 = vadd.f32 %v377, %v461
    %v463 = vpop.f32.mrb[0].mxu0
    %v464 = vpop.f32.mrb[0].mxu0
    %v465 = vadd.f32 %v377, %v464
    %v466 = vpop.f32.mrb[0].mxu0
    %467 = vmatprep.mubr.bf16.mxu0 0
    %468 = vmatmul.mubr.bf16.gmra.mrb[0].mxu0 %v366
    %v469 = vpop.f32.mrb[0].mxu0
    %v470 = vadd.f32 %v377, %v469
    %v471 = vpop.f32.mrb[0].mxu0
    %v472 = vpop.f32.mrb[0].mxu0
    %v473 = vadd.f32 %v377, %v472
    %v474 = vpop.f32.mrb[0].mxu0
    %475 = vmatprep.mubr.bf16.mxu0 0
    %476 = vmatmul.mubr.bf16.gmra.mrb[0].mxu0 %v367
    %v477 = vpop.f32.mrb[0].mxu0
    %v478 = vadd.f32 %v377, %v477
    %v479 = vpop.f32.mrb[0].mxu0
    %v480 = vpop.f32.mrb[0].mxu0
    %v481 = vadd.f32 %v377, %v480
    %v482 = vpop.f32.mrb[0].mxu0
    %483 = vmatprep.mubr.bf16.mxu0 0
    %484 = vmatmul.mubr.bf16.gmra.mrb[0].mxu0 %v368
    %v485 = vpop.f32.mrb[0].mxu0
    %v486 = vadd.f32 %v377, %v485
    %v487 = vpop.f32.mrb[0].mxu0
    %v488 = vpop.f32.mrb[0].mxu0
    %v489 = vadd.f32 %v377, %v488
    %v490 = vpop.f32.mrb[0].mxu0
    %491 = vmatprep.mubr.bf16.mxu0 0
    %492 = vmatmul.mubr.bf16.gmra.mrb[0].mxu0 %v369
    %v493 = vpop.f32.mrb[0].mxu0
    %v494 = vadd.f32 %v377, %v493
    %v495 = vpop.f32.mrb[0].mxu0
    %v496 = vpop.f32.mrb[0].mxu0
    %v497 = vadd.f32 %v377, %v496
    %v498 = vpop.f32.mrb[0].mxu0
    %499 = vmatprep.mubr.bf16.mxu0 0
    %500 = vmatmul.mubr.bf16.gmra.mrb[0].mxu0 %v370
    %v501 = vpop.f32.mrb[0].mxu0
    %v502 = vadd.f32 %v377, %v501
    %v503 = vpop.f32.mrb[0].mxu0
    %v504 = vpop.f32.mrb[0].mxu0
    %v505 = vadd.f32 %v377, %v504
    %v506 = vpop.f32.mrb[0].mxu0
    %507 = vmatprep.mubr.bf16.mxu0 0
    %508 = vmatmul.mubr.bf16.gmra.mrb[0].mxu0 %v371
    %v509 = vpop.f32.mrb[0].mxu0
    %v510 = vadd.f32 %v377, %v509
    %v511 = vpop.f32.mrb[0].mxu0
    %v512 = vpop.f32.mrb[0].mxu0
    %v513 = vadd.f32 %v377, %v512
    %v514 = vpop.f32.mrb[0].mxu0
    %515 = vmatprep.mubr.bf16.mxu0 0
    %516 = vmatmul.mubr.bf16.gmra.mrb[0].mxu0 %v372
    %v517 = vpop.f32.mrb[0].mxu0
    %v518 = vadd.f32 %v377, %v517
    %v519 = vpop.f32.mrb[0].mxu0
    %v520 = vpop.f32.mrb[0].mxu0
    %v521 = vadd.f32 %v377, %v520
    %v522 = vpop.f32.mrb[0].mxu0
    %523 = vdwg.mxu0
    %v524 = vmax.f32 %v462, 0.0
    %v525 = vmax.f32 %v465, 0.0
    %v526 = vmax.f32 %v470, 0.0
    %v527 = vmax.f32 %v473, 0.0
    %v528 = vmax.f32 %v478, 0.0
    %v529 = vmax.f32 %v481, 0.0
    %v530 = vmax.f32 %v486, 0.0
    %v531 = vmax.f32 %v489, 0.0
    %v532 = vmax.f32 %v494, 0.0
    %v533 = vmax.f32 %v497, 0.0
    %v534 = vmax.f32 %v502, 0.0
    %v535 = vmax.f32 %v505, 0.0
    %v536 = vmax.f32 %v510, 0.0
    %v537 = vmax.f32 %v513, 0.0
    %v538 = vmax.f32 %v518, 0.0
    %v539 = vmax.f32 %v521, 0.0
    %v540 = vadd.f32 %v524, %v349
    %v541 = vadd.f32 %v525, %v350
    %v542 = vadd.f32 %v526, %v351
    %v543 = vadd.f32 %v527, %v352
    %v544 = vadd.f32 %v528, %v353
    %v545 = vadd.f32 %v529, %v354
    %v546 = vadd.f32 %v530, %v355
    %v547 = vadd.f32 %v531, %v356
    %v548 = vadd.f32 %v532, %v357
    %v549 = vadd.f32 %v533, %v358
    %v550 = vadd.f32 %v534, %v359
    %v551 = vadd.f32 %v535, %v360
    %v552 = vadd.f32 %v536, %v361
    %v553 = vadd.f32 %v537, %v362
    %v554 = vadd.f32 %v538, %v363
    %v555 = vadd.f32 %v539, %v364
    %v556 = vpack.c.bf16 %v541, %v540
    %v557 = vpack.c.bf16 %v543, %v542
    %v558 = vpack.c.bf16 %v545, %v544
    %v559 = vpack.c.bf16 %v547, %v546
    %v560 = vpack.c.bf16 %v549, %v548
    %v561 = vpack.c.bf16 %v551, %v550
    %v562 = vpack.c.bf16 %v553, %v552
    %v563 = vpack.c.bf16 %v555, %v554
    %564 = vmatprep.subr.bf16.mxu0 0
    %565 = vmatpush1.bf16.msra.mxu0 %v411
    %566 = vmatprep.subr.bf16.mxu0 0
    %567 = vmatpush1.bf16.msra.mxu0 %v412
    %568 = vmatprep.subr.bf16.mxu0 0
    %569 = vmatpush1.bf16.msra.mxu0 %v413
    %570 = vmatprep.subr.bf16.mxu0 0
    %571 = vmatpush1.bf16.msra.mxu0 %v414
    %572 = vmatprep.subr.bf16.mxu0 0
    %573 = vmatpush1.bf16.msra.mxu0 %v415
    %574 = vmatprep.subr.bf16.mxu0 0
    %575 = vmatpush1.bf16.msra.mxu0 %v416
    %576 = vmatprep.subr.bf16.mxu0 0
    %577 = vmatpush1.bf16.msra.mxu0 %v417
    %578 = vmatprep.subr.bf16.mxu0 0
    %579 = vmatpush1.bf16.msra.mxu0 %v418
    %580 = vmatprep.subr.bf16.mxu0 0
    %581 = vmatpush1.bf16.msra.mxu0 0
    %582 = vmatprep.subr.bf16.mxu0 0
    %583 = vmatpush1.bf16.msra.mxu0 0
    %584 = vmatprep.subr.bf16.mxu0 0
    %585 = vmatpush1.bf16.msra.mxu0 0
    %586 = vmatprep.subr.bf16.mxu0 0
    %587 = vmatpush1.bf16.msra.mxu0 0
    %588 = vmatprep.subr.bf16.mxu0 0
    %589 = vmatpush1.bf16.msra.mxu0 0
    %590 = vmatprep.subr.bf16.mxu0 0
    %591 = vmatpush1.bf16.msra.mxu0 0
    %592 = vmatprep.subr.bf16.mxu0 0
    %593 = vmatpush1.bf16.msra.mxu0 0
    %594 = vmatprep.subr.bf16.mxu0 0
    %595 = vmatpush1.bf16.msra.mxu0 0
    %596 = vmatprep.mubr.bf16.mxu0 0
    %597 = vmatmul.mubr.bf16.gmra.mrb[0].mxu0 %v556
    %v598 = vpop.f32.mrb[0].mxu0
    %v599 = vadd.f32 %v377, %v598
    %v600 = vpop.f32.mrb[0].mxu0
    %v601 = vpop.f32.mrb[0].mxu0
    %v602 = vadd.f32 %v377, %v601
    %v603 = vpop.f32.mrb[0].mxu0
    %604 = vmatprep.mubr.bf16.mxu0 0
    %605 = vmatmul.mubr.bf16.gmra.mrb[0].mxu0 %v557
    %v606 = vpop.f32.mrb[0].mxu0
    %v607 = vadd.f32 %v377, %v606
    %v608 = vpop.f32.mrb[0].mxu0
    %v609 = vpop.f32.mrb[0].mxu0
    %v610 = vadd.f32 %v377, %v609
    %v611 = vpop.f32.mrb[0].mxu0
    %612 = vmatprep.mubr.bf16.mxu0 0
    %613 = vmatmul.mubr.bf16.gmra.mrb[0].mxu0 %v558
    %v614 = vpop.f32.mrb[0].mxu0
    %v615 = vadd.f32 %v377, %v614
    %v616 = vpop.f32.mrb[0].mxu0
    %v617 = vpop.f32.mrb[0].mxu0
    %v618 = vadd.f32 %v377, %v617
    %v619 = vpop.f32.mrb[0].mxu0
    %620 = vmatprep.mubr.bf16.mxu0 0
    %621 = vmatmul.mubr.bf16.gmra.mrb[0].mxu0 %v559
    %v622 = vpop.f32.mrb[0].mxu0
    %v623 = vadd.f32 %v377, %v622
    %v624 = vpop.f32.mrb[0].mxu0
    %v625 = vpop.f32.mrb[0].mxu0
    %v626 = vadd.f32 %v377, %v625
    %v627 = vpop.f32.mrb[0].mxu0
    %628 = vmatprep.mubr.bf16.mxu0 0
    %629 = vmatmul.mubr.bf16.gmra.mrb[0].mxu0 %v560
    %v630 = vpop.f32.mrb[0].mxu0
    %v631 = vadd.f32 %v377, %v630
    %v632 = vpop.f32.mrb[0].mxu0
    %v633 = vpop.f32.mrb[0].mxu0
    %v634 = vadd.f32 %v377, %v633
    %v635 = vpop.f32.mrb[0].mxu0
    %636 = vmatprep.mubr.bf16.mxu0 0
    %637 = vmatmul.mubr.bf16.gmra.mrb[0].mxu0 %v561
    %v638 = vpop.f32.mrb[0].mxu0
    %v639 = vadd.f32 %v377, %v638
    %v640 = vpop.f32.mrb[0].mxu0
    %v641 = vpop.f32.mrb[0].mxu0
    %v642 = vadd.f32 %v377, %v641
    %v643 = vpop.f32.mrb[0].mxu0
    %644 = vmatprep.mubr.bf16.mxu0 0
    %645 = vmatmul.mubr.bf16.gmra.mrb[0].mxu0 %v562
    %v646 = vpop.f32.mrb[0].mxu0
    %v647 = vadd.f32 %v377, %v646
    %v648 = vpop.f32.mrb[0].mxu0
    %v649 = vpop.f32.mrb[0].mxu0
    %v650 = vadd.f32 %v377, %v649
    %v651 = vpop.f32.mrb[0].mxu0
    %652 = vmatprep.mubr.bf16.mxu0 0
    %653 = vmatmul.mubr.bf16.gmra.mrb[0].mxu0 %v563
    %v654 = vpop.f32.mrb[0].mxu0
    %v655 = vadd.f32 %v377, %v654
    %v656 = vpop.f32.mrb[0].mxu0
    %v657 = vpop.f32.mrb[0].mxu0
    %v658 = vadd.f32 %v377, %v657
    %v659 = vpop.f32.mrb[0].mxu0
    %660 = vdwg.mxu0
    %v661 = vmax.f32 %v599, 0.0
    %v662 = vmax.f32 %v602, 0.0
    %v663 = vmax.f32 %v607, 0.0
    %v664 = vmax.f32 %v610, 0.0
    %v665 = vmax.f32 %v615, 0.0
    %v666 = vmax.f32 %v618, 0.0
    %v667 = vmax.f32 %v623, 0.0
    %v668 = vmax.f32 %v626, 0.0
    %v669 = vmax.f32 %v631, 0.0
    %v670 = vmax.f32 %v634, 0.0
    %v671 = vmax.f32 %v639, 0.0
    %v672 = vmax.f32 %v642, 0.0
    %v673 = vmax.f32 %v647, 0.0
    %v674 = vmax.f32 %v650, 0.0
    %v675 = vmax.f32 %v655, 0.0
    %v676 = vmax.f32 %v658, 0.0
    %v677 = vadd.f32 %v661, %v540
    %v678 = vadd.f32 %v662, %v541
    %v679 = vadd.f32 %v663, %v542
    %v680 = vadd.f32 %v664, %v543
    %v681 = vadd.f32 %v665, %v544
    %v682 = vadd.f32 %v666, %v545
    %v683 = vadd.f32 %v667, %v546
    %v684 = vadd.f32 %v668, %v547
    %v685 = vadd.f32 %v669, %v548
    %v686 = vadd.f32 %v670, %v549
    %v687 = vadd.f32 %v671, %v550
    %v688 = vadd.f32 %v672, %v551
    %v689 = vadd.f32 %v673, %v552
    %v690 = vadd.f32 %v674, %v553
    %v691 = vadd.f32 %v675, %v554
    %v692 = vadd.f32 %v676, %v555
    %v693 = vpack.c.bf16 %v678, %v677
    %v694 = vpack.c.bf16 %v680, %v679
    %v695 = vpack.c.bf16 %v682, %v681
    %v696 = vpack.c.bf16 %v684, %v683
    %v697 = vpack.c.bf16 %v686, %v685
    %v698 = vpack.c.bf16 %v688, %v687
    %v699 = vpack.c.bf16 %v690, %v689
    %v700 = vpack.c.bf16 %v692, %v691
    %701 = vmatprep.subr.bf16.mxu0 0
    %702 = vmatpush1.bf16.msra.mxu0 %v411
    %703 = vmatprep.subr.bf16.mxu0 0
    %704 = vmatpush1.bf16.msra.mxu0 %v412
    %705 = vmatprep.subr.bf16.mxu0 0
    %706 = vmatpush1.bf16.msra.mxu0 %v413
    %707 = vmatprep.subr.bf16.mxu0 0
    %708 = vmatpush1.bf16.msra.mxu0 %v414
    %709 = vmatprep.subr.bf16.mxu0 0
    %710 = vmatpush1.bf16.msra.mxu0 %v415
    %711 = vmatprep.subr.bf16.mxu0 0
    %712 = vmatpush1.bf16.msra.mxu0 %v416
    %713 = vmatprep.subr.bf16.mxu0 0
    %714 = vmatpush1.bf16.msra.mxu0 %v417
    %715 = vmatprep.subr.bf16.mxu0 0
    %716 = vmatpush1.bf16.msra.mxu0 %v418
    %717 = vmatprep.subr.bf16.mxu0 0
    %718 = vmatpush1.bf16.msra.mxu0 0
    %719 = vmatprep.subr.bf16.mxu0 0
    %720 = vmatpush1.bf16.msra.mxu0 0
    %721 = vmatprep.subr.bf16.mxu0 0
    %722 = vmatpush1.bf16.msra.mxu0 0
    %723 = vmatprep.subr.bf16.mxu0 0
    %724 = vmatpush1.bf16.msra.mxu0 0
    %725 = vmatprep.subr.bf16.mxu0 0
    %726 = vmatpush1.bf16.msra.mxu0 0
    %727 = vmatprep.subr.bf16.mxu0 0
    %728 = vmatpush1.bf16.msra.mxu0 0
    %729 = vmatprep.subr.bf16.mxu0 0
    %730 = vmatpush1.bf16.msra.mxu0 0
    %731 = vmatprep.subr.bf16.mxu0 0
    %732 = vmatpush1.bf16.msra.mxu0 0
    %733 = vmatprep.mubr.bf16.mxu0 0
    %734 = vmatmul.mubr.bf16.gmra.mrb[0].mxu0 %v693
    %v735 = vpop.f32.mrb[0].mxu0
    %v736 = vadd.f32 %v377, %v735
    %v737 = vpop.f32.mrb[0].mxu0
    %v738 = vpop.f32.mrb[0].mxu0
    %v739 = vadd.f32 %v377, %v738
    %v740 = vpop.f32.mrb[0].mxu0
    %741 = vmatprep.mubr.bf16.mxu0 0
    %742 = vmatmul.mubr.bf16.gmra.mrb[0].mxu0 %v694
    %v743 = vpop.f32.mrb[0].mxu0
    %v744 = vadd.f32 %v377, %v743
    %v745 = vpop.f32.mrb[0].mxu0
    %v746 = vpop.f32.mrb[0].mxu0
    %v747 = vadd.f32 %v377, %v746
    %v748 = vpop.f32.mrb[0].mxu0
    %749 = vmatprep.mubr.bf16.mxu0 0
    %750 = vmatmul.mubr.bf16.gmra.mrb[0].mxu0 %v695
    %v751 = vpop.f32.mrb[0].mxu0
    %v752 = vadd.f32 %v377, %v751
    %v753 = vpop.f32.mrb[0].mxu0
    %v754 = vpop.f32.mrb[0].mxu0
    %v755 = vadd.f32 %v377, %v754
    %v756 = vpop.f32.mrb[0].mxu0
    %757 = vmatprep.mubr.bf16.mxu0 0
    %758 = vmatmul.mubr.bf16.gmra.mrb[0].mxu0 %v696
    %v759 = vpop.f32.mrb[0].mxu0
    %v760 = vadd.f32 %v377, %v759
    %v761 = vpop.f32.mrb[0].mxu0
    %v762 = vpop.f32.mrb[0].mxu0
    %v763 = vadd.f32 %v377, %v762
    %v764 = vpop.f32.mrb[0].mxu0
    %765 = vmatprep.mubr.bf16.mxu0 0
    %766 = vmatmul.mubr.bf16.gmra.mrb[0].mxu0 %v697
    %v767 = vpop.f32.mrb[0].mxu0
    %v768 = vadd.f32 %v377, %v767
    %v769 = vpop.f32.mrb[0].mxu0
    %v770 = vpop.f32.mrb[0].mxu0
    %v771 = vadd.f32 %v377, %v770
    %v772 = vpop.f32.mrb[0].mxu0
    %773 = vmatprep.mubr.bf16.mxu0 0
    %774 = vmatmul.mubr.bf16.gmra.mrb[0].mxu0 %v698
    %v775 = vpop.f32.mrb[0].mxu0
    %v776 = vadd.f32 %v377, %v775
    %v777 = vpop.f32.mrb[0].mxu0
    %v778 = vpop.f32.mrb[0].mxu0
    %v779 = vadd.f32 %v377, %v778
    %v780 = vpop.f32.mrb[0].mxu0
    %781 = vmatprep.mubr.bf16.mxu0 0
    %782 = vmatmul.mubr.bf16.gmra.mrb[0].mxu0 %v699
    %v783 = vpop.f32.mrb[0].mxu0
    %v784 = vadd.f32 %v377, %v783
    %v785 = vpop.f32.mrb[0].mxu0
    %v786 = vpop.f32.mrb[0].mxu0
    %v787 = vadd.f32 %v377, %v786
    %v788 = vpop.f32.mrb[0].mxu0
    %789 = vmatprep.mubr.bf16.mxu0 0
    %790 = vmatmul.mubr.bf16.gmra.mrb[0].mxu0 %v700
    %v791 = vpop.f32.mrb[0].mxu0
    %v792 = vadd.f32 %v377, %v791
    %v793 = vpop.f32.mrb[0].mxu0
    %v794 = vpop.f32.mrb[0].mxu0
    %v795 = vadd.f32 %v377, %v794
    %v796 = vpop.f32.mrb[0].mxu0
    %797 = vdwg.mxu0
    %v798 = vmax.f32 %v736, 0.0
    %v799 = vmax.f32 %v739, 0.0
    %v800 = vmax.f32 %v744, 0.0
    %v801 = vmax.f32 %v747, 0.0
    %v802 = vmax.f32 %v752, 0.0
    %v803 = vmax.f32 %v755, 0.0
    %v804 = vmax.f32 %v760, 0.0
    %v805 = vmax.f32 %v763, 0.0
    %v806 = vmax.f32 %v768, 0.0
    %v807 = vmax.f32 %v771, 0.0
    %v808 = vmax.f32 %v776, 0.0
    %v809 = vmax.f32 %v779, 0.0
    %v810 = vmax.f32 %v784, 0.0
    %v811 = vmax.f32 %v787, 0.0
    %v812 = vmax.f32 %v792, 0.0
    %v813 = vmax.f32 %v795, 0.0
    %v814 = vadd.f32 %v798, %v677
    %v815 = vadd.f32 %v799, %v678
    %v816 = vadd.f32 %v800, %v679
    %v817 = vadd.f32 %v801, %v680
    %v818 = vadd.f32 %v802, %v681
    %v819 = vadd.f32 %v803, %v682
    %v820 = vadd.f32 %v804, %v683
    %v821 = vadd.f32 %v805, %v684
    %v822 = vadd.f32 %v806, %v685
    %v823 = vadd.f32 %v807, %v686
    %v824 = vadd.f32 %v808, %v687
    %v825 = vadd.f32 %v809, %v688
    %v826 = vadd.f32 %v810, %v689
    %v827 = vadd.f32 %v811, %v690
    %v828 = vadd.f32 %v812, %v691
    %v829 = vadd.f32 %v813, %v692
    %v830 = vpack.c.bf16 %v815, %v814
    %v831 = vpack.c.bf16 %v817, %v816
    %v832 = vpack.c.bf16 %v819, %v818
    %v833 = vpack.c.bf16 %v821, %v820
    %v834 = vpack.c.bf16 %v823, %v822
    %v835 = vpack.c.bf16 %v825, %v824
    %v836 = vpack.c.bf16 %v827, %v826
    %v837 = vpack.c.bf16 %v829, %v828
    %838 = vmatprep.subr.bf16.mxu0 0
    %839 = vmatpush1.bf16.msra.mxu0 %v411
    %840 = vmatprep.subr.bf16.mxu0 0
    %841 = vmatpush1.bf16.msra.mxu0 %v412
    %842 = vmatprep.subr.bf16.mxu0 0
    %843 = vmatpush1.bf16.msra.mxu0 %v413
    %844 = vmatprep.subr.bf16.mxu0 0
    %845 = vmatpush1.bf16.msra.mxu0 %v414
    %846 = vmatprep.subr.bf16.mxu0 0
    %847 = vmatpush1.bf16.msra.mxu0 %v415
    %848 = vmatprep.subr.bf16.mxu0 0
    %849 = vmatpush1.bf16.msra.mxu0 %v416
    %850 = vmatprep.subr.bf16.mxu0 0
    %851 = vmatpush1.bf16.msra.mxu0 %v417
    %852 = vmatprep.subr.bf16.mxu0 0
    %853 = vmatpush1.bf16.msra.mxu0 %v418
    %854 = vmatprep.subr.bf16.mxu0 0
    %855 = vmatpush1.bf16.msra.mxu0 0
    %856 = vmatprep.subr.bf16.mxu0 0
    %857 = vmatpush1.bf16.msra.mxu0 0
    %858 = vmatprep.subr.bf16.mxu0 0
    %859 = vmatpush1.bf16.msra.mxu0 0
    %860 = vmatprep.subr.bf16.mxu0 0
    %861 = vmatpush1.bf16.msra.mxu0 0
    %862 = vmatprep.subr.bf16.mxu0 0
    %863 = vmatpush1.bf16.msra.mxu0 0
    %864 = vmatprep.subr.bf16.mxu0 0
    %865 = vmatpush1.bf16.msra.mxu0 0
    %866 = vmatprep.subr.bf16.mxu0 0
    %867 = vmatpush1.bf16.msra.mxu0 0
    %868 = vmatprep.subr.bf16.mxu0 0
    %869 = vmatpush1.bf16.msra.mxu0 0
    %870 = vmatprep.mubr.bf16.mxu0 0
    %871 = vmatmul.mubr.bf16.gmra.mrb[0].mxu0 %v830
    %v872 = vpop.f32.mrb[0].mxu0
    %v873 = vadd.f32 %v377, %v872
    %v874 = vpop.f32.mrb[0].mxu0
    %v875 = vpop.f32.mrb[0].mxu0
    %v876 = vadd.f32 %v377, %v875
    %v877 = vpop.f32.mrb[0].mxu0
    %878 = vmatprep.mubr.bf16.mxu0 0
    %879 = vmatmul.mubr.bf16.gmra.mrb[0].mxu0 %v831
    %v880 = vpop.f32.mrb[0].mxu0
    %v881 = vadd.f32 %v377, %v880
    %v882 = vpop.f32.mrb[0].mxu0
    %v883 = vpop.f32.mrb[0].mxu0
    %v884 = vadd.f32 %v377, %v883
    %v885 = vpop.f32.mrb[0].mxu0
    %886 = vmatprep.mubr.bf16.mxu0 0
    %887 = vmatmul.mubr.bf16.gmra.mrb[0].mxu0 %v832
    %v888 = vpop.f32.mrb[0].mxu0
    %v889 = vadd.f32 %v377, %v888
    %v890 = vpop.f32.mrb[0].mxu0
    %v891 = vpop.f32.mrb[0].mxu0
    %v892 = vadd.f32 %v377, %v891
    %v893 = vpop.f32.mrb[0].mxu0
    %894 = vmatprep.mubr.bf16.mxu0 0
    %895 = vmatmul.mubr.bf16.gmra.mrb[0].mxu0 %v833
    %v896 = vpop.f32.mrb[0].mxu0
    %v897 = vadd.f32 %v377, %v896
    %v898 = vpop.f32.mrb[0].mxu0
    %v899 = vpop.f32.mrb[0].mxu0
    %v900 = vadd.f32 %v377, %v899
    %v901 = vpop.f32.mrb[0].mxu0
    %902 = vmatprep.mubr.bf16.mxu0 0
    %903 = vmatmul.mubr.bf16.gmra.mrb[0].mxu0 %v834
    %v904 = vpop.f32.mrb[0].mxu0
    %v905 = vadd.f32 %v377, %v904
    %v906 = vpop.f32.mrb[0].mxu0
    %v907 = vpop.f32.mrb[0].mxu0
    %v908 = vadd.f32 %v377, %v907
    %v909 = vpop.f32.mrb[0].mxu0
    %910 = vmatprep.mubr.bf16.mxu0 0
    %911 = vmatmul.mubr.bf16.gmra.mrb[0].mxu0 %v835
    %v912 = vpop.f32.mrb[0].mxu0
    %v913 = vadd.f32 %v377, %v912
    %v914 = vpop.f32.mrb[0].mxu0
    %v915 = vpop.f32.mrb[0].mxu0
    %v916 = vadd.f32 %v377, %v915
    %v917 = vpop.f32.mrb[0].mxu0
    %918 = vmatprep.mubr.bf16.mxu0 0
    %919 = vmatmul.mubr.bf16.gmra.mrb[0].mxu0 %v836
    %v920 = vpop.f32.mrb[0].mxu0
    %v921 = vadd.f32 %v377, %v920
    %v922 = vpop.f32.mrb[0].mxu0
    %v923 = vpop.f32.mrb[0].mxu0
    %v924 = vadd.f32 %v377, %v923
    %v925 = vpop.f32.mrb[0].mxu0
    %926 = vmatprep.mubr.bf16.mxu0 0
    %927 = vmatmul.mubr.bf16.gmra.mrb[0].mxu0 %v837
    %v928 = vpop.f32.mrb[0].mxu0
    %v929 = vadd.f32 %v377, %v928
    %v930 = vpop.f32.mrb[0].mxu0
    %v931 = vpop.f32.mrb[0].mxu0
    %v932 = vadd.f32 %v377, %v931
    %v933 = vpop.f32.mrb[0].mxu0
    %934 = vdwg.mxu0
    %v935 = vmax.f32 %v873, 0.0
    %v936 = vmax.f32 %v876, 0.0
    %v937 = vmax.f32 %v881, 0.0
    %v938 = vmax.f32 %v884, 0.0
    %v939 = vmax.f32 %v889, 0.0
    %v940 = vmax.f32 %v892, 0.0
    %v941 = vmax.f32 %v897, 0.0
    %v942 = vmax.f32 %v900, 0.0
    %v943 = vmax.f32 %v905, 0.0
    %v944 = vmax.f32 %v908, 0.0
    %v945 = vmax.f32 %v913, 0.0
    %v946 = vmax.f32 %v916, 0.0
    %v947 = vmax.f32 %v921, 0.0
    %v948 = vmax.f32 %v924, 0.0
    %v949 = vmax.f32 %v929, 0.0
    %v950 = vmax.f32 %v932, 0.0
    %v951 = vadd.f32 %v935, %v814
    %v952 = vadd.f32 %v936, %v815
    %v953 = vadd.f32 %v937, %v816
    %v954 = vadd.f32 %v938, %v817
    %v955 = vadd.f32 %v939, %v818
    %v956 = vadd.f32 %v940, %v819
    %v957 = vadd.f32 %v941, %v820
    %v958 = vadd.f32 %v942, %v821
    %v959 = vadd.f32 %v943, %v822
    %v960 = vadd.f32 %v944, %v823
    %v961 = vadd.f32 %v945, %v824
    %v962 = vadd.f32 %v946, %v825
    %v963 = vadd.f32 %v947, %v826
    %v964 = vadd.f32 %v948, %v827
    %v965 = vadd.f32 %v949, %v828
    %v966 = vadd.f32 %v950, %v829
    %v967 = vpack.c.bf16 %v952, %v951
    %v968 = vpack.c.bf16 %v954, %v953
    %v969 = vpack.c.bf16 %v956, %v955
    %v970 = vpack.c.bf16 %v958, %v957
    %v971 = vpack.c.bf16 %v960, %v959
    %v972 = vpack.c.bf16 %v962, %v961
    %v973 = vpack.c.bf16 %v964, %v963
    %v974 = vpack.c.bf16 %v966, %v965
    %975 = vmatprep.subr.bf16.mxu0 0
    %976 = vmatpush1.bf16.msra.mxu0 %v411
    %977 = vmatprep.subr.bf16.mxu0 0
    %978 = vmatpush1.bf16.msra.mxu0 %v412
    %979 = vmatprep.subr.bf16.mxu0 0
    %980 = vmatpush1.bf16.msra.mxu0 %v413
    %981 = vmatprep.subr.bf16.mxu0 0
    %982 = vmatpush1.bf16.msra.mxu0 %v414
    %983 = vmatprep.subr.bf16.mxu0 0
    %984 = vmatpush1.bf16.msra.mxu0 %v415
    %985 = vmatprep.subr.bf16.mxu0 0
    %986 = vmatpush1.bf16.msra.mxu0 %v416
    %987 = vmatprep.subr.bf16.mxu0 0
    %988 = vmatpush1.bf16.msra.mxu0 %v417
    %989 = vmatprep.subr.bf16.mxu0 0
    %990 = vmatpush1.bf16.msra.mxu0 %v418
    %991 = vmatprep.subr.bf16.mxu0 0
    %992 = vmatpush1.bf16.msra.mxu0 0
    %993 = vmatprep.subr.bf16.mxu0 0
    %994 = vmatpush1.bf16.msra.mxu0 0
    %995 = vmatprep.subr.bf16.mxu0 0
    %996 = vmatpush1.bf16.msra.mxu0 0
    %997 = vmatprep.subr.bf16.mxu0 0
    %998 = vmatpush1.bf16.msra.mxu0 0
    %999 = vmatprep.subr.bf16.mxu0 0
    %1000 = vmatpush1.bf16.msra.mxu0 0
    %1001 = vmatprep.subr.bf16.mxu0 0
    %1002 = vmatpush1.bf16.msra.mxu0 0
    %1003 = vmatprep.subr.bf16.mxu0 0
    %1004 = vmatpush1.bf16.msra.mxu0 0
    %1005 = vmatprep.subr.bf16.mxu0 0
    %1006 = vmatpush1.bf16.msra.mxu0 0
    %1007 = vmatprep.mubr.bf16.mxu0 0
    %1008 = vmatmul.mubr.bf16.gmra.mrb[0].mxu0 %v967
    %v1009 = vpop.f32.mrb[0].mxu0
    %v1010 = vadd.f32 %v377, %v1009
    %v1011 = vpop.f32.mrb[0].mxu0
    %v1012 = vpop.f32.mrb[0].mxu0
    %v1013 = vadd.f32 %v377, %v1012
    %v1014 = vpop.f32.mrb[0].mxu0
    %1015 = vmatprep.mubr.bf16.mxu0 0
    %1016 = vmatmul.mubr.bf16.gmra.mrb[0].mxu0 %v968
    %v1017 = vpop.f32.mrb[0].mxu0
    %v1018 = vadd.f32 %v377, %v1017
    %v1019 = vpop.f32.mrb[0].mxu0
    %v1020 = vpop.f32.mrb[0].mxu0
    %v1021 = vadd.f32 %v377, %v1020
    %v1022 = vpop.f32.mrb[0].mxu0
    %1023 = vmatprep.mubr.bf16.mxu0 0
    %1024 = vmatmul.mubr.bf16.gmra.mrb[0].mxu0 %v969
    %v1025 = vpop.f32.mrb[0].mxu0
    %v1026 = vadd.f32 %v377, %v1025
    %v1027 = vpop.f32.mrb[0].mxu0
    %v1028 = vpop.f32.mrb[0].mxu0
    %v1029 = vadd.f32 %v377, %v1028
    %v1030 = vpop.f32.mrb[0].mxu0
    %1031 = vmatprep.mubr.bf16.mxu0 0
    %1032 = vmatmul.mubr.bf16.gmra.mrb[0].mxu0 %v970
    %v1033 = vpop.f32.mrb[0].mxu0
    %v1034 = vadd.f32 %v377, %v1033
    %v1035 = vpop.f32.mrb[0].mxu0
    %v1036 = vpop.f32.mrb[0].mxu0
    %v1037 = vadd.f32 %v377, %v1036
    %v1038 = vpop.f32.mrb[0].mxu0
    %1039 = vmatprep.mubr.bf16.mxu0 0
    %1040 = vmatmul.mubr.bf16.gmra.mrb[0].mxu0 %v971
    %v1041 = vpop.f32.mrb[0].mxu0
    %v1042 = vadd.f32 %v377, %v1041
    %v1043 = vpop.f32.mrb[0].mxu0
    %v1044 = vpop.f32.mrb[0].mxu0
    %v1045 = vadd.f32 %v377, %v1044
    %v1046 = vpop.f32.mrb[0].mxu0
    %1047 = vmatprep.mubr.bf16.mxu0 0
    %1048 = vmatmul.mubr.bf16.gmra.mrb[0].mxu0 %v972
    %v1049 = vpop.f32.mrb[0].mxu0
    %v1050 = vadd.f32 %v377, %v1049
    %v1051 = vpop.f32.mrb[0].mxu0
    %v1052 = vpop.f32.mrb[0].mxu0
    %v1053 = vadd.f32 %v377, %v1052
    %v1054 = vpop.f32.mrb[0].mxu0
    %1055 = vmatprep.mubr.bf16.mxu0 0
    %1056 = vmatmul.mubr.bf16.gmra.mrb[0].mxu0 %v973
    %v1057 = vpop.f32.mrb[0].mxu0
    %v1058 = vadd.f32 %v377, %v1057
    %v1059 = vpop.f32.mrb[0].mxu0
    %v1060 = vpop.f32.mrb[0].mxu0
    %v1061 = vadd.f32 %v377, %v1060
    %v1062 = vpop.f32.mrb[0].mxu0
    %1063 = vmatprep.mubr.bf16.mxu0 0
    %1064 = vmatmul.mubr.bf16.gmra.mrb[0].mxu0 %v974
    %v1065 = vpop.f32.mrb[0].mxu0
    %v1066 = vadd.f32 %v377, %v1065
    %v1067 = vpop.f32.mrb[0].mxu0
    %v1068 = vpop.f32.mrb[0].mxu0
    %v1069 = vadd.f32 %v377, %v1068
    %v1070 = vpop.f32.mrb[0].mxu0
    %1071 = vdwg.mxu0
    %v1072 = vmax.f32 %v1010, 0.0
    %v1073 = vmax.f32 %v1013, 0.0
    %v1074 = vmax.f32 %v1018, 0.0
    %v1075 = vmax.f32 %v1021, 0.0
    %v1076 = vmax.f32 %v1026, 0.0
    %v1077 = vmax.f32 %v1029, 0.0
    %v1078 = vmax.f32 %v1034, 0.0
    %v1079 = vmax.f32 %v1037, 0.0
    %v1080 = vmax.f32 %v1042, 0.0
    %v1081 = vmax.f32 %v1045, 0.0
    %v1082 = vmax.f32 %v1050, 0.0
    %v1083 = vmax.f32 %v1053, 0.0
    %v1084 = vmax.f32 %v1058, 0.0
    %v1085 = vmax.f32 %v1061, 0.0
    %v1086 = vmax.f32 %v1066, 0.0
    %v1087 = vmax.f32 %v1069, 0.0
    %v1088 = vadd.f32 %v1072, %v951
    %v1089 = vadd.f32 %v1073, %v952
    %v1090 = vadd.f32 %v1074, %v953
    %v1091 = vadd.f32 %v1075, %v954
    %v1092 = vadd.f32 %v1076, %v955
    %v1093 = vadd.f32 %v1077, %v956
    %v1094 = vadd.f32 %v1078, %v957
    %v1095 = vadd.f32 %v1079, %v958
    %v1096 = vadd.f32 %v1080, %v959
    %v1097 = vadd.f32 %v1081, %v960
    %v1098 = vadd.f32 %v1082, %v961
    %v1099 = vadd.f32 %v1083, %v962
    %v1100 = vadd.f32 %v1084, %v963
    %v1101 = vadd.f32 %v1085, %v964
    %v1102 = vadd.f32 %v1086, %v965
    %v1103 = vadd.f32 %v1087, %v966
    %v1104 = vpack.c.bf16 %v1089, %v1088
    %v1105 = vpack.c.bf16 %v1091, %v1090
    %v1106 = vpack.c.bf16 %v1093, %v1092
    %v1107 = vpack.c.bf16 %v1095, %v1094
    %v1108 = vpack.c.bf16 %v1097, %v1096
    %v1109 = vpack.c.bf16 %v1099, %v1098
    %v1110 = vpack.c.bf16 %v1101, %v1100
    %v1111 = vpack.c.bf16 %v1103, %v1102
    %1112 = vmatprep.subr.bf16.mxu0 0
    %1113 = vmatpush1.bf16.msra.mxu0 %v411
    %1114 = vmatprep.subr.bf16.mxu0 0
    %1115 = vmatpush1.bf16.msra.mxu0 %v412
    %1116 = vmatprep.subr.bf16.mxu0 0
    %1117 = vmatpush1.bf16.msra.mxu0 %v413
    %1118 = vmatprep.subr.bf16.mxu0 0
    %1119 = vmatpush1.bf16.msra.mxu0 %v414
    %1120 = vmatprep.subr.bf16.mxu0 0
    %1121 = vmatpush1.bf16.msra.mxu0 %v415
    %1122 = vmatprep.subr.bf16.mxu0 0
    %1123 = vmatpush1.bf16.msra.mxu0 %v416
    %1124 = vmatprep.subr.bf16.mxu0 0
    %1125 = vmatpush1.bf16.msra.mxu0 %v417
    %1126 = vmatprep.subr.bf16.mxu0 0
    %1127 = vmatpush1.bf16.msra.mxu0 %v418
    %1128 = vmatprep.subr.bf16.mxu0 0
    %1129 = vmatpush1.bf16.msra.mxu0 0
    %1130 = vmatprep.subr.bf16.mxu0 0
    %1131 = vmatpush1.bf16.msra.mxu0 0
    %1132 = vmatprep.subr.bf16.mxu0 0
    %1133 = vmatpush1.bf16.msra.mxu0 0
    %1134 = vmatprep.subr.bf16.mxu0 0
    %1135 = vmatpush1.bf16.msra.mxu0 0
    %1136 = vmatprep.subr.bf16.mxu0 0
    %1137 = vmatpush1.bf16.msra.mxu0 0
    %1138 = vmatprep.subr.bf16.mxu0 0
    %1139 = vmatpush1.bf16.msra.mxu0 0
    %1140 = vmatprep.subr.bf16.mxu0 0
    %1141 = vmatpush1.bf16.msra.mxu0 0
    %1142 = vmatprep.subr.bf16.mxu0 0
    %1143 = vmatpush1.bf16.msra.mxu0 0
    %1144 = vmatprep.mubr.bf16.mxu0 0
    %1145 = vmatmul.mubr.bf16.gmra.mrb[0].mxu0 %v1104
    %v1146 = vpop.f32.mrb[0].mxu0
    %v1147 = vadd.f32 %v377, %v1146
    %v1148 = vpop.f32.mrb[0].mxu0
    %v1149 = vpop.f32.mrb[0].mxu0
    %v1150 = vadd.f32 %v377, %v1149
    %v1151 = vpop.f32.mrb[0].mxu0
    %1152 = vmatprep.mubr.bf16.mxu0 0
    %1153 = vmatmul.mubr.bf16.gmra.mrb[0].mxu0 %v1105
    %v1154 = vpop.f32.mrb[0].mxu0
    %v1155 = vadd.f32 %v377, %v1154
    %v1156 = vpop.f32.mrb[0].mxu0
    %v1157 = vpop.f32.mrb[0].mxu0
    %v1158 = vadd.f32 %v377, %v1157
    %v1159 = vpop.f32.mrb[0].mxu0
    %1160 = vmatprep.mubr.bf16.mxu0 0
    %1161 = vmatmul.mubr.bf16.gmra.mrb[0].mxu0 %v1106
    %v1162 = vpop.f32.mrb[0].mxu0
    %v1163 = vadd.f32 %v377, %v1162
    %v1164 = vpop.f32.mrb[0].mxu0
    %v1165 = vpop.f32.mrb[0].mxu0
    %v1166 = vadd.f32 %v377, %v1165
    %v1167 = vpop.f32.mrb[0].mxu0
    %1168 = vmatprep.mubr.bf16.mxu0 0
    %1169 = vmatmul.mubr.bf16.gmra.mrb[0].mxu0 %v1107
    %v1170 = vpop.f32.mrb[0].mxu0
    %v1171 = vadd.f32 %v377, %v1170
    %v1172 = vpop.f32.mrb[0].mxu0
    %v1173 = vpop.f32.mrb[0].mxu0
    %v1174 = vadd.f32 %v377, %v1173
    %v1175 = vpop.f32.mrb[0].mxu0
    %1176 = vmatprep.mubr.bf16.mxu0 0
    %1177 = vmatmul.mubr.bf16.gmra.mrb[0].mxu0 %v1108
    %v1178 = vpop.f32.mrb[0].mxu0
    %v1179 = vadd.f32 %v377, %v1178
    %v1180 = vpop.f32.mrb[0].mxu0
    %v1181 = vpop.f32.mrb[0].mxu0
    %v1182 = vadd.f32 %v377, %v1181
    %v1183 = vpop.f32.mrb[0].mxu0
    %1184 = vmatprep.mubr.bf16.mxu0 0
    %1185 = vmatmul.mubr.bf16.gmra.mrb[0].mxu0 %v1109
    %v1186 = vpop.f32.mrb[0].mxu0
    %v1187 = vadd.f32 %v377, %v1186
    %v1188 = vpop.f32.mrb[0].mxu0
    %v1189 = vpop.f32.mrb[0].mxu0
    %v1190 = vadd.f32 %v377, %v1189
    %v1191 = vpop.f32.mrb[0].mxu0
    %1192 = vmatprep.mubr.bf16.mxu0 0
    %1193 = vmatmul.mubr.bf16.gmra.mrb[0].mxu0 %v1110
    %v1194 = vpop.f32.mrb[0].mxu0
    %v1195 = vadd.f32 %v377, %v1194
    %v1196 = vpop.f32.mrb[0].mxu0
    %v1197 = vpop.f32.mrb[0].mxu0
    %v1198 = vadd.f32 %v377, %v1197
    %v1199 = vpop.f32.mrb[0].mxu0
    %1200 = vmatprep.mubr.bf16.mxu0 0
    %1201 = vmatmul.mubr.bf16.gmra.mrb[0].mxu0 %v1111
    %v1202 = vpop.f32.mrb[0].mxu0
    %v1203 = vadd.f32 %v377, %v1202
    %v1204 = vpop.f32.mrb[0].mxu0
    %v1205 = vpop.f32.mrb[0].mxu0
    %v1206 = vadd.f32 %v377, %v1205
    %v1207 = vpop.f32.mrb[0].mxu0
    %1208 = vdwg.mxu0
    %v1209 = vmax.f32 %v1147, 0.0
    %v1210 = vmax.f32 %v1150, 0.0
    %v1211 = vmax.f32 %v1155, 0.0
    %v1212 = vmax.f32 %v1158, 0.0
    %v1213 = vmax.f32 %v1163, 0.0
    %v1214 = vmax.f32 %v1166, 0.0
    %v1215 = vmax.f32 %v1171, 0.0
    %v1216 = vmax.f32 %v1174, 0.0
    %v1217 = vmax.f32 %v1179, 0.0
    %v1218 = vmax.f32 %v1182, 0.0
    %v1219 = vmax.f32 %v1187, 0.0
    %v1220 = vmax.f32 %v1190, 0.0
    %v1221 = vmax.f32 %v1195, 0.0
    %v1222 = vmax.f32 %v1198, 0.0
    %v1223 = vmax.f32 %v1203, 0.0
    %v1224 = vmax.f32 %v1206, 0.0
    %v1225 = vadd.f32 %v1209, %v1088
    %v1226 = vadd.f32 %v1210, %v1089
    %v1227 = vadd.f32 %v1211, %v1090
    %v1228 = vadd.f32 %v1212, %v1091
    %v1229 = vadd.f32 %v1213, %v1092
    %v1230 = vadd.f32 %v1214, %v1093
    %v1231 = vadd.f32 %v1215, %v1094
    %v1232 = vadd.f32 %v1216, %v1095
    %v1233 = vadd.f32 %v1217, %v1096
    %v1234 = vadd.f32 %v1218, %v1097
    %v1235 = vadd.f32 %v1219, %v1098
    %v1236 = vadd.f32 %v1220, %v1099
    %v1237 = vadd.f32 %v1221, %v1100
    %v1238 = vadd.f32 %v1222, %v1101
    %v1239 = vadd.f32 %v1223, %v1102
    %v1240 = vadd.f32 %v1224, %v1103
    %v1241 = vpack.c.bf16 %v1226, %v1225
    %v1242 = vpack.c.bf16 %v1228, %v1227
    %v1243 = vpack.c.bf16 %v1230, %v1229
    %v1244 = vpack.c.bf16 %v1232, %v1231
    %v1245 = vpack.c.bf16 %v1234, %v1233
    %v1246 = vpack.c.bf16 %v1236, %v1235
    %v1247 = vpack.c.bf16 %v1238, %v1237
    %v1248 = vpack.c.bf16 %v1240, %v1239
    %1249 = vmatprep.subr.bf16.mxu0 0
    %1250 = vmatpush1.bf16.msra.mxu0 %v411
    %1251 = vmatprep.subr.bf16.mxu0 0
    %1252 = vmatpush1.bf16.msra.mxu0 %v412
    %1253 = vmatprep.subr.bf16.mxu0 0
    %1254 = vmatpush1.bf16.msra.mxu0 %v413
    %1255 = vmatprep.subr.bf16.mxu0 0
    %1256 = vmatpush1.bf16.msra.mxu0 %v414
    %1257 = vmatprep.subr.bf16.mxu0 0
    %1258 = vmatpush1.bf16.msra.mxu0 %v415
    %1259 = vmatprep.subr.bf16.mxu0 0
    %1260 = vmatpush1.bf16.msra.mxu0 %v416
    %1261 = vmatprep.subr.bf16.mxu0 0
    %1262 = vmatpush1.bf16.msra.mxu0 %v417
    %1263 = vmatprep.subr.bf16.mxu0 0
    %1264 = vmatpush1.bf16.msra.mxu0 %v418
    %1265 = vmatprep.subr.bf16.mxu0 0
    %1266 = vmatpush1.bf16.msra.mxu0 0
    %1267 = vmatprep.subr.bf16.mxu0 0
    %1268 = vmatpush1.bf16.msra.mxu0 0
    %1269 = vmatprep.subr.bf16.mxu0 0
    %1270 = vmatpush1.bf16.msra.mxu0 0
    %1271 = vmatprep.subr.bf16.mxu0 0
    %1272 = vmatpush1.bf16.msra.mxu0 0
    %1273 = vmatprep.subr.bf16.mxu0 0
    %1274 = vmatpush1.bf16.msra.mxu0 0
    %1275 = vmatprep.subr.bf16.mxu0 0
    %1276 = vmatpush1.bf16.msra.mxu0 0
    %1277 = vmatprep.subr.bf16.mxu0 0
    %1278 = vmatpush1.bf16.msra.mxu0 0
    %1279 = vmatprep.subr.bf16.mxu0 0
    %1280 = vmatpush1.bf16.msra.mxu0 0
    %1281 = vmatprep.mubr.bf16.mxu0 0
    %1282 = vmatmul.mubr.bf16.gmra.mrb[0].mxu0 %v1241
    %v1283 = vpop.f32.mrb[0].mxu0
    %v1284 = vadd.f32 %v377, %v1283
    %v1285 = vpop.f32.mrb[0].mxu0
    %v1286 = vpop.f32.mrb[0].mxu0
    %v1287 = vadd.f32 %v377, %v1286
    %v1288 = vpop.f32.mrb[0].mxu0
    %1289 = vmatprep.mubr.bf16.mxu0 0
    %1290 = vmatmul.mubr.bf16.gmra.mrb[0].mxu0 %v1242
    %v1291 = vpop.f32.mrb[0].mxu0
    %v1292 = vadd.f32 %v377, %v1291
    %v1293 = vpop.f32.mrb[0].mxu0
    %v1294 = vpop.f32.mrb[0].mxu0
    %v1295 = vadd.f32 %v377, %v1294
    %v1296 = vpop.f32.mrb[0].mxu0
    %1297 = vmatprep.mubr.bf16.mxu0 0
    %1298 = vmatmul.mubr.bf16.gmra.mrb[0].mxu0 %v1243
    %v1299 = vpop.f32.mrb[0].mxu0
    %v1300 = vadd.f32 %v377, %v1299
    %v1301 = vpop.f32.mrb[0].mxu0
    %v1302 = vpop.f32.mrb[0].mxu0
    %v1303 = vadd.f32 %v377, %v1302
    %v1304 = vpop.f32.mrb[0].mxu0
    %1305 = vmatprep.mubr.bf16.mxu0 0
    %1306 = vmatmul.mubr.bf16.gmra.mrb[0].mxu0 %v1244
    %v1307 = vpop.f32.mrb[0].mxu0
    %v1308 = vadd.f32 %v377, %v1307
    %v1309 = vpop.f32.mrb[0].mxu0
    %v1310 = vpop.f32.mrb[0].mxu0
    %v1311 = vadd.f32 %v377, %v1310
    %v1312 = vpop.f32.mrb[0].mxu0
    %1313 = vmatprep.mubr.bf16.mxu0 0
    %1314 = vmatmul.mubr.bf16.gmra.mrb[0].mxu0 %v1245
    %v1315 = vpop.f32.mrb[0].mxu0
    %v1316 = vadd.f32 %v377, %v1315
    %v1317 = vpop.f32.mrb[0].mxu0
    %v1318 = vpop.f32.mrb[0].mxu0
    %v1319 = vadd.f32 %v377, %v1318
    %v1320 = vpop.f32.mrb[0].mxu0
    %1321 = vmatprep.mubr.bf16.mxu0 0
    %1322 = vmatmul.mubr.bf16.gmra.mrb[0].mxu0 %v1246
    %v1323 = vpop.f32.mrb[0].mxu0
    %v1324 = vadd.f32 %v377, %v1323
    %v1325 = vpop.f32.mrb[0].mxu0
    %v1326 = vpop.f32.mrb[0].mxu0
    %v1327 = vadd.f32 %v377, %v1326
    %v1328 = vpop.f32.mrb[0].mxu0
    %1329 = vmatprep.mubr.bf16.mxu0 0
    %1330 = vmatmul.mubr.bf16.gmra.mrb[0].mxu0 %v1247
    %v1331 = vpop.f32.mrb[0].mxu0
    %v1332 = vadd.f32 %v377, %v1331
    %v1333 = vpop.f32.mrb[0].mxu0
    %v1334 = vpop.f32.mrb[0].mxu0
    %v1335 = vadd.f32 %v377, %v1334
    %v1336 = vpop.f32.mrb[0].mxu0
    %1337 = vmatprep.mubr.bf16.mxu0 0
    %1338 = vmatmul.mubr.bf16.gmra.mrb[0].mxu0 %v1248
    %v1339 = vpop.f32.mrb[0].mxu0
    %v1340 = vadd.f32 %v377, %v1339
    %v1341 = vpop.f32.mrb[0].mxu0
    %v1342 = vpop.f32.mrb[0].mxu0
    %v1343 = vadd.f32 %v377, %v1342
    %v1344 = vpop.f32.mrb[0].mxu0
    %1345 = vdwg.mxu0
    %v1346 = vmax.f32 %v1284, 0.0
    %v1347 = vmax.f32 %v1287, 0.0
    %v1348 = vmax.f32 %v1292, 0.0
    %v1349 = vmax.f32 %v1295, 0.0
    %v1350 = vmax.f32 %v1300, 0.0
    %v1351 = vmax.f32 %v1303, 0.0
    %v1352 = vmax.f32 %v1308, 0.0
    %v1353 = vmax.f32 %v1311, 0.0
    %v1354 = vmax.f32 %v1316, 0.0
    %v1355 = vmax.f32 %v1319, 0.0
    %v1356 = vmax.f32 %v1324, 0.0
    %v1357 = vmax.f32 %v1327, 0.0
    %v1358 = vmax.f32 %v1332, 0.0
    %v1359 = vmax.f32 %v1335, 0.0
    %v1360 = vmax.f32 %v1340, 0.0
    %v1361 = vmax.f32 %v1343, 0.0
    %v1362 = vadd.f32 %v1346, %v1225
    %v1363 = vadd.f32 %v1347, %v1226
    %v1364 = vadd.f32 %v1348, %v1227
    %v1365 = vadd.f32 %v1349, %v1228
    %v1366 = vadd.f32 %v1350, %v1229
    %v1367 = vadd.f32 %v1351, %v1230
    %v1368 = vadd.f32 %v1352, %v1231
    %v1369 = vadd.f32 %v1353, %v1232
    %v1370 = vadd.f32 %v1354, %v1233
    %v1371 = vadd.f32 %v1355, %v1234
    %v1372 = vadd.f32 %v1356, %v1235
    %v1373 = vadd.f32 %v1357, %v1236
    %v1374 = vadd.f32 %v1358, %v1237
    %v1375 = vadd.f32 %v1359, %v1238
    %v1376 = vadd.f32 %v1360, %v1239
    %v1377 = vadd.f32 %v1361, %v1240
    %v1378 = vpack.c.bf16 %v1363, %v1362
    %v1379 = vpack.c.bf16 %v1365, %v1364
    %v1380 = vpack.c.bf16 %v1367, %v1366
    %v1381 = vpack.c.bf16 %v1369, %v1368
    %v1382 = vpack.c.bf16 %v1371, %v1370
    %v1383 = vpack.c.bf16 %v1373, %v1372
    %v1384 = vpack.c.bf16 %v1375, %v1374
    %v1385 = vpack.c.bf16 %v1377, %v1376
    %1386 = vmatprep.subr.bf16.mxu0 0
    %1387 = vmatpush1.bf16.msra.mxu0 %v411
    %1388 = vmatprep.subr.bf16.mxu0 0
    %1389 = vmatpush1.bf16.msra.mxu0 %v412
    %1390 = vmatprep.subr.bf16.mxu0 0
    %1391 = vmatpush1.bf16.msra.mxu0 %v413
    %1392 = vmatprep.subr.bf16.mxu0 0
    %1393 = vmatpush1.bf16.msra.mxu0 %v414
    %1394 = vmatprep.subr.bf16.mxu0 0
    %1395 = vmatpush1.bf16.msra.mxu0 %v415
    %1396 = vmatprep.subr.bf16.mxu0 0
    %1397 = vmatpush1.bf16.msra.mxu0 %v416
    %1398 = vmatprep.subr.bf16.mxu0 0
    %1399 = vmatpush1.bf16.msra.mxu0 %v417
    %1400 = vmatprep.subr.bf16.mxu0 0
    %1401 = vmatpush1.bf16.msra.mxu0 %v418
    %1402 = vmatprep.subr.bf16.mxu0 0
    %1403 = vmatpush1.bf16.msra.mxu0 0
    %1404 = vmatprep.subr.bf16.mxu0 0
    %1405 = vmatpush1.bf16.msra.mxu0 0
    %1406 = vmatprep.subr.bf16.mxu0 0
    %1407 = vmatpush1.bf16.msra.mxu0 0
    %1408 = vmatprep.subr.bf16.mxu0 0
    %1409 = vmatpush1.bf16.msra.mxu0 0
    %1410 = vmatprep.subr.bf16.mxu0 0
    %1411 = vmatpush1.bf16.msra.mxu0 0
    %1412 = vmatprep.subr.bf16.mxu0 0
    %1413 = vmatpush1.bf16.msra.mxu0 0
    %1414 = vmatprep.subr.bf16.mxu0 0
    %1415 = vmatpush1.bf16.msra.mxu0 0
    %1416 = vmatprep.subr.bf16.mxu0 0
    %1417 = vmatpush1.bf16.msra.mxu0 0
    %1418 = vmatprep.mubr.bf16.mxu0 0
    %1419 = vmatmul.mubr.bf16.gmra.mrb[0].mxu0 %v1378
    %v1420 = vpop.f32.mrb[0].mxu0
    %v1421 = vadd.f32 %v377, %v1420
    %v1422 = vpop.f32.mrb[0].mxu0
    %v1423 = vpop.f32.mrb[0].mxu0
    %v1424 = vadd.f32 %v377, %v1423
    %v1425 = vpop.f32.mrb[0].mxu0
    %1426 = vmatprep.mubr.bf16.mxu0 0
    %1427 = vmatmul.mubr.bf16.gmra.mrb[0].mxu0 %v1379
    %v1428 = vpop.f32.mrb[0].mxu0
    %v1429 = vadd.f32 %v377, %v1428
    %v1430 = vpop.f32.mrb[0].mxu0
    %v1431 = vpop.f32.mrb[0].mxu0
    %v1432 = vadd.f32 %v377, %v1431
    %v1433 = vpop.f32.mrb[0].mxu0
    %1434 = vmatprep.mubr.bf16.mxu0 0
    %1435 = vmatmul.mubr.bf16.gmra.mrb[0].mxu0 %v1380
    %v1436 = vpop.f32.mrb[0].mxu0
    %v1437 = vadd.f32 %v377, %v1436
    %v1438 = vpop.f32.mrb[0].mxu0
    %v1439 = vpop.f32.mrb[0].mxu0
    %v1440 = vadd.f32 %v377, %v1439
    %v1441 = vpop.f32.mrb[0].mxu0
    %1442 = vmatprep.mubr.bf16.mxu0 0
    %1443 = vmatmul.mubr.bf16.gmra.mrb[0].mxu0 %v1381
    %v1444 = vpop.f32.mrb[0].mxu0
    %v1445 = vadd.f32 %v377, %v1444
    %v1446 = vpop.f32.mrb[0].mxu0
    %v1447 = vpop.f32.mrb[0].mxu0
    %v1448 = vadd.f32 %v377, %v1447
    %v1449 = vpop.f32.mrb[0].mxu0
    %1450 = vmatprep.mubr.bf16.mxu0 0
    %1451 = vmatmul.mubr.bf16.gmra.mrb[0].mxu0 %v1382
    %v1452 = vpop.f32.mrb[0].mxu0
    %v1453 = vadd.f32 %v377, %v1452
    %v1454 = vpop.f32.mrb[0].mxu0
    %v1455 = vpop.f32.mrb[0].mxu0
    %v1456 = vadd.f32 %v377, %v1455
    %v1457 = vpop.f32.mrb[0].mxu0
    %1458 = vmatprep.mubr.bf16.mxu0 0
    %1459 = vmatmul.mubr.bf16.gmra.mrb[0].mxu0 %v1383
    %v1460 = vpop.f32.mrb[0].mxu0
    %v1461 = vadd.f32 %v377, %v1460
    %v1462 = vpop.f32.mrb[0].mxu0
    %v1463 = vpop.f32.mrb[0].mxu0
    %v1464 = vadd.f32 %v377, %v1463
    %v1465 = vpop.f32.mrb[0].mxu0
    %1466 = vmatprep.mubr.bf16.mxu0 0
    %1467 = vmatmul.mubr.bf16.gmra.mrb[0].mxu0 %v1384
    %v1468 = vpop.f32.mrb[0].mxu0
    %v1469 = vadd.f32 %v377, %v1468
    %v1470 = vpop.f32.mrb[0].mxu0
    %v1471 = vpop.f32.mrb[0].mxu0
    %v1472 = vadd.f32 %v377, %v1471
    %v1473 = vpop.f32.mrb[0].mxu0
    %1474 = vmatprep.mubr.bf16.mxu0 0
    %1475 = vmatmul.mubr.bf16.gmra.mrb[0].mxu0 %v1385
    %v1476 = vpop.f32.mrb[0].mxu0
    %v1477 = vadd.f32 %v377, %v1476
    %v1478 = vpop.f32.mrb[0].mxu0
    %v1479 = vpop.f32.mrb[0].mxu0
    %v1480 = vadd.f32 %v377, %v1479
    %v1481 = vpop.f32.mrb[0].mxu0
    %1482 = vdwg.mxu0
    %v1483 = vmax.f32 %v1421, 0.0
    %v1484 = vmax.f32 %v1424, 0.0
    %v1485 = vmax.f32 %v1429, 0.0
    %v1486 = vmax.f32 %v1432, 0.0
    %v1487 = vmax.f32 %v1437, 0.0
    %v1488 = vmax.f32 %v1440, 0.0
    %v1489 = vmax.f32 %v1445, 0.0
    %v1490 = vmax.f32 %v1448, 0.0
    %v1491 = vmax.f32 %v1453, 0.0
    %v1492 = vmax.f32 %v1456, 0.0
    %v1493 = vmax.f32 %v1461, 0.0
    %v1494 = vmax.f32 %v1464, 0.0
    %v1495 = vmax.f32 %v1469, 0.0
    %v1496 = vmax.f32 %v1472, 0.0
    %v1497 = vmax.f32 %v1477, 0.0
    %v1498 = vmax.f32 %v1480, 0.0
    %v1499 = vadd.f32 %v1483, %v1362
    %v1500 = vadd.f32 %v1484, %v1363
    %v1501 = vadd.f32 %v1485, %v1364
    %v1502 = vadd.f32 %v1486, %v1365
    %v1503 = vadd.f32 %v1487, %v1366
    %v1504 = vadd.f32 %v1488, %v1367
    %v1505 = vadd.f32 %v1489, %v1368
    %v1506 = vadd.f32 %v1490, %v1369
    %v1507 = vadd.f32 %v1491, %v1370
    %v1508 = vadd.f32 %v1492, %v1371
    %v1509 = vadd.f32 %v1493, %v1372
    %v1510 = vadd.f32 %v1494, %v1373
    %v1511 = vadd.f32 %v1495, %v1374
    %v1512 = vadd.f32 %v1496, %v1375
    %v1513 = vadd.f32 %v1497, %v1376
    %v1514 = vadd.f32 %v1498, %v1377
    %v1515 = vpack.c.bf16 %v1500, %v1499
    %v1516 = vpack.c.bf16 %v1502, %v1501
    %v1517 = vpack.c.bf16 %v1504, %v1503
    %v1518 = vpack.c.bf16 %v1506, %v1505
    %v1519 = vpack.c.bf16 %v1508, %v1507
    %v1520 = vpack.c.bf16 %v1510, %v1509
    %v1521 = vpack.c.bf16 %v1512, %v1511
    %v1522 = vpack.c.bf16 %v1514, %v1513
    %v1524 = vlaneseq
    %v1525 = vshrl.u32 %v1524, 7
    %v1526 = vsub.s32 0, %v1525
    %v1527 = vrot.slane %v149, %v1526
    %v1545 = vunpack.c.l.b16 %v131
    %v1546 = vunpack.c.l.b16 %v132
    %v1547 = vunpack.c.l.b16 %v133
    %v1548 = vunpack.c.l.b16 %v134
    %v1549 = vunpack.c.l.b16 %v135
    %v1550 = vunpack.c.l.b16 %v136
    %v1551 = vunpack.c.l.b16 %v137
    %v1552 = vunpack.c.l.b16 %v138
    %v1553 = vunpack.c.l.b16 %v139
    %v1554 = vunpack.c.l.b16 %v140
    %v1555 = vunpack.c.l.b16 %v141
    %v1556 = vunpack.c.l.b16 %v142
    %v1557 = vunpack.c.l.b16 %v143
    %v1558 = vunpack.c.l.b16 %v144
    %v1559 = vunpack.c.l.b16 %v145
    %v1560 = vunpack.c.l.b16 %v146
    %v1561 = vpack.c.b16 %v1546, %v1545
    %v1562 = vpack.c.b16 %v1548, %v1547
    %v1563 = vpack.c.b16 %v1550, %v1549
    %v1564 = vpack.c.b16 %v1552, %v1551
    %v1565 = vpack.c.b16 %v1554, %v1553
    %v1566 = vpack.c.b16 %v1556, %v1555
    %v1567 = vpack.c.b16 %v1558, %v1557
    %v1568 = vpack.c.b16 %v1560, %v1559
    %1577 = vmatprep.subr.bf16.mxu0 0
    %1578 = vmatpush1.bf16.msra.mxu0 %v1561
    %1579 = vmatprep.subr.bf16.mxu0 0
    %1580 = vmatpush1.bf16.msra.mxu0 %v1562
    %1581 = vmatprep.subr.bf16.mxu0 0
    %1582 = vmatpush1.bf16.msra.mxu0 %v1563
    %1583 = vmatprep.subr.bf16.mxu0 0
    %1584 = vmatpush1.bf16.msra.mxu0 %v1564
    %1585 = vmatprep.subr.bf16.mxu0 0
    %1586 = vmatpush1.bf16.msra.mxu0 %v1565
    %1587 = vmatprep.subr.bf16.mxu0 0
    %1588 = vmatpush1.bf16.msra.mxu0 %v1566
    %1589 = vmatprep.subr.bf16.mxu0 0
    %1590 = vmatpush1.bf16.msra.mxu0 %v1567
    %1591 = vmatprep.subr.bf16.mxu0 0
    %1592 = vmatpush1.bf16.msra.mxu0 %v1568
    %1593 = vmatprep.subr.bf16.mxu0 0
    %1594 = vmatpush1.bf16.msra.mxu0 0
    %1595 = vmatprep.subr.bf16.mxu0 0
    %1596 = vmatpush1.bf16.msra.mxu0 0
    %1597 = vmatprep.subr.bf16.mxu0 0
    %1598 = vmatpush1.bf16.msra.mxu0 0
    %1599 = vmatprep.subr.bf16.mxu0 0
    %1600 = vmatpush1.bf16.msra.mxu0 0
    %1601 = vmatprep.subr.bf16.mxu0 0
    %1602 = vmatpush1.bf16.msra.mxu0 0
    %1603 = vmatprep.subr.bf16.mxu0 0
    %1604 = vmatpush1.bf16.msra.mxu0 0
    %1605 = vmatprep.subr.bf16.mxu0 0
    %1606 = vmatpush1.bf16.msra.mxu0 0
    %1607 = vmatprep.subr.bf16.mxu0 0
    %1608 = vmatpush1.bf16.msra.mxu0 0
    %1609 = vmatprep.mubr.bf16.mxu0 0
    %1610 = vmatmul.mubr.bf16.gmra.mrb[0].mxu0 %v1515
    %v1611 = vpop.f32.mrb[0].mxu0
    %v1612 = vadd.f32 %v1527, %v1611
    %v1613 = vpop.f32.mrb[0].mxu0
    %v1614 = vpop.f32.mrb[0].mxu0
    %v1615 = vadd.f32 %v1527, %v1614
    %v1616 = vpop.f32.mrb[0].mxu0
    %1617 = vmatprep.mubr.bf16.mxu0 0
    %1618 = vmatmul.mubr.bf16.gmra.mrb[0].mxu0 %v1516
    %v1619 = vpop.f32.mrb[0].mxu0
    %v1620 = vadd.f32 %v1527, %v1619
    %v1621 = vpop.f32.mrb[0].mxu0
    %v1622 = vpop.f32.mrb[0].mxu0
    %v1623 = vadd.f32 %v1527, %v1622
    %v1624 = vpop.f32.mrb[0].mxu0
    %1625 = vmatprep.mubr.bf16.mxu0 0
    %1626 = vmatmul.mubr.bf16.gmra.mrb[0].mxu0 %v1517
    %v1627 = vpop.f32.mrb[0].mxu0
    %v1628 = vadd.f32 %v1527, %v1627
    %v1629 = vpop.f32.mrb[0].mxu0
    %v1630 = vpop.f32.mrb[0].mxu0
    %v1631 = vadd.f32 %v1527, %v1630
    %v1632 = vpop.f32.mrb[0].mxu0
    %1633 = vmatprep.mubr.bf16.mxu0 0
    %1634 = vmatmul.mubr.bf16.gmra.mrb[0].mxu0 %v1518
    %v1635 = vpop.f32.mrb[0].mxu0
    %v1636 = vadd.f32 %v1527, %v1635
    %v1637 = vpop.f32.mrb[0].mxu0
    %v1638 = vpop.f32.mrb[0].mxu0
    %v1639 = vadd.f32 %v1527, %v1638
    %v1640 = vpop.f32.mrb[0].mxu0
    %1641 = vmatprep.mubr.bf16.mxu0 0
    %1642 = vmatmul.mubr.bf16.gmra.mrb[0].mxu0 %v1519
    %v1643 = vpop.f32.mrb[0].mxu0
    %v1644 = vadd.f32 %v1527, %v1643
    %v1645 = vpop.f32.mrb[0].mxu0
    %v1646 = vpop.f32.mrb[0].mxu0
    %v1647 = vadd.f32 %v1527, %v1646
    %v1648 = vpop.f32.mrb[0].mxu0
    %1649 = vmatprep.mubr.bf16.mxu0 0
    %1650 = vmatmul.mubr.bf16.gmra.mrb[0].mxu0 %v1520
    %v1651 = vpop.f32.mrb[0].mxu0
    %v1652 = vadd.f32 %v1527, %v1651
    %v1653 = vpop.f32.mrb[0].mxu0
    %v1654 = vpop.f32.mrb[0].mxu0
    %v1655 = vadd.f32 %v1527, %v1654
    %v1656 = vpop.f32.mrb[0].mxu0
    %1657 = vmatprep.mubr.bf16.mxu0 0
    %1658 = vmatmul.mubr.bf16.gmra.mrb[0].mxu0 %v1521
    %v1659 = vpop.f32.mrb[0].mxu0
    %v1660 = vadd.f32 %v1527, %v1659
    %v1661 = vpop.f32.mrb[0].mxu0
    %v1662 = vpop.f32.mrb[0].mxu0
    %v1663 = vadd.f32 %v1527, %v1662
    %v1664 = vpop.f32.mrb[0].mxu0
    %1665 = vmatprep.mubr.bf16.mxu0 0
    %1666 = vmatmul.mubr.bf16.gmra.mrb[0].mxu0 %v1522
    %v1667 = vpop.f32.mrb[0].mxu0
    %v1668 = vadd.f32 %v1527, %v1667
    %v1669 = vpop.f32.mrb[0].mxu0
    %v1670 = vpop.f32.mrb[0].mxu0
    %v1671 = vadd.f32 %v1527, %v1670
    %v1672 = vpop.f32.mrb[0].mxu0
    %1673 = vdwg.mxu0
    %v1674 = vlaneseq
    %v1675 = vand.u32 %v1674, 127
    %vm1676 = vcmp.lt.s32.totalorder %v1675, 8
    %v1677 = vsel %vm1676, %v1612, -1e+30
    %v1678 = vsel %vm1676, %v1615, -1e+30
    %v1679 = vsel %vm1676, %v1620, -1e+30
    %v1680 = vsel %vm1676, %v1623, -1e+30
    %v1681 = vsel %vm1676, %v1628, -1e+30
    %v1682 = vsel %vm1676, %v1631, -1e+30
    %v1683 = vsel %vm1676, %v1636, -1e+30
    %v1684 = vsel %vm1676, %v1639, -1e+30
    %v1685 = vsel %vm1676, %v1644, -1e+30
    %v1686 = vsel %vm1676, %v1647, -1e+30
    %v1687 = vsel %vm1676, %v1652, -1e+30
    %v1688 = vsel %vm1676, %v1655, -1e+30
    %v1689 = vsel %vm1676, %v1660, -1e+30
    %v1690 = vsel %vm1676, %v1663, -1e+30
    %v1691 = vsel %vm1676, %v1668, -1e+30
    %v1692 = vsel %vm1676, %v1671, -1e+30
    %1693 = vmax.xlane.f32.xlu0 %v1677
    %v1694 = vpop.xlane.xlu0 %1693
    %1695 = vmax.xlane.f32.xlu0 %v1678
    %v1696 = vpop.xlane.xlu0 %1695
    %1697 = vmax.xlane.f32.xlu0 %v1679
    %v1698 = vpop.xlane.xlu0 %1697
    %1699 = vmax.xlane.f32.xlu0 %v1680
    %v1700 = vpop.xlane.xlu0 %1699
    %1701 = vmax.xlane.f32.xlu0 %v1681
    %v1702 = vpop.xlane.xlu0 %1701
    %1703 = vmax.xlane.f32.xlu0 %v1682
    %v1704 = vpop.xlane.xlu0 %1703
    %1705 = vmax.xlane.f32.xlu0 %v1683
    %v1706 = vpop.xlane.xlu0 %1705
    %1707 = vmax.xlane.f32.xlu0 %v1684
    %v1708 = vpop.xlane.xlu0 %1707
    %1709 = vmax.xlane.f32.xlu0 %v1685
    %v1710 = vpop.xlane.xlu0 %1709
    %1711 = vmax.xlane.f32.xlu0 %v1686
    %v1712 = vpop.xlane.xlu0 %1711
    %1713 = vmax.xlane.f32.xlu0 %v1687
    %v1714 = vpop.xlane.xlu0 %1713
    %1715 = vmax.xlane.f32.xlu0 %v1688
    %v1716 = vpop.xlane.xlu0 %1715
    %1717 = vmax.xlane.f32.xlu0 %v1689
    %v1718 = vpop.xlane.xlu0 %1717
    %1719 = vmax.xlane.f32.xlu0 %v1690
    %v1720 = vpop.xlane.xlu0 %1719
    %1721 = vmax.xlane.f32.xlu0 %v1691
    %v1722 = vpop.xlane.xlu0 %1721
    %1723 = vmax.xlane.f32.xlu0 %v1692
    %v1724 = vpop.xlane.xlu0 %1723
    %v1725 = vsub.f32 %v1677, %v1694
    %v1726 = vsub.f32 %v1678, %v1696
    %v1727 = vsub.f32 %v1679, %v1698
    %v1728 = vsub.f32 %v1680, %v1700
    %v1729 = vsub.f32 %v1681, %v1702
    %v1730 = vsub.f32 %v1682, %v1704
    %v1731 = vsub.f32 %v1683, %v1706
    %v1732 = vsub.f32 %v1684, %v1708
    %v1733 = vsub.f32 %v1685, %v1710
    %v1734 = vsub.f32 %v1686, %v1712
    %v1735 = vsub.f32 %v1687, %v1714
    %v1736 = vsub.f32 %v1688, %v1716
    %v1737 = vsub.f32 %v1689, %v1718
    %v1738 = vsub.f32 %v1690, %v1720
    %v1739 = vsub.f32 %v1691, %v1722
    %v1740 = vsub.f32 %v1692, %v1724
    %v1741 = vmul.f32 %v1725, 1.442695
    %v1742 = vpow.pop %v1741
    %v1743 = vmul.f32 %v1726, 1.442695
    %v1744 = vpow.pop %v1743
    %v1745 = vmul.f32 %v1727, 1.442695
    %v1746 = vpow.pop %v1745
    %v1747 = vmul.f32 %v1728, 1.442695
    %v1748 = vpow.pop %v1747
    %v1749 = vmul.f32 %v1729, 1.442695
    %v1750 = vpow.pop %v1749
    %v1751 = vmul.f32 %v1730, 1.442695
    %v1752 = vpow.pop %v1751
    %v1753 = vmul.f32 %v1731, 1.442695
    %v1754 = vpow.pop %v1753
    %v1755 = vmul.f32 %v1732, 1.442695
    %v1756 = vpow.pop %v1755
    %v1757 = vmul.f32 %v1733, 1.442695
    %v1758 = vpow.pop %v1757
    %v1759 = vmul.f32 %v1734, 1.442695
    %v1760 = vpow.pop %v1759
    %v1761 = vmul.f32 %v1735, 1.442695
    %v1762 = vpow.pop %v1761
    %v1763 = vmul.f32 %v1736, 1.442695
    %v1764 = vpow.pop %v1763
    %v1765 = vmul.f32 %v1737, 1.442695
    %v1766 = vpow.pop %v1765
    %v1767 = vmul.f32 %v1738, 1.442695
    %v1768 = vpow.pop %v1767
    %v1769 = vmul.f32 %v1739, 1.442695
    %v1770 = vpow.pop %v1769
    %v1771 = vmul.f32 %v1740, 1.442695
    %v1772 = vpow.pop %v1771
    %1773 = vadd.xlane.f32.xlu0 %v1742
    %v1774 = vpop.xlane.xlu0 %1773
    %1775 = vadd.xlane.f32.xlu0 %v1744
    %v1776 = vpop.xlane.xlu0 %1775
    %1777 = vadd.xlane.f32.xlu0 %v1746
    %v1778 = vpop.xlane.xlu0 %1777
    %1779 = vadd.xlane.f32.xlu0 %v1748
    %v1780 = vpop.xlane.xlu0 %1779
    %1781 = vadd.xlane.f32.xlu0 %v1750
    %v1782 = vpop.xlane.xlu0 %1781
    %1783 = vadd.xlane.f32.xlu0 %v1752
    %v1784 = vpop.xlane.xlu0 %1783
    %1785 = vadd.xlane.f32.xlu0 %v1754
    %v1786 = vpop.xlane.xlu0 %1785
    %1787 = vadd.xlane.f32.xlu0 %v1756
    %v1788 = vpop.xlane.xlu0 %1787
    %1789 = vadd.xlane.f32.xlu0 %v1758
    %v1790 = vpop.xlane.xlu0 %1789
    %1791 = vadd.xlane.f32.xlu0 %v1760
    %v1792 = vpop.xlane.xlu0 %1791
    %1793 = vadd.xlane.f32.xlu0 %v1762
    %v1794 = vpop.xlane.xlu0 %1793
    %1795 = vadd.xlane.f32.xlu0 %v1764
    %v1796 = vpop.xlane.xlu0 %1795
    %1797 = vadd.xlane.f32.xlu0 %v1766
    %v1798 = vpop.xlane.xlu0 %1797
    %1799 = vadd.xlane.f32.xlu0 %v1768
    %v1800 = vpop.xlane.xlu0 %1799
    %1801 = vadd.xlane.f32.xlu0 %v1770
    %v1802 = vpop.xlane.xlu0 %1801
    %1803 = vadd.xlane.f32.xlu0 %v1772
    %v1804 = vpop.xlane.xlu0 %1803
    %v1805 = vlog2.pop %v1774
    %v1806 = vmul.f32 %v1805, 0.6931472
    %v1807 = vlog2.pop %v1776
    %v1808 = vmul.f32 %v1807, 0.6931472
    %v1809 = vlog2.pop %v1778
    %v1810 = vmul.f32 %v1809, 0.6931472
    %v1811 = vlog2.pop %v1780
    %v1812 = vmul.f32 %v1811, 0.6931472
    %v1813 = vlog2.pop %v1782
    %v1814 = vmul.f32 %v1813, 0.6931472
    %v1815 = vlog2.pop %v1784
    %v1816 = vmul.f32 %v1815, 0.6931472
    %v1817 = vlog2.pop %v1786
    %v1818 = vmul.f32 %v1817, 0.6931472
    %v1819 = vlog2.pop %v1788
    %v1820 = vmul.f32 %v1819, 0.6931472
    %v1821 = vlog2.pop %v1790
    %v1822 = vmul.f32 %v1821, 0.6931472
    %v1823 = vlog2.pop %v1792
    %v1824 = vmul.f32 %v1823, 0.6931472
    %v1825 = vlog2.pop %v1794
    %v1826 = vmul.f32 %v1825, 0.6931472
    %v1827 = vlog2.pop %v1796
    %v1828 = vmul.f32 %v1827, 0.6931472
    %v1829 = vlog2.pop %v1798
    %v1830 = vmul.f32 %v1829, 0.6931472
    %v1831 = vlog2.pop %v1800
    %v1832 = vmul.f32 %v1831, 0.6931472
    %v1833 = vlog2.pop %v1802
    %v1834 = vmul.f32 %v1833, 0.6931472
    %v1835 = vlog2.pop %v1804
    %v1836 = vmul.f32 %v1835, 0.6931472
    %v1837 = vsub.f32 %v1725, %v1806
    %v1838 = vsub.f32 %v1726, %v1808
    %v1839 = vsub.f32 %v1727, %v1810
    %v1840 = vsub.f32 %v1728, %v1812
    %v1841 = vsub.f32 %v1729, %v1814
    %v1842 = vsub.f32 %v1730, %v1816
    %v1843 = vsub.f32 %v1731, %v1818
    %v1844 = vsub.f32 %v1732, %v1820
    %v1845 = vsub.f32 %v1733, %v1822
    %v1846 = vsub.f32 %v1734, %v1824
    %v1847 = vsub.f32 %v1735, %v1826
    %v1848 = vsub.f32 %v1736, %v1828
    %v1849 = vsub.f32 %v1737, %v1830
    %v1850 = vsub.f32 %v1738, %v1832
    %v1851 = vsub.f32 %v1739, %v1834
    %v1852 = vsub.f32 %v1740, %v1836
    %1853 = vst [vmem:[#allocation10] sm:$0xff] %v1837
    %1854 = vst [vmem:[#allocation10 + $0x8] sm:$0xff] %v1838
    %1855 = vst [vmem:[#allocation10 + $0x10] sm:$0xff] %v1839
    %1856 = vst [vmem:[#allocation10 + $0x18] sm:$0xff] %v1840
    %1857 = vst [vmem:[#allocation10 + $0x20] sm:$0xff] %v1841
    %1858 = vst [vmem:[#allocation10 + $0x28] sm:$0xff] %v1842
    %1859 = vst [vmem:[#allocation10 + $0x30] sm:$0xff] %v1843
    %1860 = vst [vmem:[#allocation10 + $0x38] sm:$0xff] %v1844
    %1861 = vst [vmem:[#allocation10 + $0x40] sm:$0xff] %v1845
    %1862 = vst [vmem:[#allocation10 + $0x48] sm:$0xff] %v1846
    %1863 = vst [vmem:[#allocation10 + $0x50] sm:$0xff] %v1847
    %1864 = vst [vmem:[#allocation10 + $0x58] sm:$0xff] %v1848
    %1865 = vst [vmem:[#allocation10 + $0x60] sm:$0xff] %v1849
    %1866 = vst [vmem:[#allocation10 + $0x68] sm:$0xff] %v1850
    %1867 = vst [vmem:[#allocation10 + $0x70] sm:$0xff] %v1851
    %1868 = vst [vmem:[#allocation10 + $0x78] sm:$0xff] %v1852
    // Predicated region
    $region46: #{tpu_custom_call.1} parent=1 // pred_check
      _
    $region47: #{tpu_custom_call.1} parent=1 // pred_check_branch
      %1870 = sbr.rel (0) target = $region49
    $region48: #{tpu_custom_call.1} parent=1 // pred_region
      %s1872 = ssub.s32 2048, 2048
      %1873 = vsyncadd [#allocation4], %s1872
      %s1874 = sshll.u32 [#allocation10], 4
      %s1875 = int_to_ptr.vmem [resolvable:$true] %s1874
      %1880 = dma.vmem_to_hbm [thread:$0]  %s1875, 2048, %s7, [#allocation4], 128, 128, 8
    $region49: #{tpu_custom_call.1} parent=1 // pred_fallthru
      _
    // Predicated region
    $region50: #{tpu_custom_call.1} parent=1 // pred_check
      _
    $region51: #{tpu_custom_call.1} parent=1 // pred_check_branch
      %1882 = sbr.rel (0) target = $region53
    $region52: #{tpu_custom_call.1} parent=1 // pred_region
      %1883 = dma.done [#allocation4], 2048
    $region53: #{tpu_custom_call.1} parent=1 // pred_fallthru
      _
    %1884 = vsyncpa [#allocation3], 1
    %1885 = vsyncpa [#allocation6], 1
    %1886 = vsyncpa [#allocation9], 1
    %1887 = vsyncpa [#allocation4], 1

// kernel: tpu_custom_call.1
$region0: #{tpu_custom_call.1}
  #allocation0 [shape = 'u32[]', space=smem, size = 0x4, offset = 0x4, fixed_abs, tag = 'smem constant byte address 0x4 - core index']
  #allocation1 [shape = 'u32[144,128]{1,0:T(1,128)}', space=vmem, size = 0x12000, scoped, tag = 'internal scratch']
  %s0 = inlined_call_operand.hbm [shape: bf16[128,128], index: 0, kind: input, shape index: {}]
  %s1 = inlined_call_operand.hbm [shape: bf16[128,128], index: 1, kind: input, shape index: {}]
  %s2 = inlined_call_operand.vmem [shape: f32[1,128], index: 2, kind: input, shape index: {}]
  %s3 = inlined_call_operand.hbm [shape: bf16[128,128], index: 3, kind: input, shape index: {}]
  %s4 = inlined_call_operand.vmem [shape: f32[1,128], index: 4, kind: input, shape index: {}]
  %s5 = inlined_call_operand.hbm [shape: bf16[128,128], index: 5, kind: input, shape index: {}]
  %s6 = inlined_call_operand.vmem [shape: f32[1,128], index: 6, kind: input, shape index: {}]
  %s7 = inlined_call_operand.hbm [shape: f32[128,128], index: 7, kind: output, shape index: {}]
  %s8 = sld [smem:[#allocation0]]
  $region54: #{tpu_custom_call.1} parent=0
    _
  %s10 = ssub.s32 1, %s8
  %s11 = scalar_select 0, %s10, %s8
  $region1: #{tpu_custom_call.1} parent=0
    #allocation2 [shape = 'u8[32768]{0}', space=vmem, size = 0x8000, scoped, tag = 'input window, operand 0, single buffered']
    #allocation3 [shape = 's32[1]{0}', space=sflag, size = 0x4, scoped, tag = 'scoped memory for tpu_custom_call.1']
    #allocation4 [shape = 's32[1]{0}', space=sflag, size = 0x4, scoped, tag = 'scoped memory for tpu_custom_call.1']
    #allocation5 [shape = 'u8[32768]{0}', space=vmem, size = 0x8000, scoped, tag = 'input window, operand 1, single buffered']
    #allocation6 [shape = 's32[1]{0}', space=sflag, size = 0x4, scoped, tag = 'scoped memory for tpu_custom_call.1']
    #allocation7 [shape = 'u8[32768]{0}', space=vmem, size = 0x8000, scoped, tag = 'input window, operand 3, single buffered']
    #allocation8 [shape = 'u8[32768]{0}', space=vmem, size = 0x8000, scoped, tag = 'input window, operand 5, single buffered']
    #allocation9 [shape = 's32[1]{0}', space=sflag, size = 0x4, scoped, tag = 'scoped memory for tpu_custom_call.1']
    #allocation10 [shape = 'u8[65536]{0}', space=vmem, size = 0x10000, scoped, tag = 'output window, operand 0, single buffered']
    %12 = vsyncpa [#allocation3], 0
    %13 = vsyncpa [#allocation6], 0
    %14 = vsyncpa [#allocation9], 0
    %15 = vsyncpa [#allocation4], 0
    // Predicated region
    $region2: #{tpu_custom_call.1} parent=1 // pred_check
      _
    $region3: #{tpu_custom_call.1} parent=1 // pred_check_branch
      %17 = sbr.rel (0) target = $region5
    $region4: #{tpu_custom_call.1} parent=1 // pred_region
      %s19 = ssub.s32 1024, 1024
      %20 = vsyncadd [#allocation3], %s19
      %s21 = sshll.u32 [#allocation2], 4
      %s22 = int_to_ptr.vmem [resolvable:$true] %s21
      %27 = dma.hbm_to_vmem [thread:$0]  %s0, 1024, %s22, [#allocation3], 64, 64, 4
    $region5: #{tpu_custom_call.1} parent=1 // pred_fallthru
      _
    // Predicated region
    $region6: #{tpu_custom_call.1} parent=1 // pred_check
      _
    $region7: #{tpu_custom_call.1} parent=1 // pred_check_branch
      %29 = sbr.rel (0) target = $region9
    $region8: #{tpu_custom_call.1} parent=1 // pred_region
      %s31 = ssub.s32 1024, 1024
      %32 = vsyncadd [#allocation6], %s31
      %s33 = sshll.u32 [#allocation5], 4
      %s34 = int_to_ptr.vmem [resolvable:$true] %s33
      %39 = dma.hbm_to_vmem [thread:$0]  %s1, 1024, %s34, [#allocation6], 64, 64, 4
    $region9: #{tpu_custom_call.1} parent=1 // pred_fallthru
      _
    // Predicated region
    $region10: #{tpu_custom_call.1} parent=1 // pred_check
      _
    $region11: #{tpu_custom_call.1} parent=1 // pred_check_branch
      %41 = sbr.rel (0) target = $region13
    $region12: #{tpu_custom_call.1} parent=1 // pred_region
      _
    $region13: #{tpu_custom_call.1} parent=1 // pred_fallthru
      _
    // Predicated region
    $region14: #{tpu_custom_call.1} parent=1 // pred_check
      _
    $region15: #{tpu_custom_call.1} parent=1 // pred_check_branch
      %43 = sbr.rel (0) target = $region17
    $region16: #{tpu_custom_call.1} parent=1 // pred_region
      %s45 = ssub.s32 1024, 1024
      %46 = vsyncadd [#allocation6], %s45
      %s47 = sshll.u32 [#allocation7], 4
      %s48 = int_to_ptr.vmem [resolvable:$true] %s47
      %53 = dma.hbm_to_vmem [thread:$0]  %s3, 1024, %s48, [#allocation6], 64, 64, 4
    $region17: #{tpu_custom_call.1} parent=1 // pred_fallthru
      _
    // Predicated region
    $region18: #{tpu_custom_call.1} parent=1 // pred_check
      _
    $region19: #{tpu_custom_call.1} parent=1 // pred_check_branch
      %55 = sbr.rel (0) target = $region21
    $region20: #{tpu_custom_call.1} parent=1 // pred_region
      _
    $region21: #{tpu_custom_call.1} parent=1 // pred_fallthru
      _
    // Predicated region
    $region22: #{tpu_custom_call.1} parent=1 // pred_check
      _
    $region23: #{tpu_custom_call.1} parent=1 // pred_check_branch
      %57 = sbr.rel (0) target = $region25
    $region24: #{tpu_custom_call.1} parent=1 // pred_region
      %s59 = ssub.s32 1024, 1024
      %60 = vsyncadd [#allocation9], %s59
      %s61 = sshll.u32 [#allocation8], 4
      %s62 = int_to_ptr.vmem [resolvable:$true] %s61
      %67 = dma.hbm_to_vmem [thread:$0]  %s5, 1024, %s62, [#allocation9], 64, 64, 4
    $region25: #{tpu_custom_call.1} parent=1 // pred_fallthru
      _
    // Predicated region
    $region26: #{tpu_custom_call.1} parent=1 // pred_check
      _
    $region27: #{tpu_custom_call.1} parent=1 // pred_check_branch
      %69 = sbr.rel (0) target = $region29
    $region28: #{tpu_custom_call.1} parent=1 // pred_region
      _
    $region29: #{tpu_custom_call.1} parent=1 // pred_fallthru
      _
    // Predicated region
    $region30: #{tpu_custom_call.1} parent=1 // pred_check
      _
    $region31: #{tpu_custom_call.1} parent=1 // pred_check_branch
      %71 = sbr.rel (0) target = $region33
    $region32: #{tpu_custom_call.1} parent=1 // pred_region
      %72 = dma.done [#allocation3], 1024
    $region33: #{tpu_custom_call.1} parent=1 // pred_fallthru
      _
    // Predicated region
    $region34: #{tpu_custom_call.1} parent=1 // pred_check
      _
    $region35: #{tpu_custom_call.1} parent=1 // pred_check_branch
      %74 = sbr.rel (0) target = $region37
    $region36: #{tpu_custom_call.1} parent=1 // pred_region
      %75 = dma.done [#allocation6], 1024
    $region37: #{tpu_custom_call.1} parent=1 // pred_fallthru
      _
    // Predicated region
    $region38: #{tpu_custom_call.1} parent=1 // pred_check
      _
    $region39: #{tpu_custom_call.1} parent=1 // pred_check_branch
      %77 = sbr.rel (0) target = $region41
    $region40: #{tpu_custom_call.1} parent=1 // pred_region
      %78 = dma.done [#allocation6], 1024
    $region41: #{tpu_custom_call.1} parent=1 // pred_fallthru
      _
    // Predicated region
    $region42: #{tpu_custom_call.1} parent=1 // pred_check
      _
    $region43: #{tpu_custom_call.1} parent=1 // pred_check_branch
      %80 = sbr.rel (0) target = $region45
    $region44: #{tpu_custom_call.1} parent=1 // pred_region
      %81 = dma.done [#allocation9], 1024
    $region45: #{tpu_custom_call.1} parent=1 // pred_fallthru
      _
    %v83 = vld [vmem:[#allocation2] sm:$0xf]
    %v84 = vld [vmem:[#allocation2 + $0x4] sm:$0xf]
    %v85 = vld [vmem:[#allocation2 + $0x8] sm:$0xf]
    %v86 = vld [vmem:[#allocation2 + $0xc] sm:$0xf]
    %v87 = vld [vmem:[#allocation2 + $0x10] sm:$0xf]
    %v88 = vld [vmem:[#allocation2 + $0x14] sm:$0xf]
    %v89 = vld [vmem:[#allocation2 + $0x18] sm:$0xf]
    %v90 = vld [vmem:[#allocation2 + $0x1c] sm:$0xf]
    %v91 = vld [vmem:[#allocation2 + $0x20] sm:$0xf]
    %v92 = vld [vmem:[#allocation2 + $0x24] sm:$0xf]
    %v93 = vld [vmem:[#allocation2 + $0x28] sm:$0xf]
    %v94 = vld [vmem:[#allocation2 + $0x2c] sm:$0xf]
    %v95 = vld [vmem:[#allocation2 + $0x30] sm:$0xf]
    %v96 = vld [vmem:[#allocation2 + $0x34] sm:$0xf]
    %v97 = vld [vmem:[#allocation2 + $0x38] sm:$0xf]
    %v98 = vld [vmem:[#allocation2 + $0x3c] sm:$0xf]
    %v99 = vld [vmem:[#allocation5] sm:$0xf]
    %v100 = vld [vmem:[#allocation5 + $0x4] sm:$0xf]
    %v101 = vld [vmem:[#allocation5 + $0x8] sm:$0xf]
    %v102 = vld [vmem:[#allocation5 + $0xc] sm:$0xf]
    %v103 = vld [vmem:[#allocation5 + $0x10] sm:$0xf]
    %v104 = vld [vmem:[#allocation5 + $0x14] sm:$0xf]
    %v105 = vld [vmem:[#allocation5 + $0x18] sm:$0xf]
    %v106 = vld [vmem:[#allocation5 + $0x1c] sm:$0xf]
    %v107 = vld [vmem:[#allocation5 + $0x20] sm:$0xf]
    %v108 = vld [vmem:[#allocation5 + $0x24] sm:$0xf]
    %v109 = vld [vmem:[#allocation5 + $0x28] sm:$0xf]
    %v110 = vld [vmem:[#allocation5 + $0x2c] sm:$0xf]
    %v111 = vld [vmem:[#allocation5 + $0x30] sm:$0xf]
    %v112 = vld [vmem:[#allocation5 + $0x34] sm:$0xf]
    %v113 = vld [vmem:[#allocation5 + $0x38] sm:$0xf]
    %v114 = vld [vmem:[#allocation5 + $0x3c] sm:$0xf]
    %v115 = vld [vmem:[#allocation7] sm:$0xf]
    %v116 = vld [vmem:[#allocation7 + $0x4] sm:$0xf]
    %v117 = vld [vmem:[#allocation7 + $0x8] sm:$0xf]
    %v118 = vld [vmem:[#allocation7 + $0xc] sm:$0xf]
    %v119 = vld [vmem:[#allocation7 + $0x10] sm:$0xf]
    %v120 = vld [vmem:[#allocation7 + $0x14] sm:$0xf]
    %v121 = vld [vmem:[#allocation7 + $0x18] sm:$0xf]
    %v122 = vld [vmem:[#allocation7 + $0x1c] sm:$0xf]
    %v123 = vld [vmem:[#allocation7 + $0x20] sm:$0xf]
    %v124 = vld [vmem:[#allocation7 + $0x24] sm:$0xf]
    %v125 = vld [vmem:[#allocation7 + $0x28] sm:$0xf]
    %v126 = vld [vmem:[#allocation7 + $0x2c] sm:$0xf]
    %v127 = vld [vmem:[#allocation7 + $0x30] sm:$0xf]
    %v128 = vld [vmem:[#allocation7 + $0x34] sm:$0xf]
    %v129 = vld [vmem:[#allocation7 + $0x38] sm:$0xf]
    %v130 = vld [vmem:[#allocation7 + $0x3c] sm:$0xf]
    %v131 = vld [vmem:[#allocation8] sm:$0xf]
    %v132 = vld [vmem:[#allocation8 + $0x4] sm:$0xf]
    %v133 = vld [vmem:[#allocation8 + $0x8] sm:$0xf]
    %v134 = vld [vmem:[#allocation8 + $0xc] sm:$0xf]
    %v135 = vld [vmem:[#allocation8 + $0x10] sm:$0xf]
    %v136 = vld [vmem:[#allocation8 + $0x14] sm:$0xf]
    %v137 = vld [vmem:[#allocation8 + $0x18] sm:$0xf]
    %v138 = vld [vmem:[#allocation8 + $0x1c] sm:$0xf]
    %v139 = vld [vmem:[#allocation8 + $0x20] sm:$0xf]
    %v140 = vld [vmem:[#allocation8 + $0x24] sm:$0xf]
    %v141 = vld [vmem:[#allocation8 + $0x28] sm:$0xf]
    %v142 = vld [vmem:[#allocation8 + $0x2c] sm:$0xf]
    %v143 = vld [vmem:[#allocation8 + $0x30] sm:$0xf]
    %v144 = vld [vmem:[#allocation8 + $0x34] sm:$0xf]
    %v145 = vld [vmem:[#allocation8 + $0x38] sm:$0xf]
    %v146 = vld [vmem:[#allocation8 + $0x3c] sm:$0xf]
    %v147 = vld [vmem:[%s2] sm:$0x1]
    %v148 = vld [vmem:[%s4] sm:$0x1]
    %v149 = vld [vmem:[%s6] sm:$0x1]
    %v151 = vlaneseq
    %v152 = vshrl.u32 %v151, 7
    %v153 = vsub.s32 0, %v152
    %v154 = vrot.slane %v147, %v153
    %v172 = vunpack.c.l.b16 %v83
    %v173 = vunpack.c.l.b16 %v84
    %v174 = vunpack.c.l.b16 %v85
    %v175 = vunpack.c.l.b16 %v86
    %v176 = vunpack.c.l.b16 %v87
    %v177 = vunpack.c.l.b16 %v88
    %v178 = vunpack.c.l.b16 %v89
    %v179 = vunpack.c.l.b16 %v90
    %v180 = vunpack.c.l.b16 %v91
    %v181 = vunpack.c.l.b16 %v92
    %v182 = vunpack.c.l.b16 %v93
    %v183 = vunpack.c.l.b16 %v94
    %v184 = vunpack.c.l.b16 %v95
    %v185 = vunpack.c.l.b16 %v96
    %v186 = vunpack.c.l.b16 %v97
    %v187 = vunpack.c.l.b16 %v98
    %v188 = vpack.c.b16 %v173, %v172
    %v189 = vpack.c.b16 %v175, %v174
    %v190 = vpack.c.b16 %v177, %v176
    %v191 = vpack.c.b16 %v179, %v178
    %v192 = vpack.c.b16 %v181, %v180
    %v193 = vpack.c.b16 %v183, %v182
    %v194 = vpack.c.b16 %v185, %v184
    %v195 = vpack.c.b16 %v187, %v186
    %v220 = vunpack.c.l.b16 %v99
    %v221 = vunpack.c.l.b16 %v100
    %v222 = vunpack.c.l.b16 %v101
    %v223 = vunpack.c.l.b16 %v102
    %v224 = vunpack.c.l.b16 %v103
    %v225 = vunpack.c.l.b16 %v104
    %v226 = vunpack.c.l.b16 %v105
    %v227 = vunpack.c.l.b16 %v106
    %v228 = vunpack.c.l.b16 %v107
    %v229 = vunpack.c.l.b16 %v108
    %v230 = vunpack.c.l.b16 %v109
    %v231 = vunpack.c.l.b16 %v110
    %v232 = vunpack.c.l.b16 %v111
    %v233 = vunpack.c.l.b16 %v112
    %v234 = vunpack.c.l.b16 %v113
    %v235 = vunpack.c.l.b16 %v114
    %v236 = vpack.c.b16 %v221, %v220
    %v237 = vpack.c.b16 %v223, %v222
    %v238 = vpack.c.b16 %v225, %v224
    %v239 = vpack.c.b16 %v227, %v226
    %v240 = vpack.c.b16 %v229, %v228
    %v241 = vpack.c.b16 %v231, %v230
    %v242 = vpack.c.b16 %v233, %v232
    %v243 = vpack.c.b16 %v235, %v234
    %252 = vmatprep.subr.bf16.mxu0 0
    %253 = vmatpush1.bf16.msra.mxu0 %v236
    %254 = vmatprep.subr.bf16.mxu0 0
    %255 = vmatpush1.bf16.msra.mxu0 %v237
    %256 = vmatprep.subr.bf16.mxu0 0
    %257 = vmatpush1.bf16.msra.mxu0 %v238
    %258 = vmatprep.subr.bf16.mxu0 0
    %259 = vmatpush1.bf16.msra.mxu0 %v239
    %260 = vmatprep.subr.bf16.mxu0 0
    %261 = vmatpush1.bf16.msra.mxu0 %v240
    %262 = vmatprep.subr.bf16.mxu0 0
    %263 = vmatpush1.bf16.msra.mxu0 %v241
    %264 = vmatprep.subr.bf16.mxu0 0
    %265 = vmatpush1.bf16.msra.mxu0 %v242
    %266 = vmatprep.subr.bf16.mxu0 0
    %267 = vmatpush1.bf16.msra.mxu0 %v243
    %268 = vmatprep.subr.bf16.mxu0 0
    %269 = vmatpush1.bf16.msra.mxu0 0
    %270 = vmatprep.subr.bf16.mxu0 0
    %271 = vmatpush1.bf16.msra.mxu0 0
    %272 = vmatprep.subr.bf16.mxu0 0
    %273 = vmatpush1.bf16.msra.mxu0 0
    %274 = vmatprep.subr.bf16.mxu0 0
    %275 = vmatpush1.bf16.msra.mxu0 0
    %276 = vmatprep.subr.bf16.mxu0 0
    %277 = vmatpush1.bf16.msra.mxu0 0
    %278 = vmatprep.subr.bf16.mxu0 0
    %279 = vmatpush1.bf16.msra.mxu0 0
    %280 = vmatprep.subr.bf16.mxu0 0
    %281 = vmatpush1.bf16.msra.mxu0 0
    %282 = vmatprep.subr.bf16.mxu0 0
    %283 = vmatpush1.bf16.msra.mxu0 0
    %284 = vmatprep.mubr.bf16.mxu0 0
    %285 = vmatmul.mubr.bf16.gmra.mrb[0].mxu0 %v188
    %v286 = vpop.f32.mrb[0].mxu0
    %v287 = vadd.f32 %v154, %v286
    %v288 = vpop.f32.mrb[0].mxu0
    %v289 = vpop.f32.mrb[0].mxu0
    %v290 = vadd.f32 %v154, %v289
    %v291 = vpop.f32.mrb[0].mxu0
    %292 = vmatprep.mubr.bf16.mxu0 0
    %293 = vmatmul.mubr.bf16.gmra.mrb[0].mxu0 %v189
    %v294 = vpop.f32.mrb[0].mxu0
    %v295 = vadd.f32 %v154, %v294
    %v296 = vpop.f32.mrb[0].mxu0
    %v297 = vpop.f32.mrb[0].mxu0
    %v298 = vadd.f32 %v154, %v297
    %v299 = vpop.f32.mrb[0].mxu0
    %300 = vmatprep.mubr.bf16.mxu0 0
    %301 = vmatmul.mubr.bf16.gmra.mrb[0].mxu0 %v190
    %v302 = vpop.f32.mrb[0].mxu0
    %v303 = vadd.f32 %v154, %v302
    %v304 = vpop.f32.mrb[0].mxu0
    %v305 = vpop.f32.mrb[0].mxu0
    %v306 = vadd.f32 %v154, %v305
    %v307 = vpop.f32.mrb[0].mxu0
    %308 = vmatprep.mubr.bf16.mxu0 0
    %309 = vmatmul.mubr.bf16.gmra.mrb[0].mxu0 %v191
    %v310 = vpop.f32.mrb[0].mxu0
    %v311 = vadd.f32 %v154, %v310
    %v312 = vpop.f32.mrb[0].mxu0
    %v313 = vpop.f32.mrb[0].mxu0
    %v314 = vadd.f32 %v154, %v313
    %v315 = vpop.f32.mrb[0].mxu0
    %316 = vmatprep.mubr.bf16.mxu0 0
    %317 = vmatmul.mubr.bf16.gmra.mrb[0].mxu0 %v192
    %v318 = vpop.f32.mrb[0].mxu0
    %v319 = vadd.f32 %v154, %v318
    %v320 = vpop.f32.mrb[0].mxu0
    %v321 = vpop.f32.mrb[0].mxu0
    %v322 = vadd.f32 %v154, %v321
    %v323 = vpop.f32.mrb[0].mxu0
    %324 = vmatprep.mubr.bf16.mxu0 0
    %325 = vmatmul.mubr.bf16.gmra.mrb[0].mxu0 %v193
    %v326 = vpop.f32.mrb[0].mxu0
    %v327 = vadd.f32 %v154, %v326
    %v328 = vpop.f32.mrb[0].mxu0
    %v329 = vpop.f32.mrb[0].mxu0
    %v330 = vadd.f32 %v154, %v329
    %v331 = vpop.f32.mrb[0].mxu0
    %332 = vmatprep.mubr.bf16.mxu0 0
    %333 = vmatmul.mubr.bf16.gmra.mrb[0].mxu0 %v194
    %v334 = vpop.f32.mrb[0].mxu0
    %v335 = vadd.f32 %v154, %v334
    %v336 = vpop.f32.mrb[0].mxu0
    %v337 = vpop.f32.mrb[0].mxu0
    %v338 = vadd.f32 %v154, %v337
    %v339 = vpop.f32.mrb[0].mxu0
    %340 = vmatprep.mubr.bf16.mxu0 0
    %341 = vmatmul.mubr.bf16.gmra.mrb[0].mxu0 %v195
    %v342 = vpop.f32.mrb[0].mxu0
    %v343 = vadd.f32 %v154, %v342
    %v344 = vpop.f32.mrb[0].mxu0
    %v345 = vpop.f32.mrb[0].mxu0
    %v346 = vadd.f32 %v154, %v345
    %v347 = vpop.f32.mrb[0].mxu0
    %348 = vdwg.mxu0
    %v349 = vmax.f32 %v287, 0.0
    %v350 = vmax.f32 %v290, 0.0
    %v351 = vmax.f32 %v295, 0.0
    %v352 = vmax.f32 %v298, 0.0
    %v353 = vmax.f32 %v303, 0.0
    %v354 = vmax.f32 %v306, 0.0
    %v355 = vmax.f32 %v311, 0.0
    %v356 = vmax.f32 %v314, 0.0
    %v357 = vmax.f32 %v319, 0.0
    %v358 = vmax.f32 %v322, 0.0
    %v359 = vmax.f32 %v327, 0.0
    %v360 = vmax.f32 %v330, 0.0
    %v361 = vmax.f32 %v335, 0.0
    %v362 = vmax.f32 %v338, 0.0
    %v363 = vmax.f32 %v343, 0.0
    %v364 = vmax.f32 %v346, 0.0
    %v365 = vpack.c.bf16 %v350, %v349
    %v366 = vpack.c.bf16 %v352, %v351
    %v367 = vpack.c.bf16 %v354, %v353
    %v368 = vpack.c.bf16 %v356, %v355
    %v369 = vpack.c.bf16 %v358, %v357
    %v370 = vpack.c.bf16 %v360, %v359
    %v371 = vpack.c.bf16 %v362, %v361
    %v372 = vpack.c.bf16 %v364, %v363
    %v374 = vlaneseq
    %v375 = vshrl.u32 %v374, 7
    %v376 = vsub.s32 0, %v375
    %v377 = vrot.slane %v148, %v376
    %v395 = vunpack.c.l.b16 %v115
    %v396 = vunpack.c.l.b16 %v116
    %v397 = vunpack.c.l.b16 %v117
    %v398 = vunpack.c.l.b16 %v118
    %v399 = vunpack.c.l.b16 %v119
    %v400 = vunpack.c.l.b16 %v120
    %v401 = vunpack.c.l.b16 %v121
    %v402 = vunpack.c.l.b16 %v122
    %v403 = vunpack.c.l.b16 %v123
    %v404 = vunpack.c.l.b16 %v124
    %v405 = vunpack.c.l.b16 %v125
    %v406 = vunpack.c.l.b16 %v126
    %v407 = vunpack.c.l.b16 %v127
    %v408 = vunpack.c.l.b16 %v128
    %v409 = vunpack.c.l.b16 %v129
    %v410 = vunpack.c.l.b16 %v130
    %v411 = vpack.c.b16 %v396, %v395
    %v412 = vpack.c.b16 %v398, %v397
    %v413 = vpack.c.b16 %v400, %v399
    %v414 = vpack.c.b16 %v402, %v401
    %v415 = vpack.c.b16 %v404, %v403
    %v416 = vpack.c.b16 %v406, %v405
    %v417 = vpack.c.b16 %v408, %v407
    %v418 = vpack.c.b16 %v410, %v409
    %427 = vmatprep.subr.bf16.mxu0 0
    %428 = vmatpush1.bf16.msra.mxu0 %v411
    %429 = vmatprep.subr.bf16.mxu0 0
    %430 = vmatpush1.bf16.msra.mxu0 %v412
    %431 = vmatprep.subr.bf16.mxu0 0
    %432 = vmatpush1.bf16.msra.mxu0 %v413
    %433 = vmatprep.subr.bf16.mxu0 0
    %434 = vmatpush1.bf16.msra.mxu0 %v414
    %435 = vmatprep.subr.bf16.mxu0 0
    %436 = vmatpush1.bf16.msra.mxu0 %v415
    %437 = vmatprep.subr.bf16.mxu0 0
    %438 = vmatpush1.bf16.msra.mxu0 %v416
    %439 = vmatprep.subr.bf16.mxu0 0
    %440 = vmatpush1.bf16.msra.mxu0 %v417
    %441 = vmatprep.subr.bf16.mxu0 0
    %442 = vmatpush1.bf16.msra.mxu0 %v418
    %443 = vmatprep.subr.bf16.mxu0 0
    %444 = vmatpush1.bf16.msra.mxu0 0
    %445 = vmatprep.subr.bf16.mxu0 0
    %446 = vmatpush1.bf16.msra.mxu0 0
    %447 = vmatprep.subr.bf16.mxu0 0
    %448 = vmatpush1.bf16.msra.mxu0 0
    %449 = vmatprep.subr.bf16.mxu0 0
    %450 = vmatpush1.bf16.msra.mxu0 0
    %451 = vmatprep.subr.bf16.mxu0 0
    %452 = vmatpush1.bf16.msra.mxu0 0
    %453 = vmatprep.subr.bf16.mxu0 0
    %454 = vmatpush1.bf16.msra.mxu0 0
    %455 = vmatprep.subr.bf16.mxu0 0
    %456 = vmatpush1.bf16.msra.mxu0 0
    %457 = vmatprep.subr.bf16.mxu0 0
    %458 = vmatpush1.bf16.msra.mxu0 0
    %459 = vmatprep.mubr.bf16.mxu0 0
    %460 = vmatmul.mubr.bf16.gmra.mrb[0].mxu0 %v365
    %v461 = vpop.f32.mrb[0].mxu0
    %v462 = vadd.f32 %v377, %v461
    %v463 = vpop.f32.mrb[0].mxu0
    %v464 = vpop.f32.mrb[0].mxu0
    %v465 = vadd.f32 %v377, %v464
    %v466 = vpop.f32.mrb[0].mxu0
    %467 = vmatprep.mubr.bf16.mxu0 0
    %468 = vmatmul.mubr.bf16.gmra.mrb[0].mxu0 %v366
    %v469 = vpop.f32.mrb[0].mxu0
    %v470 = vadd.f32 %v377, %v469
    %v471 = vpop.f32.mrb[0].mxu0
    %v472 = vpop.f32.mrb[0].mxu0
    %v473 = vadd.f32 %v377, %v472
    %v474 = vpop.f32.mrb[0].mxu0
    %475 = vmatprep.mubr.bf16.mxu0 0
    %476 = vmatmul.mubr.bf16.gmra.mrb[0].mxu0 %v367
    %v477 = vpop.f32.mrb[0].mxu0
    %v478 = vadd.f32 %v377, %v477
    %v479 = vpop.f32.mrb[0].mxu0
    %v480 = vpop.f32.mrb[0].mxu0
    %v481 = vadd.f32 %v377, %v480
    %v482 = vpop.f32.mrb[0].mxu0
    %483 = vmatprep.mubr.bf16.mxu0 0
    %484 = vmatmul.mubr.bf16.gmra.mrb[0].mxu0 %v368
    %v485 = vpop.f32.mrb[0].mxu0
    %v486 = vadd.f32 %v377, %v485
    %v487 = vpop.f32.mrb[0].mxu0
    %v488 = vpop.f32.mrb[0].mxu0
    %v489 = vadd.f32 %v377, %v488
    %v490 = vpop.f32.mrb[0].mxu0
    %491 = vmatprep.mubr.bf16.mxu0 0
    %492 = vmatmul.mubr.bf16.gmra.mrb[0].mxu0 %v369
    %v493 = vpop.f32.mrb[0].mxu0
    %v494 = vadd.f32 %v377, %v493
    %v495 = vpop.f32.mrb[0].mxu0
    %v496 = vpop.f32.mrb[0].mxu0
    %v497 = vadd.f32 %v377, %v496
    %v498 = vpop.f32.mrb[0].mxu0
    %499 = vmatprep.mubr.bf16.mxu0 0
    %500 = vmatmul.mubr.bf16.gmra.mrb[0].mxu0 %v370
    %v501 = vpop.f32.mrb[0].mxu0
    %v502 = vadd.f32 %v377, %v501
    %v503 = vpop.f32.mrb[0].mxu0
    %v504 = vpop.f32.mrb[0].mxu0
    %v505 = vadd.f32 %v377, %v504
    %v506 = vpop.f32.mrb[0].mxu0
    %507 = vmatprep.mubr.bf16.mxu0 0
    %508 = vmatmul.mubr.bf16.gmra.mrb[0].mxu0 %v371
    %v509 = vpop.f32.mrb[0].mxu0
    %v510 = vadd.f32 %v377, %v509
    %v511 = vpop.f32.mrb[0].mxu0
    %v512 = vpop.f32.mrb[0].mxu0
    %v513 = vadd.f32 %v377, %v512
    %v514 = vpop.f32.mrb[0].mxu0
    %515 = vmatprep.mubr.bf16.mxu0 0
    %516 = vmatmul.mubr.bf16.gmra.mrb[0].mxu0 %v372
    %v517 = vpop.f32.mrb[0].mxu0
    %v518 = vadd.f32 %v377, %v517
    %v519 = vpop.f32.mrb[0].mxu0
    %v520 = vpop.f32.mrb[0].mxu0
    %v521 = vadd.f32 %v377, %v520
    %v522 = vpop.f32.mrb[0].mxu0
    %523 = vdwg.mxu0
    %v524 = vmax.f32 %v462, 0.0
    %v525 = vmax.f32 %v465, 0.0
    %v526 = vmax.f32 %v470, 0.0
    %v527 = vmax.f32 %v473, 0.0
    %v528 = vmax.f32 %v478, 0.0
    %v529 = vmax.f32 %v481, 0.0
    %v530 = vmax.f32 %v486, 0.0
    %v531 = vmax.f32 %v489, 0.0
    %v532 = vmax.f32 %v494, 0.0
    %v533 = vmax.f32 %v497, 0.0
    %v534 = vmax.f32 %v502, 0.0
    %v535 = vmax.f32 %v505, 0.0
    %v536 = vmax.f32 %v510, 0.0
    %v537 = vmax.f32 %v513, 0.0
    %v538 = vmax.f32 %v518, 0.0
    %v539 = vmax.f32 %v521, 0.0
    %v540 = vadd.f32 %v524, %v349
    %v541 = vadd.f32 %v525, %v350
    %v542 = vadd.f32 %v526, %v351
    %v543 = vadd.f32 %v527, %v352
    %v544 = vadd.f32 %v528, %v353
    %v545 = vadd.f32 %v529, %v354
    %v546 = vadd.f32 %v530, %v355
    %v547 = vadd.f32 %v531, %v356
    %v548 = vadd.f32 %v532, %v357
    %v549 = vadd.f32 %v533, %v358
    %v550 = vadd.f32 %v534, %v359
    %v551 = vadd.f32 %v535, %v360
    %v552 = vadd.f32 %v536, %v361
    %v553 = vadd.f32 %v537, %v362
    %v554 = vadd.f32 %v538, %v363
    %v555 = vadd.f32 %v539, %v364
    %v556 = vpack.c.bf16 %v541, %v540
    %v557 = vpack.c.bf16 %v543, %v542
    %v558 = vpack.c.bf16 %v545, %v544
    %v559 = vpack.c.bf16 %v547, %v546
    %v560 = vpack.c.bf16 %v549, %v548
    %v561 = vpack.c.bf16 %v551, %v550
    %v562 = vpack.c.bf16 %v553, %v552
    %v563 = vpack.c.bf16 %v555, %v554
    %564 = vmatprep.subr.bf16.mxu0 0
    %565 = vmatpush1.bf16.msra.mxu0 %v411
    %566 = vmatprep.subr.bf16.mxu0 0
    %567 = vmatpush1.bf16.msra.mxu0 %v412
    %568 = vmatprep.subr.bf16.mxu0 0
    %569 = vmatpush1.bf16.msra.mxu0 %v413
    %570 = vmatprep.subr.bf16.mxu0 0
    %571 = vmatpush1.bf16.msra.mxu0 %v414
    %572 = vmatprep.subr.bf16.mxu0 0
    %573 = vmatpush1.bf16.msra.mxu0 %v415
    %574 = vmatprep.subr.bf16.mxu0 0
    %575 = vmatpush1.bf16.msra.mxu0 %v416
    %576 = vmatprep.subr.bf16.mxu0 0
    %577 = vmatpush1.bf16.msra.mxu0 %v417
    %578 = vmatprep.subr.bf16.mxu0 0
    %579 = vmatpush1.bf16.msra.mxu0 %v418
    %580 = vmatprep.subr.bf16.mxu0 0
    %581 = vmatpush1.bf16.msra.mxu0 0
    %582 = vmatprep.subr.bf16.mxu0 0
    %583 = vmatpush1.bf16.msra.mxu0 0
    %584 = vmatprep.subr.bf16.mxu0 0
    %585 = vmatpush1.bf16.msra.mxu0 0
    %586 = vmatprep.subr.bf16.mxu0 0
    %587 = vmatpush1.bf16.msra.mxu0 0
    %588 = vmatprep.subr.bf16.mxu0 0
    %589 = vmatpush1.bf16.msra.mxu0 0
    %590 = vmatprep.subr.bf16.mxu0 0
    %591 = vmatpush1.bf16.msra.mxu0 0
    %592 = vmatprep.subr.bf16.mxu0 0
    %593 = vmatpush1.bf16.msra.mxu0 0
    %594 = vmatprep.subr.bf16.mxu0 0
    %595 = vmatpush1.bf16.msra.mxu0 0
    %596 = vmatprep.mubr.bf16.mxu0 0
    %597 = vmatmul.mubr.bf16.gmra.mrb[0].mxu0 %v556
    %v598 = vpop.f32.mrb[0].mxu0
    %v599 = vadd.f32 %v377, %v598
    %v600 = vpop.f32.mrb[0].mxu0
    %v601 = vpop.f32.mrb[0].mxu0
    %v602 = vadd.f32 %v377, %v601
    %v603 = vpop.f32.mrb[0].mxu0
    %604 = vmatprep.mubr.bf16.mxu0 0
    %605 = vmatmul.mubr.bf16.gmra.mrb[0].mxu0 %v557
    %v606 = vpop.f32.mrb[0].mxu0
    %v607 = vadd.f32 %v377, %v606
    %v608 = vpop.f32.mrb[0].mxu0
    %v609 = vpop.f32.mrb[0].mxu0
    %v610 = vadd.f32 %v377, %v609
    %v611 = vpop.f32.mrb[0].mxu0
    %612 = vmatprep.mubr.bf16.mxu0 0
    %613 = vmatmul.mubr.bf16.gmra.mrb[0].mxu0 %v558
    %v614 = vpop.f32.mrb[0].mxu0
    %v615 = vadd.f32 %v377, %v614
    %v616 = vpop.f32.mrb[0].mxu0
    %v617 = vpop.f32.mrb[0].mxu0
    %v618 = vadd.f32 %v377, %v617
    %v619 = vpop.f32.mrb[0].mxu0
    %620 = vmatprep.mubr.bf16.mxu0 0
    %621 = vmatmul.mubr.bf16.gmra.mrb[0].mxu0 %v559
    %v622 = vpop.f32.mrb[0].mxu0
    %v623 = vadd.f32 %v377, %v622
    %v624 = vpop.f32.mrb[0].mxu0
    %v625 = vpop.f32.mrb[0].mxu0
    %v626 = vadd.f32 %v377, %v625
    %v627 = vpop.f32.mrb[0].mxu0
    %628 = vmatprep.mubr.bf16.mxu0 0
    %629 = vmatmul.mubr.bf16.gmra.mrb[0].mxu0 %v560
    %v630 = vpop.f32.mrb[0].mxu0
    %v631 = vadd.f32 %v377, %v630
    %v632 = vpop.f32.mrb[0].mxu0
    %v633 = vpop.f32.mrb[0].mxu0
    %v634 = vadd.f32 %v377, %v633
    %v635 = vpop.f32.mrb[0].mxu0
    %636 = vmatprep.mubr.bf16.mxu0 0
    %637 = vmatmul.mubr.bf16.gmra.mrb[0].mxu0 %v561
    %v638 = vpop.f32.mrb[0].mxu0
    %v639 = vadd.f32 %v377, %v638
    %v640 = vpop.f32.mrb[0].mxu0
    %v641 = vpop.f32.mrb[0].mxu0
    %v642 = vadd.f32 %v377, %v641
    %v643 = vpop.f32.mrb[0].mxu0
    %644 = vmatprep.mubr.bf16.mxu0 0
    %645 = vmatmul.mubr.bf16.gmra.mrb[0].mxu0 %v562
    %v646 = vpop.f32.mrb[0].mxu0
    %v647 = vadd.f32 %v377, %v646
    %v648 = vpop.f32.mrb[0].mxu0
    %v649 = vpop.f32.mrb[0].mxu0
    %v650 = vadd.f32 %v377, %v649
    %v651 = vpop.f32.mrb[0].mxu0
    %652 = vmatprep.mubr.bf16.mxu0 0
    %653 = vmatmul.mubr.bf16.gmra.mrb[0].mxu0 %v563
    %v654 = vpop.f32.mrb[0].mxu0
    %v655 = vadd.f32 %v377, %v654
    %v656 = vpop.f32.mrb[0].mxu0
    %v657 = vpop.f32.mrb[0].mxu0
    %v658 = vadd.f32 %v377, %v657
    %v659 = vpop.f32.mrb[0].mxu0
    %660 = vdwg.mxu0
    %v661 = vmax.f32 %v599, 0.0
    %v662 = vmax.f32 %v602, 0.0
    %v663 = vmax.f32 %v607, 0.0
    %v664 = vmax.f32 %v610, 0.0
    %v665 = vmax.f32 %v615, 0.0
    %v666 = vmax.f32 %v618, 0.0
    %v667 = vmax.f32 %v623, 0.0
    %v668 = vmax.f32 %v626, 0.0
    %v669 = vmax.f32 %v631, 0.0
    %v670 = vmax.f32 %v634, 0.0
    %v671 = vmax.f32 %v639, 0.0
    %v672 = vmax.f32 %v642, 0.0
    %v673 = vmax.f32 %v647, 0.0
    %v674 = vmax.f32 %v650, 0.0
    %v675 = vmax.f32 %v655, 0.0
    %v676 = vmax.f32 %v658, 0.0
    %v677 = vadd.f32 %v661, %v540
    %v678 = vadd.f32 %v662, %v541
    %v679 = vadd.f32 %v663, %v542
    %v680 = vadd.f32 %v664, %v543
    %v681 = vadd.f32 %v665, %v544
    %v682 = vadd.f32 %v666, %v545
    %v683 = vadd.f32 %v667, %v546
    %v684 = vadd.f32 %v668, %v547
    %v685 = vadd.f32 %v669, %v548
    %v686 = vadd.f32 %v670, %v549
    %v687 = vadd.f32 %v671, %v550
    %v688 = vadd.f32 %v672, %v551
    %v689 = vadd.f32 %v673, %v552
    %v690 = vadd.f32 %v674, %v553
    %v691 = vadd.f32 %v675, %v554
    %v692 = vadd.f32 %v676, %v555
    %v693 = vpack.c.bf16 %v678, %v677
    %v694 = vpack.c.bf16 %v680, %v679
    %v695 = vpack.c.bf16 %v682, %v681
    %v696 = vpack.c.bf16 %v684, %v683
    %v697 = vpack.c.bf16 %v686, %v685
    %v698 = vpack.c.bf16 %v688, %v687
    %v699 = vpack.c.bf16 %v690, %v689
    %v700 = vpack.c.bf16 %v692, %v691
    %701 = vmatprep.subr.bf16.mxu0 0
    %702 = vmatpush1.bf16.msra.mxu0 %v411
    %703 = vmatprep.subr.bf16.mxu0 0
    %704 = vmatpush1.bf16.msra.mxu0 %v412
    %705 = vmatprep.subr.bf16.mxu0 0
    %706 = vmatpush1.bf16.msra.mxu0 %v413
    %707 = vmatprep.subr.bf16.mxu0 0
    %708 = vmatpush1.bf16.msra.mxu0 %v414
    %709 = vmatprep.subr.bf16.mxu0 0
    %710 = vmatpush1.bf16.msra.mxu0 %v415
    %711 = vmatprep.subr.bf16.mxu0 0
    %712 = vmatpush1.bf16.msra.mxu0 %v416
    %713 = vmatprep.subr.bf16.mxu0 0
    %714 = vmatpush1.bf16.msra.mxu0 %v417
    %715 = vmatprep.subr.bf16.mxu0 0
    %716 = vmatpush1.bf16.msra.mxu0 %v418
    %717 = vmatprep.subr.bf16.mxu0 0
    %718 = vmatpush1.bf16.msra.mxu0 0
    %719 = vmatprep.subr.bf16.mxu0 0
    %720 = vmatpush1.bf16.msra.mxu0 0
    %721 = vmatprep.subr.bf16.mxu0 0
    %722 = vmatpush1.bf16.msra.mxu0 0
    %723 = vmatprep.subr.bf16.mxu0 0
    %724 = vmatpush1.bf16.msra.mxu0 0
    %725 = vmatprep.subr.bf16.mxu0 0
    %726 = vmatpush1.bf16.msra.mxu0 0
    %727 = vmatprep.subr.bf16.mxu0 0
    %728 = vmatpush1.bf16.msra.mxu0 0
    %729 = vmatprep.subr.bf16.mxu0 0
    %730 = vmatpush1.bf16.msra.mxu0 0
    %731 = vmatprep.subr.bf16.mxu0 0
    %732 = vmatpush1.bf16.msra.mxu0 0
    %733 = vmatprep.mubr.bf16.mxu0 0
    %734 = vmatmul.mubr.bf16.gmra.mrb[0].mxu0 %v693
    %v735 = vpop.f32.mrb[0].mxu0
    %v736 = vadd.f32 %v377, %v735
    %v737 = vpop.f32.mrb[0].mxu0
    %v738 = vpop.f32.mrb[0].mxu0
    %v739 = vadd.f32 %v377, %v738
    %v740 = vpop.f32.mrb[0].mxu0
    %741 = vmatprep.mubr.bf16.mxu0 0
    %742 = vmatmul.mubr.bf16.gmra.mrb[0].mxu0 %v694
    %v743 = vpop.f32.mrb[0].mxu0
    %v744 = vadd.f32 %v377, %v743
    %v745 = vpop.f32.mrb[0].mxu0
    %v746 = vpop.f32.mrb[0].mxu0
    %v747 = vadd.f32 %v377, %v746
    %v748 = vpop.f32.mrb[0].mxu0
    %749 = vmatprep.mubr.bf16.mxu0 0
    %750 = vmatmul.mubr.bf16.gmra.mrb[0].mxu0 %v695
    %v751 = vpop.f32.mrb[0].mxu0
    %v752 = vadd.f32 %v377, %v751
    %v753 = vpop.f32.mrb[0].mxu0
    %v754 = vpop.f32.mrb[0].mxu0
    %v755 = vadd.f32 %v377, %v754
    %v756 = vpop.f32.mrb[0].mxu0
    %757 = vmatprep.mubr.bf16.mxu0 0
    %758 = vmatmul.mubr.bf16.gmra.mrb[0].mxu0 %v696
    %v759 = vpop.f32.mrb[0].mxu0
    %v760 = vadd.f32 %v377, %v759
    %v761 = vpop.f32.mrb[0].mxu0
    %v762 = vpop.f32.mrb[0].mxu0
    %v763 = vadd.f32 %v377, %v762
    %v764 = vpop.f32.mrb[0].mxu0
    %765 = vmatprep.mubr.bf16.mxu0 0
    %766 = vmatmul.mubr.bf16.gmra.mrb[0].mxu0 %v697
    %v767 = vpop.f32.mrb[0].mxu0
    %v768 = vadd.f32 %v377, %v767
    %v769 = vpop.f32.mrb[0].mxu0
    %v770 = vpop.f32.mrb[0].mxu0
    %v771 = vadd.f32 %v377, %v770
    %v772 = vpop.f32.mrb[0].mxu0
    %773 = vmatprep.mubr.bf16.mxu0 0
    %774 = vmatmul.mubr.bf16.gmra.mrb[0].mxu0 %v698
    %v775 = vpop.f32.mrb[0].mxu0
    %v776 = vadd.f32 %v377, %v775
    %v777 = vpop.f32.mrb[0].mxu0
    %v778 = vpop.f32.mrb[0].mxu0
    %v779 = vadd.f32 %v377, %v778
    %v780 = vpop.f32.mrb[0].mxu0
    %781 = vmatprep.mubr.bf16.mxu0 0
    %782 = vmatmul.mubr.bf16.gmra.mrb[0].mxu0 %v699
    %v783 = vpop.f32.mrb[0].mxu0
    %v784 = vadd.f32 %v377, %v783
    %v785 = vpop.f32.mrb[0].mxu0
    %v786 = vpop.f32.mrb[0].mxu0
    %v787 = vadd.f32 %v377, %v786
    %v788 = vpop.f32.mrb[0].mxu0
    %789 = vmatprep.mubr.bf16.mxu0 0
    %790 = vmatmul.mubr.bf16.gmra.mrb[0].mxu0 %v700
    %v791 = vpop.f32.mrb[0].mxu0
    %v792 = vadd.f32 %v377, %v791
    %v793 = vpop.f32.mrb[0].mxu0
    %v794 = vpop.f32.mrb[0].mxu0
    %v795 = vadd.f32 %v377, %v794
    %v796 = vpop.f32.mrb[0].mxu0
    %797 = vdwg.mxu0
    %v798 = vmax.f32 %v736, 0.0
    %v799 = vmax.f32 %v739, 0.0
    %v800 = vmax.f32 %v744, 0.0
    %v801 = vmax.f32 %v747, 0.0
    %v802 = vmax.f32 %v752, 0.0
    %v803 = vmax.f32 %v755, 0.0
    %v804 = vmax.f32 %v760, 0.0
    %v805 = vmax.f32 %v763, 0.0
    %v806 = vmax.f32 %v768, 0.0
    %v807 = vmax.f32 %v771, 0.0
    %v808 = vmax.f32 %v776, 0.0
    %v809 = vmax.f32 %v779, 0.0
    %v810 = vmax.f32 %v784, 0.0
    %v811 = vmax.f32 %v787, 0.0
    %v812 = vmax.f32 %v792, 0.0
    %v813 = vmax.f32 %v795, 0.0
    %v814 = vadd.f32 %v798, %v677
    %v815 = vadd.f32 %v799, %v678
    %v816 = vadd.f32 %v800, %v679
    %v817 = vadd.f32 %v801, %v680
    %v818 = vadd.f32 %v802, %v681
    %v819 = vadd.f32 %v803, %v682
    %v820 = vadd.f32 %v804, %v683
    %v821 = vadd.f32 %v805, %v684
    %v822 = vadd.f32 %v806, %v685
    %v823 = vadd.f32 %v807, %v686
    %v824 = vadd.f32 %v808, %v687
    %v825 = vadd.f32 %v809, %v688
    %v826 = vadd.f32 %v810, %v689
    %v827 = vadd.f32 %v811, %v690
    %v828 = vadd.f32 %v812, %v691
    %v829 = vadd.f32 %v813, %v692
    %v830 = vpack.c.bf16 %v815, %v814
    %v831 = vpack.c.bf16 %v817, %v816
    %v832 = vpack.c.bf16 %v819, %v818
    %v833 = vpack.c.bf16 %v821, %v820
    %v834 = vpack.c.bf16 %v823, %v822
    %v835 = vpack.c.bf16 %v825, %v824
    %v836 = vpack.c.bf16 %v827, %v826
    %v837 = vpack.c.bf16 %v829, %v828
    %838 = vmatprep.subr.bf16.mxu0 0
    %839 = vmatpush1.bf16.msra.mxu0 %v411
    %840 = vmatprep.subr.bf16.mxu0 0
    %841 = vmatpush1.bf16.msra.mxu0 %v412
    %842 = vmatprep.subr.bf16.mxu0 0
    %843 = vmatpush1.bf16.msra.mxu0 %v413
    %844 = vmatprep.subr.bf16.mxu0 0
    %845 = vmatpush1.bf16.msra.mxu0 %v414
    %846 = vmatprep.subr.bf16.mxu0 0
    %847 = vmatpush1.bf16.msra.mxu0 %v415
    %848 = vmatprep.subr.bf16.mxu0 0
    %849 = vmatpush1.bf16.msra.mxu0 %v416
    %850 = vmatprep.subr.bf16.mxu0 0
    %851 = vmatpush1.bf16.msra.mxu0 %v417
    %852 = vmatprep.subr.bf16.mxu0 0
    %853 = vmatpush1.bf16.msra.mxu0 %v418
    %854 = vmatprep.subr.bf16.mxu0 0
    %855 = vmatpush1.bf16.msra.mxu0 0
    %856 = vmatprep.subr.bf16.mxu0 0
    %857 = vmatpush1.bf16.msra.mxu0 0
    %858 = vmatprep.subr.bf16.mxu0 0
    %859 = vmatpush1.bf16.msra.mxu0 0
    %860 = vmatprep.subr.bf16.mxu0 0
    %861 = vmatpush1.bf16.msra.mxu0 0
    %862 = vmatprep.subr.bf16.mxu0 0
    %863 = vmatpush1.bf16.msra.mxu0 0
    %864 = vmatprep.subr.bf16.mxu0 0
    %865 = vmatpush1.bf16.msra.mxu0 0
    %866 = vmatprep.subr.bf16.mxu0 0
    %867 = vmatpush1.bf16.msra.mxu0 0
    %868 = vmatprep.subr.bf16.mxu0 0
    %869 = vmatpush1.bf16.msra.mxu0 0
    %870 = vmatprep.mubr.bf16.mxu0 0
    %871 = vmatmul.mubr.bf16.gmra.mrb[0].mxu0 %v830
    %v872 = vpop.f32.mrb[0].mxu0
    %v873 = vadd.f32 %v377, %v872
    %v874 = vpop.f32.mrb[0].mxu0
    %v875 = vpop.f32.mrb[0].mxu0
    %v876 = vadd.f32 %v377, %v875
    %v877 = vpop.f32.mrb[0].mxu0
    %878 = vmatprep.mubr.bf16.mxu0 0
    %879 = vmatmul.mubr.bf16.gmra.mrb[0].mxu0 %v831
    %v880 = vpop.f32.mrb[0].mxu0
    %v881 = vadd.f32 %v377, %v880
    %v882 = vpop.f32.mrb[0].mxu0
    %v883 = vpop.f32.mrb[0].mxu0
    %v884 = vadd.f32 %v377, %v883
    %v885 = vpop.f32.mrb[0].mxu0
    %886 = vmatprep.mubr.bf16.mxu0 0
    %887 = vmatmul.mubr.bf16.gmra.mrb[0].mxu0 %v832
    %v888 = vpop.f32.mrb[0].mxu0
    %v889 = vadd.f32 %v377, %v888
    %v890 = vpop.f32.mrb[0].mxu0
    %v891 = vpop.f32.mrb[0].mxu0
    %v892 = vadd.f32 %v377, %v891
    %v893 = vpop.f32.mrb[0].mxu0
    %894 = vmatprep.mubr.bf16.mxu0 0
    %895 = vmatmul.mubr.bf16.gmra.mrb[0].mxu0 %v833
    %v896 = vpop.f32.mrb[0].mxu0
    %v897 = vadd.f32 %v377, %v896
    %v898 = vpop.f32.mrb[0].mxu0
    %v899 = vpop.f32.mrb[0].mxu0
    %v900 = vadd.f32 %v377, %v899
    %v901 = vpop.f32.mrb[0].mxu0
    %902 = vmatprep.mubr.bf16.mxu0 0
    %903 = vmatmul.mubr.bf16.gmra.mrb[0].mxu0 %v834
    %v904 = vpop.f32.mrb[0].mxu0
    %v905 = vadd.f32 %v377, %v904
    %v906 = vpop.f32.mrb[0].mxu0
    %v907 = vpop.f32.mrb[0].mxu0
    %v908 = vadd.f32 %v377, %v907
    %v909 = vpop.f32.mrb[0].mxu0
    %910 = vmatprep.mubr.bf16.mxu0 0
    %911 = vmatmul.mubr.bf16.gmra.mrb[0].mxu0 %v835
    %v912 = vpop.f32.mrb[0].mxu0
    %v913 = vadd.f32 %v377, %v912
    %v914 = vpop.f32.mrb[0].mxu0
    %v915 = vpop.f32.mrb[0].mxu0
    %v916 = vadd.f32 %v377, %v915
    %v917 = vpop.f32.mrb[0].mxu0
    %918 = vmatprep.mubr.bf16.mxu0 0
    %919 = vmatmul.mubr.bf16.gmra.mrb[0].mxu0 %v836
    %v920 = vpop.f32.mrb[0].mxu0
    %v921 = vadd.f32 %v377, %v920
    %v922 = vpop.f32.mrb[0].mxu0
    %v923 = vpop.f32.mrb[0].mxu0
    %v924 = vadd.f32 %v377, %v923
    %v925 = vpop.f32.mrb[0].mxu0
    %926 = vmatprep.mubr.bf16.mxu0 0
    %927 = vmatmul.mubr.bf16.gmra.mrb[0].mxu0 %v837
    %v928 = vpop.f32.mrb[0].mxu0
    %v929 = vadd.f32 %v377, %v928
    %v930 = vpop.f32.mrb[0].mxu0
    %v931 = vpop.f32.mrb[0].mxu0
    %v932 = vadd.f32 %v377, %v931
    %v933 = vpop.f32.mrb[0].mxu0
    %934 = vdwg.mxu0
    %v935 = vmax.f32 %v873, 0.0
    %v936 = vmax.f32 %v876, 0.0
    %v937 = vmax.f32 %v881, 0.0
    %v938 = vmax.f32 %v884, 0.0
    %v939 = vmax.f32 %v889, 0.0
    %v940 = vmax.f32 %v892, 0.0
    %v941 = vmax.f32 %v897, 0.0
    %v942 = vmax.f32 %v900, 0.0
    %v943 = vmax.f32 %v905, 0.0
    %v944 = vmax.f32 %v908, 0.0
    %v945 = vmax.f32 %v913, 0.0
    %v946 = vmax.f32 %v916, 0.0
    %v947 = vmax.f32 %v921, 0.0
    %v948 = vmax.f32 %v924, 0.0
    %v949 = vmax.f32 %v929, 0.0
    %v950 = vmax.f32 %v932, 0.0
    %v951 = vadd.f32 %v935, %v814
    %v952 = vadd.f32 %v936, %v815
    %v953 = vadd.f32 %v937, %v816
    %v954 = vadd.f32 %v938, %v817
    %v955 = vadd.f32 %v939, %v818
    %v956 = vadd.f32 %v940, %v819
    %v957 = vadd.f32 %v941, %v820
    %v958 = vadd.f32 %v942, %v821
    %v959 = vadd.f32 %v943, %v822
    %v960 = vadd.f32 %v944, %v823
    %v961 = vadd.f32 %v945, %v824
    %v962 = vadd.f32 %v946, %v825
    %v963 = vadd.f32 %v947, %v826
    %v964 = vadd.f32 %v948, %v827
    %v965 = vadd.f32 %v949, %v828
    %v966 = vadd.f32 %v950, %v829
    %v967 = vpack.c.bf16 %v952, %v951
    %v968 = vpack.c.bf16 %v954, %v953
    %v969 = vpack.c.bf16 %v956, %v955
    %v970 = vpack.c.bf16 %v958, %v957
    %v971 = vpack.c.bf16 %v960, %v959
    %v972 = vpack.c.bf16 %v962, %v961
    %v973 = vpack.c.bf16 %v964, %v963
    %v974 = vpack.c.bf16 %v966, %v965
    %975 = vmatprep.subr.bf16.mxu0 0
    %976 = vmatpush1.bf16.msra.mxu0 %v411
    %977 = vmatprep.subr.bf16.mxu0 0
    %978 = vmatpush1.bf16.msra.mxu0 %v412
    %979 = vmatprep.subr.bf16.mxu0 0
    %980 = vmatpush1.bf16.msra.mxu0 %v413
    %981 = vmatprep.subr.bf16.mxu0 0
    %982 = vmatpush1.bf16.msra.mxu0 %v414
    %983 = vmatprep.subr.bf16.mxu0 0
    %984 = vmatpush1.bf16.msra.mxu0 %v415
    %985 = vmatprep.subr.bf16.mxu0 0
    %986 = vmatpush1.bf16.msra.mxu0 %v416
    %987 = vmatprep.subr.bf16.mxu0 0
    %988 = vmatpush1.bf16.msra.mxu0 %v417
    %989 = vmatprep.subr.bf16.mxu0 0
    %990 = vmatpush1.bf16.msra.mxu0 %v418
    %991 = vmatprep.subr.bf16.mxu0 0
    %992 = vmatpush1.bf16.msra.mxu0 0
    %993 = vmatprep.subr.bf16.mxu0 0
    %994 = vmatpush1.bf16.msra.mxu0 0
    %995 = vmatprep.subr.bf16.mxu0 0
    %996 = vmatpush1.bf16.msra.mxu0 0
    %997 = vmatprep.subr.bf16.mxu0 0
    %998 = vmatpush1.bf16.msra.mxu0 0
    %999 = vmatprep.subr.bf16.mxu0 0
    %1000 = vmatpush1.bf16.msra.mxu0 0
    %1001 = vmatprep.subr.bf16.mxu0 0
    %1002 = vmatpush1.bf16.msra.mxu0 0
    %1003 = vmatprep.subr.bf16.mxu0 0
    %1004 = vmatpush1.bf16.msra.mxu0 0
    %1005 = vmatprep.subr.bf16.mxu0 0
    %1006 = vmatpush1.bf16.msra.mxu0 0
    %1007 = vmatprep.mubr.bf16.mxu0 0
    %1008 = vmatmul.mubr.bf16.gmra.mrb[0].mxu0 %v967
    %v1009 = vpop.f32.mrb[0].mxu0
    %v1010 = vadd.f32 %v377, %v1009
    %v1011 = vpop.f32.mrb[0].mxu0
    %v1012 = vpop.f32.mrb[0].mxu0
    %v1013 = vadd.f32 %v377, %v1012
    %v1014 = vpop.f32.mrb[0].mxu0
    %1015 = vmatprep.mubr.bf16.mxu0 0
    %1016 = vmatmul.mubr.bf16.gmra.mrb[0].mxu0 %v968
    %v1017 = vpop.f32.mrb[0].mxu0
    %v1018 = vadd.f32 %v377, %v1017
    %v1019 = vpop.f32.mrb[0].mxu0
    %v1020 = vpop.f32.mrb[0].mxu0
    %v1021 = vadd.f32 %v377, %v1020
    %v1022 = vpop.f32.mrb[0].mxu0
    %1023 = vmatprep.mubr.bf16.mxu0 0
    %1024 = vmatmul.mubr.bf16.gmra.mrb[0].mxu0 %v969
    %v1025 = vpop.f32.mrb[0].mxu0
    %v1026 = vadd.f32 %v377, %v1025
    %v1027 = vpop.f32.mrb[0].mxu0
    %v1028 = vpop.f32.mrb[0].mxu0
    %v1029 = vadd.f32 %v377, %v1028
    %v1030 = vpop.f32.mrb[0].mxu0
    %1031 = vmatprep.mubr.bf16.mxu0 0
    %1032 = vmatmul.mubr.bf16.gmra.mrb[0].mxu0 %v970
    %v1033 = vpop.f32.mrb[0].mxu0
    %v1034 = vadd.f32 %v377, %v1033
    %v1035 = vpop.f32.mrb[0].mxu0
    %v1036 = vpop.f32.mrb[0].mxu0
    %v1037 = vadd.f32 %v377, %v1036
    %v1038 = vpop.f32.mrb[0].mxu0
    %1039 = vmatprep.mubr.bf16.mxu0 0
    %1040 = vmatmul.mubr.bf16.gmra.mrb[0].mxu0 %v971
    %v1041 = vpop.f32.mrb[0].mxu0
    %v1042 = vadd.f32 %v377, %v1041
    %v1043 = vpop.f32.mrb[0].mxu0
    %v1044 = vpop.f32.mrb[0].mxu0
    %v1045 = vadd.f32 %v377, %v1044
    %v1046 = vpop.f32.mrb[0].mxu0
    %1047 = vmatprep.mubr.bf16.mxu0 0
    %1048 = vmatmul.mubr.bf16.gmra.mrb[0].mxu0 %v972
    %v1049 = vpop.f32.mrb[0].mxu0
    %v1050 = vadd.f32 %v377, %v1049
    %v1051 = vpop.f32.mrb[0].mxu0
    %v1052 = vpop.f32.mrb[0].mxu0
    %v1053 = vadd.f32 %v377, %v1052
    %v1054 = vpop.f32.mrb[0].mxu0
    %1055 = vmatprep.mubr.bf16.mxu0 0
    %1056 = vmatmul.mubr.bf16.gmra.mrb[0].mxu0 %v973
    %v1057 = vpop.f32.mrb[0].mxu0
    %v1058 = vadd.f32 %v377, %v1057
    %v1059 = vpop.f32.mrb[0].mxu0
    %v1060 = vpop.f32.mrb[0].mxu0
    %v1061 = vadd.f32 %v377, %v1060
    %v1062 = vpop.f32.mrb[0].mxu0
    %1063 = vmatprep.mubr.bf16.mxu0 0
    %1064 = vmatmul.mubr.bf16.gmra.mrb[0].mxu0 %v974
    %v1065 = vpop.f32.mrb[0].mxu0
    %v1066 = vadd.f32 %v377, %v1065
    %v1067 = vpop.f32.mrb[0].mxu0
    %v1068 = vpop.f32.mrb[0].mxu0
    %v1069 = vadd.f32 %v377, %v1068
    %v1070 = vpop.f32.mrb[0].mxu0
    %1071 = vdwg.mxu0
    %v1072 = vmax.f32 %v1010, 0.0
    %v1073 = vmax.f32 %v1013, 0.0
    %v1074 = vmax.f32 %v1018, 0.0
    %v1075 = vmax.f32 %v1021, 0.0
    %v1076 = vmax.f32 %v1026, 0.0
    %v1077 = vmax.f32 %v1029, 0.0
    %v1078 = vmax.f32 %v1034, 0.0
    %v1079 = vmax.f32 %v1037, 0.0
    %v1080 = vmax.f32 %v1042, 0.0
    %v1081 = vmax.f32 %v1045, 0.0
    %v1082 = vmax.f32 %v1050, 0.0
    %v1083 = vmax.f32 %v1053, 0.0
    %v1084 = vmax.f32 %v1058, 0.0
    %v1085 = vmax.f32 %v1061, 0.0
    %v1086 = vmax.f32 %v1066, 0.0
    %v1087 = vmax.f32 %v1069, 0.0
    %v1088 = vadd.f32 %v1072, %v951
    %v1089 = vadd.f32 %v1073, %v952
    %v1090 = vadd.f32 %v1074, %v953
    %v1091 = vadd.f32 %v1075, %v954
    %v1092 = vadd.f32 %v1076, %v955
    %v1093 = vadd.f32 %v1077, %v956
    %v1094 = vadd.f32 %v1078, %v957
    %v1095 = vadd.f32 %v1079, %v958
    %v1096 = vadd.f32 %v1080, %v959
    %v1097 = vadd.f32 %v1081, %v960
    %v1098 = vadd.f32 %v1082, %v961
    %v1099 = vadd.f32 %v1083, %v962
    %v1100 = vadd.f32 %v1084, %v963
    %v1101 = vadd.f32 %v1085, %v964
    %v1102 = vadd.f32 %v1086, %v965
    %v1103 = vadd.f32 %v1087, %v966
    %v1104 = vpack.c.bf16 %v1089, %v1088
    %v1105 = vpack.c.bf16 %v1091, %v1090
    %v1106 = vpack.c.bf16 %v1093, %v1092
    %v1107 = vpack.c.bf16 %v1095, %v1094
    %v1108 = vpack.c.bf16 %v1097, %v1096
    %v1109 = vpack.c.bf16 %v1099, %v1098
    %v1110 = vpack.c.bf16 %v1101, %v1100
    %v1111 = vpack.c.bf16 %v1103, %v1102
    %1112 = vmatprep.subr.bf16.mxu0 0
    %1113 = vmatpush1.bf16.msra.mxu0 %v411
    %1114 = vmatprep.subr.bf16.mxu0 0
    %1115 = vmatpush1.bf16.msra.mxu0 %v412
    %1116 = vmatprep.subr.bf16.mxu0 0
    %1117 = vmatpush1.bf16.msra.mxu0 %v413
    %1118 = vmatprep.subr.bf16.mxu0 0
    %1119 = vmatpush1.bf16.msra.mxu0 %v414
    %1120 = vmatprep.subr.bf16.mxu0 0
    %1121 = vmatpush1.bf16.msra.mxu0 %v415
    %1122 = vmatprep.subr.bf16.mxu0 0
    %1123 = vmatpush1.bf16.msra.mxu0 %v416
    %1124 = vmatprep.subr.bf16.mxu0 0
    %1125 = vmatpush1.bf16.msra.mxu0 %v417
    %1126 = vmatprep.subr.bf16.mxu0 0
    %1127 = vmatpush1.bf16.msra.mxu0 %v418
    %1128 = vmatprep.subr.bf16.mxu0 0
    %1129 = vmatpush1.bf16.msra.mxu0 0
    %1130 = vmatprep.subr.bf16.mxu0 0
    %1131 = vmatpush1.bf16.msra.mxu0 0
    %1132 = vmatprep.subr.bf16.mxu0 0
    %1133 = vmatpush1.bf16.msra.mxu0 0
    %1134 = vmatprep.subr.bf16.mxu0 0
    %1135 = vmatpush1.bf16.msra.mxu0 0
    %1136 = vmatprep.subr.bf16.mxu0 0
    %1137 = vmatpush1.bf16.msra.mxu0 0
    %1138 = vmatprep.subr.bf16.mxu0 0
    %1139 = vmatpush1.bf16.msra.mxu0 0
    %1140 = vmatprep.subr.bf16.mxu0 0
    %1141 = vmatpush1.bf16.msra.mxu0 0
    %1142 = vmatprep.subr.bf16.mxu0 0
    %1143 = vmatpush1.bf16.msra.mxu0 0
    %1144 = vmatprep.mubr.bf16.mxu0 0
    %1145 = vmatmul.mubr.bf16.gmra.mrb[0].mxu0 %v1104
    %v1146 = vpop.f32.mrb[0].mxu0
    %v1147 = vadd.f32 %v377, %v1146
    %v1148 = vpop.f32.mrb[0].mxu0
    %v1149 = vpop.f32.mrb[0].mxu0
    %v1150 = vadd.f32 %v377, %v1149
    %v1151 = vpop.f32.mrb[0].mxu0
    %1152 = vmatprep.mubr.bf16.mxu0 0
    %1153 = vmatmul.mubr.bf16.gmra.mrb[0].mxu0 %v1105
    %v1154 = vpop.f32.mrb[0].mxu0
    %v1155 = vadd.f32 %v377, %v1154
    %v1156 = vpop.f32.mrb[0].mxu0
    %v1157 = vpop.f32.mrb[0].mxu0
    %v1158 = vadd.f32 %v377, %v1157
    %v1159 = vpop.f32.mrb[0].mxu0
    %1160 = vmatprep.mubr.bf16.mxu0 0
    %1161 = vmatmul.mubr.bf16.gmra.mrb[0].mxu0 %v1106
    %v1162 = vpop.f32.mrb[0].mxu0
    %v1163 = vadd.f32 %v377, %v1162
    %v1164 = vpop.f32.mrb[0].mxu0
    %v1165 = vpop.f32.mrb[0].mxu0
    %v1166 = vadd.f32 %v377, %v1165
    %v1167 = vpop.f32.mrb[0].mxu0
    %1168 = vmatprep.mubr.bf16.mxu0 0
    %1169 = vmatmul.mubr.bf16.gmra.mrb[0].mxu0 %v1107
    %v1170 = vpop.f32.mrb[0].mxu0
    %v1171 = vadd.f32 %v377, %v1170
    %v1172 = vpop.f32.mrb[0].mxu0
    %v1173 = vpop.f32.mrb[0].mxu0
    %v1174 = vadd.f32 %v377, %v1173
    %v1175 = vpop.f32.mrb[0].mxu0
    %1176 = vmatprep.mubr.bf16.mxu0 0
    %1177 = vmatmul.mubr.bf16.gmra.mrb[0].mxu0 %v1108
    %v1178 = vpop.f32.mrb[0].mxu0
    %v1179 = vadd.f32 %v377, %v1178
    %v1180 = vpop.f32.mrb[0].mxu0
    %v1181 = vpop.f32.mrb[0].mxu0
    %v1182 = vadd.f32 %v377, %v1181
    %v1183 = vpop.f32.mrb[0].mxu0
    %1184 = vmatprep.mubr.bf16.mxu0 0
    %1185 = vmatmul.mubr.bf16.gmra.mrb[0].mxu0 %v1109
    %v1186 = vpop.f32.mrb[0].mxu0
    %v1187 = vadd.f32 %v377, %v1186
    %v1188 = vpop.f32.mrb[0].mxu0
    %v1189 = vpop.f32.mrb[0].mxu0
    %v1190 = vadd.f32 %v377, %v1189
    %v1191 = vpop.f32.mrb[0].mxu0
    %1192 = vmatprep.mubr.bf16.mxu0 0
    %1193 = vmatmul.mubr.bf16.gmra.mrb[0].mxu0 %v1110
    %v1194 = vpop.f32.mrb[0].mxu0
    %v1195 = vadd.f32 %v377, %v1194
    %v1196 = vpop.f32.mrb[0].mxu0
    %v1197 = vpop.f32.mrb[0].mxu0
    %v1198 = vadd.f32 %v377, %v1197
    %v1199 = vpop.f32.mrb[0].mxu0
    %1200 = vmatprep.mubr.bf16.mxu0 0
    %1201 = vmatmul.mubr.bf16.gmra.mrb[0].mxu0 %v1111
    %v1202 = vpop.f32.mrb[0].mxu0
    %v1203 = vadd.f32 %v377, %v1202
    %v1204 = vpop.f32.mrb[0].mxu0
    %v1205 = vpop.f32.mrb[0].mxu0
    %v1206 = vadd.f32 %v377, %v1205
    %v1207 = vpop.f32.mrb[0].mxu0
    %1208 = vdwg.mxu0
    %v1209 = vmax.f32 %v1147, 0.0
    %v1210 = vmax.f32 %v1150, 0.0
    %v1211 = vmax.f32 %v1155, 0.0
    %v1212 = vmax.f32 %v1158, 0.0
    %v1213 = vmax.f32 %v1163, 0.0
    %v1214 = vmax.f32 %v1166, 0.0
    %v1215 = vmax.f32 %v1171, 0.0
    %v1216 = vmax.f32 %v1174, 0.0
    %v1217 = vmax.f32 %v1179, 0.0
    %v1218 = vmax.f32 %v1182, 0.0
    %v1219 = vmax.f32 %v1187, 0.0
    %v1220 = vmax.f32 %v1190, 0.0
    %v1221 = vmax.f32 %v1195, 0.0
    %v1222 = vmax.f32 %v1198, 0.0
    %v1223 = vmax.f32 %v1203, 0.0
    %v1224 = vmax.f32 %v1206, 0.0
    %v1225 = vadd.f32 %v1209, %v1088
    %v1226 = vadd.f32 %v1210, %v1089
    %v1227 = vadd.f32 %v1211, %v1090
    %v1228 = vadd.f32 %v1212, %v1091
    %v1229 = vadd.f32 %v1213, %v1092
    %v1230 = vadd.f32 %v1214, %v1093
    %v1231 = vadd.f32 %v1215, %v1094
    %v1232 = vadd.f32 %v1216, %v1095
    %v1233 = vadd.f32 %v1217, %v1096
    %v1234 = vadd.f32 %v1218, %v1097
    %v1235 = vadd.f32 %v1219, %v1098
    %v1236 = vadd.f32 %v1220, %v1099
    %v1237 = vadd.f32 %v1221, %v1100
    %v1238 = vadd.f32 %v1222, %v1101
    %v1239 = vadd.f32 %v1223, %v1102
    %v1240 = vadd.f32 %v1224, %v1103
    %v1241 = vpack.c.bf16 %v1226, %v1225
    %v1242 = vpack.c.bf16 %v1228, %v1227
    %v1243 = vpack.c.bf16 %v1230, %v1229
    %v1244 = vpack.c.bf16 %v1232, %v1231
    %v1245 = vpack.c.bf16 %v1234, %v1233
    %v1246 = vpack.c.bf16 %v1236, %v1235
    %v1247 = vpack.c.bf16 %v1238, %v1237
    %v1248 = vpack.c.bf16 %v1240, %v1239
    %1249 = vmatprep.subr.bf16.mxu0 0
    %1250 = vmatpush1.bf16.msra.mxu0 %v411
    %1251 = vmatprep.subr.bf16.mxu0 0
    %1252 = vmatpush1.bf16.msra.mxu0 %v412
    %1253 = vmatprep.subr.bf16.mxu0 0
    %1254 = vmatpush1.bf16.msra.mxu0 %v413
    %1255 = vmatprep.subr.bf16.mxu0 0
    %1256 = vmatpush1.bf16.msra.mxu0 %v414
    %1257 = vmatprep.subr.bf16.mxu0 0
    %1258 = vmatpush1.bf16.msra.mxu0 %v415
    %1259 = vmatprep.subr.bf16.mxu0 0
    %1260 = vmatpush1.bf16.msra.mxu0 %v416
    %1261 = vmatprep.subr.bf16.mxu0 0
    %1262 = vmatpush1.bf16.msra.mxu0 %v417
    %1263 = vmatprep.subr.bf16.mxu0 0
    %1264 = vmatpush1.bf16.msra.mxu0 %v418
    %1265 = vmatprep.subr.bf16.mxu0 0
    %1266 = vmatpush1.bf16.msra.mxu0 0
    %1267 = vmatprep.subr.bf16.mxu0 0
    %1268 = vmatpush1.bf16.msra.mxu0 0
    %1269 = vmatprep.subr.bf16.mxu0 0
    %1270 = vmatpush1.bf16.msra.mxu0 0
    %1271 = vmatprep.subr.bf16.mxu0 0
    %1272 = vmatpush1.bf16.msra.mxu0 0
    %1273 = vmatprep.subr.bf16.mxu0 0
    %1274 = vmatpush1.bf16.msra.mxu0 0
    %1275 = vmatprep.subr.bf16.mxu0 0
    %1276 = vmatpush1.bf16.msra.mxu0 0
    %1277 = vmatprep.subr.bf16.mxu0 0
    %1278 = vmatpush1.bf16.msra.mxu0 0
    %1279 = vmatprep.subr.bf16.mxu0 0
    %1280 = vmatpush1.bf16.msra.mxu0 0
    %1281 = vmatprep.mubr.bf16.mxu0 0
    %1282 = vmatmul.mubr.bf16.gmra.mrb[0].mxu0 %v1241
    %v1283 = vpop.f32.mrb[0].mxu0
    %v1284 = vadd.f32 %v377, %v1283
    %v1285 = vpop.f32.mrb[0].mxu0
    %v1286 = vpop.f32.mrb[0].mxu0
    %v1287 = vadd.f32 %v377, %v1286
    %v1288 = vpop.f32.mrb[0].mxu0
    %1289 = vmatprep.mubr.bf16.mxu0 0
    %1290 = vmatmul.mubr.bf16.gmra.mrb[0].mxu0 %v1242
    %v1291 = vpop.f32.mrb[0].mxu0
    %v1292 = vadd.f32 %v377, %v1291
    %v1293 = vpop.f32.mrb[0].mxu0
    %v1294 = vpop.f32.mrb[0].mxu0
    %v1295 = vadd.f32 %v377, %v1294
    %v1296 = vpop.f32.mrb[0].mxu0
    %1297 = vmatprep.mubr.bf16.mxu0 0
    %1298 = vmatmul.mubr.bf16.gmra.mrb[0].mxu0 %v1243
    %v1299 = vpop.f32.mrb[0].mxu0
    %v1300 = vadd.f32 %v377, %v1299
    %v1301 = vpop.f32.mrb[0].mxu0
    %v1302 = vpop.f32.mrb[0].mxu0
    %v1303 = vadd.f32 %v377, %v1302
    %v1304 = vpop.f32.mrb[0].mxu0
    %1305 = vmatprep.mubr.bf16.mxu0 0
    %1306 = vmatmul.mubr.bf16.gmra.mrb[0].mxu0 %v1244
    %v1307 = vpop.f32.mrb[0].mxu0
    %v1308 = vadd.f32 %v377, %v1307
    %v1309 = vpop.f32.mrb[0].mxu0
    %v1310 = vpop.f32.mrb[0].mxu0
    %v1311 = vadd.f32 %v377, %v1310
    %v1312 = vpop.f32.mrb[0].mxu0
    %1313 = vmatprep.mubr.bf16.mxu0 0
    %1314 = vmatmul.mubr.bf16.gmra.mrb[0].mxu0 %v1245
    %v1315 = vpop.f32.mrb[0].mxu0
    %v1316 = vadd.f32 %v377, %v1315
    %v1317 = vpop.f32.mrb[0].mxu0
    %v1318 = vpop.f32.mrb[0].mxu0
    %v1319 = vadd.f32 %v377, %v1318
    %v1320 = vpop.f32.mrb[0].mxu0
    %1321 = vmatprep.mubr.bf16.mxu0 0
    %1322 = vmatmul.mubr.bf16.gmra.mrb[0].mxu0 %v1246
    %v1323 = vpop.f32.mrb[0].mxu0
    %v1324 = vadd.f32 %v377, %v1323
    %v1325 = vpop.f32.mrb[0].mxu0
    %v1326 = vpop.f32.mrb[0].mxu0
    %v1327 = vadd.f32 %v377, %v1326
    %v1328 = vpop.f32.mrb[0].mxu0
    %1329 = vmatprep.mubr.bf16.mxu0 0
    %1330 = vmatmul.mubr.bf16.gmra.mrb[0].mxu0 %v1247
    %v1331 = vpop.f32.mrb[0].mxu0
    %v1332 = vadd.f32 %v377, %v1331
    %v1333 = vpop.f32.mrb[0].mxu0
    %v1334 = vpop.f32.mrb[0].mxu0
    %v1335 = vadd.f32 %v377, %v1334
    %v1336 = vpop.f32.mrb[0].mxu0
    %1337 = vmatprep.mubr.bf16.mxu0 0
    %1338 = vmatmul.mubr.bf16.gmra.mrb[0].mxu0 %v1248
    %v1339 = vpop.f32.mrb[0].mxu0
    %v1340 = vadd.f32 %v377, %v1339
    %v1341 = vpop.f32.mrb[0].mxu0
    %v1342 = vpop.f32.mrb[0].mxu0
    %v1343 = vadd.f32 %v377, %v1342
    %v1344 = vpop.f32.mrb[0].mxu0
    %1345 = vdwg.mxu0
    %v1346 = vmax.f32 %v1284, 0.0
    %v1347 = vmax.f32 %v1287, 0.0
    %v1348 = vmax.f32 %v1292, 0.0
    %v1349 = vmax.f32 %v1295, 0.0
    %v1350 = vmax.f32 %v1300, 0.0
    %v1351 = vmax.f32 %v1303, 0.0
    %v1352 = vmax.f32 %v1308, 0.0
    %v1353 = vmax.f32 %v1311, 0.0
    %v1354 = vmax.f32 %v1316, 0.0
    %v1355 = vmax.f32 %v1319, 0.0
    %v1356 = vmax.f32 %v1324, 0.0
    %v1357 = vmax.f32 %v1327, 0.0
    %v1358 = vmax.f32 %v1332, 0.0
    %v1359 = vmax.f32 %v1335, 0.0
    %v1360 = vmax.f32 %v1340, 0.0
    %v1361 = vmax.f32 %v1343, 0.0
    %v1362 = vadd.f32 %v1346, %v1225
    %v1363 = vadd.f32 %v1347, %v1226
    %v1364 = vadd.f32 %v1348, %v1227
    %v1365 = vadd.f32 %v1349, %v1228
    %v1366 = vadd.f32 %v1350, %v1229
    %v1367 = vadd.f32 %v1351, %v1230
    %v1368 = vadd.f32 %v1352, %v1231
    %v1369 = vadd.f32 %v1353, %v1232
    %v1370 = vadd.f32 %v1354, %v1233
    %v1371 = vadd.f32 %v1355, %v1234
    %v1372 = vadd.f32 %v1356, %v1235
    %v1373 = vadd.f32 %v1357, %v1236
    %v1374 = vadd.f32 %v1358, %v1237
    %v1375 = vadd.f32 %v1359, %v1238
    %v1376 = vadd.f32 %v1360, %v1239
    %v1377 = vadd.f32 %v1361, %v1240
    %v1378 = vpack.c.bf16 %v1363, %v1362
    %v1379 = vpack.c.bf16 %v1365, %v1364
    %v1380 = vpack.c.bf16 %v1367, %v1366
    %v1381 = vpack.c.bf16 %v1369, %v1368
    %v1382 = vpack.c.bf16 %v1371, %v1370
    %v1383 = vpack.c.bf16 %v1373, %v1372
    %v1384 = vpack.c.bf16 %v1375, %v1374
    %v1385 = vpack.c.bf16 %v1377, %v1376
    %1386 = vmatprep.subr.bf16.mxu0 0
    %1387 = vmatpush1.bf16.msra.mxu0 %v411
    %1388 = vmatprep.subr.bf16.mxu0 0
    %1389 = vmatpush1.bf16.msra.mxu0 %v412
    %1390 = vmatprep.subr.bf16.mxu0 0
    %1391 = vmatpush1.bf16.msra.mxu0 %v413
    %1392 = vmatprep.subr.bf16.mxu0 0
    %1393 = vmatpush1.bf16.msra.mxu0 %v414
    %1394 = vmatprep.subr.bf16.mxu0 0
    %1395 = vmatpush1.bf16.msra.mxu0 %v415
    %1396 = vmatprep.subr.bf16.mxu0 0
    %1397 = vmatpush1.bf16.msra.mxu0 %v416
    %1398 = vmatprep.subr.bf16.mxu0 0
    %1399 = vmatpush1.bf16.msra.mxu0 %v417
    %1400 = vmatprep.subr.bf16.mxu0 0
    %1401 = vmatpush1.bf16.msra.mxu0 %v418
    %1402 = vmatprep.subr.bf16.mxu0 0
    %1403 = vmatpush1.bf16.msra.mxu0 0
    %1404 = vmatprep.subr.bf16.mxu0 0
    %1405 = vmatpush1.bf16.msra.mxu0 0
    %1406 = vmatprep.subr.bf16.mxu0 0
    %1407 = vmatpush1.bf16.msra.mxu0 0
    %1408 = vmatprep.subr.bf16.mxu0 0
    %1409 = vmatpush1.bf16.msra.mxu0 0
    %1410 = vmatprep.subr.bf16.mxu0 0
    %1411 = vmatpush1.bf16.msra.mxu0 0
    %1412 = vmatprep.subr.bf16.mxu0 0
    %1413 = vmatpush1.bf16.msra.mxu0 0
    %1414 = vmatprep.subr.bf16.mxu0 0
    %1415 = vmatpush1.bf16.msra.mxu0 0
    %1416 = vmatprep.subr.bf16.mxu0 0
    %1417 = vmatpush1.bf16.msra.mxu0 0
    %1418 = vmatprep.mubr.bf16.mxu0 0
    %1419 = vmatmul.mubr.bf16.gmra.mrb[0].mxu0 %v1378
    %v1420 = vpop.f32.mrb[0].mxu0
    %v1421 = vadd.f32 %v377, %v1420
    %v1422 = vpop.f32.mrb[0].mxu0
    %v1423 = vpop.f32.mrb[0].mxu0
    %v1424 = vadd.f32 %v377, %v1423
    %v1425 = vpop.f32.mrb[0].mxu0
    %1426 = vmatprep.mubr.bf16.mxu0 0
    %1427 = vmatmul.mubr.bf16.gmra.mrb[0].mxu0 %v1379
    %v1428 = vpop.f32.mrb[0].mxu0
    %v1429 = vadd.f32 %v377, %v1428
    %v1430 = vpop.f32.mrb[0].mxu0
    %v1431 = vpop.f32.mrb[0].mxu0
    %v1432 = vadd.f32 %v377, %v1431
    %v1433 = vpop.f32.mrb[0].mxu0
    %1434 = vmatprep.mubr.bf16.mxu0 0
    %1435 = vmatmul.mubr.bf16.gmra.mrb[0].mxu0 %v1380
    %v1436 = vpop.f32.mrb[0].mxu0
    %v1437 = vadd.f32 %v377, %v1436
    %v1438 = vpop.f32.mrb[0].mxu0
    %v1439 = vpop.f32.mrb[0].mxu0
    %v1440 = vadd.f32 %v377, %v1439
    %v1441 = vpop.f32.mrb[0].mxu0
    %1442 = vmatprep.mubr.bf16.mxu0 0
    %1443 = vmatmul.mubr.bf16.gmra.mrb[0].mxu0 %v1381
    %v1444 = vpop.f32.mrb[0].mxu0
    %v1445 = vadd.f32 %v377, %v1444
    %v1446 = vpop.f32.mrb[0].mxu0
    %v1447 = vpop.f32.mrb[0].mxu0
    %v1448 = vadd.f32 %v377, %v1447
    %v1449 = vpop.f32.mrb[0].mxu0
    %1450 = vmatprep.mubr.bf16.mxu0 0
    %1451 = vmatmul.mubr.bf16.gmra.mrb[0].mxu0 %v1382
    %v1452 = vpop.f32.mrb[0].mxu0
    %v1453 = vadd.f32 %v377, %v1452
    %v1454 = vpop.f32.mrb[0].mxu0
    %v1455 = vpop.f32.mrb[0].mxu0
    %v1456 = vadd.f32 %v377, %v1455
    %v1457 = vpop.f32.mrb[0].mxu0
    %1458 = vmatprep.mubr.bf16.mxu0 0
    %1459 = vmatmul.mubr.bf16.gmra.mrb[0].mxu0 %v1383
    %v1460 = vpop.f32.mrb[0].mxu0
    %v1461 = vadd.f32 %v377, %v1460
    %v1462 = vpop.f32.mrb[0].mxu0
    %v1463 = vpop.f32.mrb[0].mxu0
    %v1464 = vadd.f32 %v377, %v1463
    %v1465 = vpop.f32.mrb[0].mxu0
    %1466 = vmatprep.mubr.bf16.mxu0 0
    %1467 = vmatmul.mubr.bf16.gmra.mrb[0].mxu0 %v1384
    %v1468 = vpop.f32.mrb[0].mxu0
    %v1469 = vadd.f32 %v377, %v1468
    %v1470 = vpop.f32.mrb[0].mxu0
    %v1471 = vpop.f32.mrb[0].mxu0
    %v1472 = vadd.f32 %v377, %v1471
    %v1473 = vpop.f32.mrb[0].mxu0
    %1474 = vmatprep.mubr.bf16.mxu0 0
    %1475 = vmatmul.mubr.bf16.gmra.mrb[0].mxu0 %v1385
    %v1476 = vpop.f32.mrb[0].mxu0
    %v1477 = vadd.f32 %v377, %v1476
    %v1478 = vpop.f32.mrb[0].mxu0
    %v1479 = vpop.f32.mrb[0].mxu0
    %v1480 = vadd.f32 %v377, %v1479
    %v1481 = vpop.f32.mrb[0].mxu0
    %1482 = vdwg.mxu0
    %v1483 = vmax.f32 %v1421, 0.0
    %v1484 = vmax.f32 %v1424, 0.0
    %v1485 = vmax.f32 %v1429, 0.0
    %v1486 = vmax.f32 %v1432, 0.0
    %v1487 = vmax.f32 %v1437, 0.0
    %v1488 = vmax.f32 %v1440, 0.0
    %v1489 = vmax.f32 %v1445, 0.0
    %v1490 = vmax.f32 %v1448, 0.0
    %v1491 = vmax.f32 %v1453, 0.0
    %v1492 = vmax.f32 %v1456, 0.0
    %v1493 = vmax.f32 %v1461, 0.0
    %v1494 = vmax.f32 %v1464, 0.0
    %v1495 = vmax.f32 %v1469, 0.0
    %v1496 = vmax.f32 %v1472, 0.0
    %v1497 = vmax.f32 %v1477, 0.0
    %v1498 = vmax.f32 %v1480, 0.0
    %v1499 = vadd.f32 %v1483, %v1362
    %v1500 = vadd.f32 %v1484, %v1363
    %v1501 = vadd.f32 %v1485, %v1364
    %v1502 = vadd.f32 %v1486, %v1365
    %v1503 = vadd.f32 %v1487, %v1366
    %v1504 = vadd.f32 %v1488, %v1367
    %v1505 = vadd.f32 %v1489, %v1368
    %v1506 = vadd.f32 %v1490, %v1369
    %v1507 = vadd.f32 %v1491, %v1370
    %v1508 = vadd.f32 %v1492, %v1371
    %v1509 = vadd.f32 %v1493, %v1372
    %v1510 = vadd.f32 %v1494, %v1373
    %v1511 = vadd.f32 %v1495, %v1374
    %v1512 = vadd.f32 %v1496, %v1375
    %v1513 = vadd.f32 %v1497, %v1376
    %v1514 = vadd.f32 %v1498, %v1377
    %v1515 = vpack.c.bf16 %v1500, %v1499
    %v1516 = vpack.c.bf16 %v1502, %v1501
    %v1517 = vpack.c.bf16 %v1504, %v1503
    %v1518 = vpack.c.bf16 %v1506, %v1505
    %v1519 = vpack.c.bf16 %v1508, %v1507
    %v1520 = vpack.c.bf16 %v1510, %v1509
    %v1521 = vpack.c.bf16 %v1512, %v1511
    %v1522 = vpack.c.bf16 %v1514, %v1513
    %v1524 = vlaneseq
    %v1525 = vshrl.u32 %v1524, 7
    %v1526 = vsub.s32 0, %v1525
    %v1527 = vrot.slane %v149, %v1526
    %v1545 = vunpack.c.l.b16 %v131
    %v1546 = vunpack.c.l.b16 %v132
    %v1547 = vunpack.c.l.b16 %v133
    %v1548 = vunpack.c.l.b16 %v134
    %v1549 = vunpack.c.l.b16 %v135
    %v1550 = vunpack.c.l.b16 %v136
    %v1551 = vunpack.c.l.b16 %v137
    %v1552 = vunpack.c.l.b16 %v138
    %v1553 = vunpack.c.l.b16 %v139
    %v1554 = vunpack.c.l.b16 %v140
    %v1555 = vunpack.c.l.b16 %v141
    %v1556 = vunpack.c.l.b16 %v142
    %v1557 = vunpack.c.l.b16 %v143
    %v1558 = vunpack.c.l.b16 %v144
    %v1559 = vunpack.c.l.b16 %v145
    %v1560 = vunpack.c.l.b16 %v146
    %v1561 = vpack.c.b16 %v1546, %v1545
    %v1562 = vpack.c.b16 %v1548, %v1547
    %v1563 = vpack.c.b16 %v1550, %v1549
    %v1564 = vpack.c.b16 %v1552, %v1551
    %v1565 = vpack.c.b16 %v1554, %v1553
    %v1566 = vpack.c.b16 %v1556, %v1555
    %v1567 = vpack.c.b16 %v1558, %v1557
    %v1568 = vpack.c.b16 %v1560, %v1559
    %1577 = vmatprep.subr.bf16.mxu0 0
    %1578 = vmatpush1.bf16.msra.mxu0 %v1561
    %1579 = vmatprep.subr.bf16.mxu0 0
    %1580 = vmatpush1.bf16.msra.mxu0 %v1562
    %1581 = vmatprep.subr.bf16.mxu0 0
    %1582 = vmatpush1.bf16.msra.mxu0 %v1563
    %1583 = vmatprep.subr.bf16.mxu0 0
    %1584 = vmatpush1.bf16.msra.mxu0 %v1564
    %1585 = vmatprep.subr.bf16.mxu0 0
    %1586 = vmatpush1.bf16.msra.mxu0 %v1565
    %1587 = vmatprep.subr.bf16.mxu0 0
    %1588 = vmatpush1.bf16.msra.mxu0 %v1566
    %1589 = vmatprep.subr.bf16.mxu0 0
    %1590 = vmatpush1.bf16.msra.mxu0 %v1567
    %1591 = vmatprep.subr.bf16.mxu0 0
    %1592 = vmatpush1.bf16.msra.mxu0 %v1568
    %1593 = vmatprep.subr.bf16.mxu0 0
    %1594 = vmatpush1.bf16.msra.mxu0 0
    %1595 = vmatprep.subr.bf16.mxu0 0
    %1596 = vmatpush1.bf16.msra.mxu0 0
    %1597 = vmatprep.subr.bf16.mxu0 0
    %1598 = vmatpush1.bf16.msra.mxu0 0
    %1599 = vmatprep.subr.bf16.mxu0 0
    %1600 = vmatpush1.bf16.msra.mxu0 0
    %1601 = vmatprep.subr.bf16.mxu0 0
    %1602 = vmatpush1.bf16.msra.mxu0 0
    %1603 = vmatprep.subr.bf16.mxu0 0
    %1604 = vmatpush1.bf16.msra.mxu0 0
    %1605 = vmatprep.subr.bf16.mxu0 0
    %1606 = vmatpush1.bf16.msra.mxu0 0
    %1607 = vmatprep.subr.bf16.mxu0 0
    %1608 = vmatpush1.bf16.msra.mxu0 0
    %1609 = vmatprep.mubr.bf16.mxu0 0
    %1610 = vmatmul.mubr.bf16.gmra.mrb[0].mxu0 %v1515
    %v1611 = vpop.f32.mrb[0].mxu0
    %v1612 = vadd.f32 %v1527, %v1611
    %v1613 = vpop.f32.mrb[0].mxu0
    %v1614 = vpop.f32.mrb[0].mxu0
    %v1615 = vadd.f32 %v1527, %v1614
    %v1616 = vpop.f32.mrb[0].mxu0
    %1617 = vmatprep.mubr.bf16.mxu0 0
    %1618 = vmatmul.mubr.bf16.gmra.mrb[0].mxu0 %v1516
    %v1619 = vpop.f32.mrb[0].mxu0
    %v1620 = vadd.f32 %v1527, %v1619
    %v1621 = vpop.f32.mrb[0].mxu0
    %v1622 = vpop.f32.mrb[0].mxu0
    %v1623 = vadd.f32 %v1527, %v1622
    %v1624 = vpop.f32.mrb[0].mxu0
    %1625 = vmatprep.mubr.bf16.mxu0 0
    %1626 = vmatmul.mubr.bf16.gmra.mrb[0].mxu0 %v1517
    %v1627 = vpop.f32.mrb[0].mxu0
    %v1628 = vadd.f32 %v1527, %v1627
    %v1629 = vpop.f32.mrb[0].mxu0
    %v1630 = vpop.f32.mrb[0].mxu0
    %v1631 = vadd.f32 %v1527, %v1630
    %v1632 = vpop.f32.mrb[0].mxu0
    %1633 = vmatprep.mubr.bf16.mxu0 0
    %1634 = vmatmul.mubr.bf16.gmra.mrb[0].mxu0 %v1518
    %v1635 = vpop.f32.mrb[0].mxu0
    %v1636 = vadd.f32 %v1527, %v1635
    %v1637 = vpop.f32.mrb[0].mxu0
    %v1638 = vpop.f32.mrb[0].mxu0
    %v1639 = vadd.f32 %v1527, %v1638
    %v1640 = vpop.f32.mrb[0].mxu0
    %1641 = vmatprep.mubr.bf16.mxu0 0
    %1642 = vmatmul.mubr.bf16.gmra.mrb[0].mxu0 %v1519
    %v1643 = vpop.f32.mrb[0].mxu0
    %v1644 = vadd.f32 %v1527, %v1643
    %v1645 = vpop.f32.mrb[0].mxu0
    %v1646 = vpop.f32.mrb[0].mxu0
    %v1647 = vadd.f32 %v1527, %v1646
    %v1648 = vpop.f32.mrb[0].mxu0
    %1649 = vmatprep.mubr.bf16.mxu0 0
    %1650 = vmatmul.mubr.bf16.gmra.mrb[0].mxu0 %v1520
    %v1651 = vpop.f32.mrb[0].mxu0
    %v1652 = vadd.f32 %v1527, %v1651
    %v1653 = vpop.f32.mrb[0].mxu0
    %v1654 = vpop.f32.mrb[0].mxu0
    %v1655 = vadd.f32 %v1527, %v1654
    %v1656 = vpop.f32.mrb[0].mxu0
    %1657 = vmatprep.mubr.bf16.mxu0 0
    %1658 = vmatmul.mubr.bf16.gmra.mrb[0].mxu0 %v1521
    %v1659 = vpop.f32.mrb[0].mxu0
    %v1660 = vadd.f32 %v1527, %v1659
    %v1661 = vpop.f32.mrb[0].mxu0
    %v1662 = vpop.f32.mrb[0].mxu0
    %v1663 = vadd.f32 %v1527, %v1662
    %v1664 = vpop.f32.mrb[0].mxu0
    %1665 = vmatprep.mubr.bf16.mxu0 0
    %1666 = vmatmul.mubr.bf16.gmra.mrb[0].mxu0 %v1522
    %v1667 = vpop.f32.mrb[0].mxu0
    %v1668 = vadd.f32 %v1527, %v1667
    %v1669 = vpop.f32.mrb[0].mxu0
    %v1670 = vpop.f32.mrb[0].mxu0
    %v1671 = vadd.f32 %v1527, %v1670
    %v1672 = vpop.f32.mrb[0].mxu0
    %1673 = vdwg.mxu0
    %v1674 = vlaneseq
    %v1675 = vand.u32 %v1674, 127
    %vm1676 = vcmp.lt.s32.totalorder %v1675, 8
    %v1677 = vsel %vm1676, %v1612, -1e+30
    %v1678 = vsel %vm1676, %v1615, -1e+30
    %v1679 = vsel %vm1676, %v1620, -1e+30
    %v1680 = vsel %vm1676, %v1623, -1e+30
    %v1681 = vsel %vm1676, %v1628, -1e+30
    %v1682 = vsel %vm1676, %v1631, -1e+30
    %v1683 = vsel %vm1676, %v1636, -1e+30
    %v1684 = vsel %vm1676, %v1639, -1e+30
    %v1685 = vsel %vm1676, %v1644, -1e+30
    %v1686 = vsel %vm1676, %v1647, -1e+30
    %v1687 = vsel %vm1676, %v1652, -1e+30
    %v1688 = vsel %vm1676, %v1655, -1e+30
    %v1689 = vsel %vm1676, %v1660, -1e+30
    %v1690 = vsel %vm1676, %v1663, -1e+30
    %v1691 = vsel %vm1676, %v1668, -1e+30
    %v1692 = vsel %vm1676, %v1671, -1e+30
    %1693 = vmax.xlane.f32.xlu0 %v1677
    %v1694 = vpop.xlane.xlu0 %1693
    %1695 = vmax.xlane.f32.xlu0 %v1678
    %v1696 = vpop.xlane.xlu0 %1695
    %1697 = vmax.xlane.f32.xlu0 %v1679
    %v1698 = vpop.xlane.xlu0 %1697
    %1699 = vmax.xlane.f32.xlu0 %v1680
    %v1700 = vpop.xlane.xlu0 %1699
    %1701 = vmax.xlane.f32.xlu0 %v1681
    %v1702 = vpop.xlane.xlu0 %1701
    %1703 = vmax.xlane.f32.xlu0 %v1682
    %v1704 = vpop.xlane.xlu0 %1703
    %1705 = vmax.xlane.f32.xlu0 %v1683
    %v1706 = vpop.xlane.xlu0 %1705
    %1707 = vmax.xlane.f32.xlu0 %v1684
    %v1708 = vpop.xlane.xlu0 %1707
    %1709 = vmax.xlane.f32.xlu0 %v1685
    %v1710 = vpop.xlane.xlu0 %1709
    %1711 = vmax.xlane.f32.xlu0 %v1686
    %v1712 = vpop.xlane.xlu0 %1711
    %1713 = vmax.xlane.f32.xlu0 %v1687
    %v1714 = vpop.xlane.xlu0 %1713
    %1715 = vmax.xlane.f32.xlu0 %v1688
    %v1716 = vpop.xlane.xlu0 %1715
    %1717 = vmax.xlane.f32.xlu0 %v1689
    %v1718 = vpop.xlane.xlu0 %1717
    %1719 = vmax.xlane.f32.xlu0 %v1690
    %v1720 = vpop.xlane.xlu0 %1719
    %1721 = vmax.xlane.f32.xlu0 %v1691
    %v1722 = vpop.xlane.xlu0 %1721
    %1723 = vmax.xlane.f32.xlu0 %v1692
    %v1724 = vpop.xlane.xlu0 %1723
    %v1725 = vsub.f32 %v1677, %v1694
    %v1726 = vsub.f32 %v1678, %v1696
    %v1727 = vsub.f32 %v1679, %v1698
    %v1728 = vsub.f32 %v1680, %v1700
    %v1729 = vsub.f32 %v1681, %v1702
    %v1730 = vsub.f32 %v1682, %v1704
    %v1731 = vsub.f32 %v1683, %v1706
    %v1732 = vsub.f32 %v1684, %v1708
    %v1733 = vsub.f32 %v1685, %v1710
    %v1734 = vsub.f32 %v1686, %v1712
    %v1735 = vsub.f32 %v1687, %v1714
    %v1736 = vsub.f32 %v1688, %v1716
    %v1737 = vsub.f32 %v1689, %v1718
    %v1738 = vsub.f32 %v1690, %v1720
    %v1739 = vsub.f32 %v1691, %v1722
    %v1740 = vsub.f32 %v1692, %v1724
    %v1741 = vmul.f32 %v1725, 1.442695
    %v1742 = vpow.pop %v1741
    %v1743 = vmul.f32 %v1726, 1.442695
    %v1744 = vpow.pop %v1743
    %v1745 = vmul.f32 %v1727, 1.442695
    %v1746 = vpow.pop %v1745
    %v1747 = vmul.f32 %v1728, 1.442695
    %v1748 = vpow.pop %v1747
    %v1749 = vmul.f32 %v1729, 1.442695
    %v1750 = vpow.pop %v1749
    %v1751 = vmul.f32 %v1730, 1.442695
    %v1752 = vpow.pop %v1751
    %v1753 = vmul.f32 %v1731, 1.442695
    %v1754 = vpow.pop %v1753
    %v1755 = vmul.f32 %v1732, 1.442695
    %v1756 = vpow.pop %v1755
    %v1757 = vmul.f32 %v1733, 1.442695
    %v1758 = vpow.pop %v1757
    %v1759 = vmul.f32 %v1734, 1.442695
    %v1760 = vpow.pop %v1759
    %v1761 = vmul.f32 %v1735, 1.442695
    %v1762 = vpow.pop %v1761
    %v1763 = vmul.f32 %v1736, 1.442695
    %v1764 = vpow.pop %v1763
    %v1765 = vmul.f32 %v1737, 1.442695
    %v1766 = vpow.pop %v1765
    %v1767 = vmul.f32 %v1738, 1.442695
    %v1768 = vpow.pop %v1767
    %v1769 = vmul.f32 %v1739, 1.442695
    %v1770 = vpow.pop %v1769
    %v1771 = vmul.f32 %v1740, 1.442695
    %v1772 = vpow.pop %v1771
    %1773 = vadd.xlane.f32.xlu0 %v1742
    %v1774 = vpop.xlane.xlu0 %1773
    %1775 = vadd.xlane.f32.xlu0 %v1744
    %v1776 = vpop.xlane.xlu0 %1775
    %1777 = vadd.xlane.f32.xlu0 %v1746
    %v1778 = vpop.xlane.xlu0 %1777
    %1779 = vadd.xlane.f32.xlu0 %v1748
    %v1780 = vpop.xlane.xlu0 %1779
    %1781 = vadd.xlane.f32.xlu0 %v1750
    %v1782 = vpop.xlane.xlu0 %1781
    %1783 = vadd.xlane.f32.xlu0 %v1752
    %v1784 = vpop.xlane.xlu0 %1783
    %1785 = vadd.xlane.f32.xlu0 %v1754
    %v1786 = vpop.xlane.xlu0 %1785
    %1787 = vadd.xlane.f32.xlu0 %v1756
    %v1788 = vpop.xlane.xlu0 %1787
    %1789 = vadd.xlane.f32.xlu0 %v1758
    %v1790 = vpop.xlane.xlu0 %1789
    %1791 = vadd.xlane.f32.xlu0 %v1760
    %v1792 = vpop.xlane.xlu0 %1791
    %1793 = vadd.xlane.f32.xlu0 %v1762
    %v1794 = vpop.xlane.xlu0 %1793
    %1795 = vadd.xlane.f32.xlu0 %v1764
    %v1796 = vpop.xlane.xlu0 %1795
    %1797 = vadd.xlane.f32.xlu0 %v1766
    %v1798 = vpop.xlane.xlu0 %1797
    %1799 = vadd.xlane.f32.xlu0 %v1768
    %v1800 = vpop.xlane.xlu0 %1799
    %1801 = vadd.xlane.f32.xlu0 %v1770
    %v1802 = vpop.xlane.xlu0 %1801
    %1803 = vadd.xlane.f32.xlu0 %v1772
    %v1804 = vpop.xlane.xlu0 %1803
    %v1805 = vlog2.pop %v1774
    %v1806 = vmul.f32 %v1805, 0.6931472
    %v1807 = vlog2.pop %v1776
    %v1808 = vmul.f32 %v1807, 0.6931472
    %v1809 = vlog2.pop %v1778
    %v1810 = vmul.f32 %v1809, 0.6931472
    %v1811 = vlog2.pop %v1780
    %v1812 = vmul.f32 %v1811, 0.6931472
    %v1813 = vlog2.pop %v1782
    %v1814 = vmul.f32 %v1813, 0.6931472
    %v1815 = vlog2.pop %v1784
    %v1816 = vmul.f32 %v1815, 0.6931472
    %v1817 = vlog2.pop %v1786
    %v1818 = vmul.f32 %v1817, 0.6931472
    %v1819 = vlog2.pop %v1788
    %v1820 = vmul.f32 %v1819, 0.6931472
    %v1821 = vlog2.pop %v1790
    %v1822 = vmul.f32 %v1821, 0.6931472
    %v1823 = vlog2.pop %v1792
    %v1824 = vmul.f32 %v1823, 0.6931472
    %v1825 = vlog2.pop %v1794
    %v1826 = vmul.f32 %v1825, 0.6931472
    %v1827 = vlog2.pop %v1796
    %v1828 = vmul.f32 %v1827, 0.6931472
    %v1829 = vlog2.pop %v1798
    %v1830 = vmul.f32 %v1829, 0.6931472
    %v1831 = vlog2.pop %v1800
    %v1832 = vmul.f32 %v1831, 0.6931472
    %v1833 = vlog2.pop %v1802
    %v1834 = vmul.f32 %v1833, 0.6931472
    %v1835 = vlog2.pop %v1804
    %v1836 = vmul.f32 %v1835, 0.6931472
    %v1837 = vsub.f32 %v1725, %v1806
    %v1838 = vsub.f32 %v1726, %v1808
    %v1839 = vsub.f32 %v1727, %v1810
    %v1840 = vsub.f32 %v1728, %v1812
    %v1841 = vsub.f32 %v1729, %v1814
    %v1842 = vsub.f32 %v1730, %v1816
    %v1843 = vsub.f32 %v1731, %v1818
    %v1844 = vsub.f32 %v1732, %v1820
    %v1845 = vsub.f32 %v1733, %v1822
    %v1846 = vsub.f32 %v1734, %v1824
    %v1847 = vsub.f32 %v1735, %v1826
    %v1848 = vsub.f32 %v1736, %v1828
    %v1849 = vsub.f32 %v1737, %v1830
    %v1850 = vsub.f32 %v1738, %v1832
    %v1851 = vsub.f32 %v1739, %v1834
    %v1852 = vsub.f32 %v1740, %v1836
    %1853 = vst [vmem:[#allocation10] sm:$0xff] %v1837
    %1854 = vst [vmem:[#allocation10 + $0x8] sm:$0xff] %v1838
    %1855 = vst [vmem:[#allocation10 + $0x10] sm:$0xff] %v1839
    %1856 = vst [vmem:[#allocation10 + $0x18] sm:$0xff] %v1840
    %1857 = vst [vmem:[#allocation10 + $0x20] sm:$0xff] %v1841
    %1858 = vst [vmem:[#allocation10 + $0x28] sm:$0xff] %v1842
    %1859 = vst [vmem:[#allocation10 + $0x30] sm:$0xff] %v1843
    %1860 = vst [vmem:[#allocation10 + $0x38] sm:$0xff] %v1844
    %1861 = vst [vmem:[#allocation10 + $0x40] sm:$0xff] %v1845
    %1862 = vst [vmem:[#allocation10 + $0x48] sm:$0xff] %v1846
    %1863 = vst [vmem:[#allocation10 + $0x50] sm:$0xff] %v1847
    %1864 = vst [vmem:[#allocation10 + $0x58] sm:$0xff] %v1848
    %1865 = vst [vmem:[#allocation10 + $0x60] sm:$0xff] %v1849
    %1866 = vst [vmem:[#allocation10 + $0x68] sm:$0xff] %v1850
    %1867 = vst [vmem:[#allocation10 + $0x70] sm:$0xff] %v1851
    %1868 = vst [vmem:[#allocation10 + $0x78] sm:$0xff] %v1852
    // Predicated region
    $region46: #{tpu_custom_call.1} parent=1 // pred_check
      _
    $region47: #{tpu_custom_call.1} parent=1 // pred_check_branch
      %1870 = sbr.rel (0) target = $region49
    $region48: #{tpu_custom_call.1} parent=1 // pred_region
      %s1872 = ssub.s32 2048, 2048
      %1873 = vsyncadd [#allocation4], %s1872
      %s1874 = sshll.u32 [#allocation10], 4
      %s1875 = int_to_ptr.vmem [resolvable:$true] %s1874
      %1880 = dma.vmem_to_hbm [thread:$0]  %s1875, 2048, %s7, [#allocation4], 128, 128, 8
    $region49: #{tpu_custom_call.1} parent=1 // pred_fallthru
      _
    // Predicated region
    $region50: #{tpu_custom_call.1} parent=1 // pred_check
      _
    $region51: #{tpu_custom_call.1} parent=1 // pred_check_branch
      %1882 = sbr.rel (0) target = $region53
    $region52: #{tpu_custom_call.1} parent=1 // pred_region
      %1883 = dma.done [#allocation4], 2048
    $region53: #{tpu_custom_call.1} parent=1 // pred_fallthru
      _
    %1884 = vsyncpa [#allocation3], 1
    %1885 = vsyncpa [#allocation6], 1
    %1886 = vsyncpa [#allocation9], 1
    %1887 = vsyncpa [#allocation4], 1

</llo_original>
